<compile_context>
chip_gen: v7x
topology: tpu7x:2x2x1
jax: 0.10.0
libtpu: 0.0.40
codegen_flags: <defaults>
</compile_context>

<pallas_src>
import jax
import jax.numpy as jnp
from jax.experimental import pallas as pl
from jax.experimental.pallas import tpu as pltpu

FEAT_DIM = 2048       # ResNetSE feature dim expected by the projector
EMBED_DIM = 128       # SimCLR embedding_dim
HIDDEN_TILE = 512     # tile of the projector hidden dim processed per grid step


# ----------------------------------------------------------------------------
# Fused kernel: global-avg-pool + Linear(C,2048) + Linear(2048,2048) + ReLU
#               + Linear(2048,128), tiled over the hidden (2048) dimension.
# ----------------------------------------------------------------------------
def _simclr_fused_kernel(x_ref, wb_ref, bb_ref, w1_ref, b1_ref, w2_ref, b2_ref,
                         o_ref, feats_ref, acc_ref):
    # x_ref  : (2B, C, H*W) f32        wb_ref: (C, F) f32 (mean scale folded in)
    # bb_ref : (1, F)  f32             w1_ref: (F, HIDDEN_TILE) bf16
    # b1_ref : (1, HIDDEN_TILE) f32    w2_ref: (HIDDEN_TILE, E) bf16
    # b2_ref : (1, E) f32              o_ref : (2B, E) f32
    # feats_ref: (2B, F) bf16 scratch  acc_ref: (2B, E) f32 scratch
    k = pl.program_id(0)

    @pl.when(k == 0)
    def _():
        # Backbone stand-in: spatial sum (1/(H*W) folded into wb) + Linear.
        pooled = jnp.sum(x_ref[...], axis=-1)                        # (2B, C) f32
        feats = (
            jnp.dot(pooled, wb_ref[...], preferred_element_type=jnp.float32)
            + bb_ref[...]
        )
        feats_ref[...] = feats.astype(feats_ref.dtype)               # keep in bf16
        acc_ref[...] = jnp.zeros_like(acc_ref)

    # First projector Linear: hidden chunk (full K = 2048 contraction, bf16 MXU,
    # f32 accumulate).  Epilogue (bias, ReLU) in f32.
    h = (
        jnp.dot(feats_ref[...], w1_ref[...], preferred_element_type=jnp.float32)
        + b1_ref[...]
    )
    h = jnp.maximum(h, 0.0)                                          # ReLU (f32, VPU)

    # Second projector Linear: contract this hidden chunk into the accumulator.
    acc_ref[...] += jnp.dot(
        h.astype(w2_ref.dtype), w2_ref[...], preferred_element_type=jnp.float32
    )

    @pl.when(k == pl.num_programs(0) - 1)
    def _():
        o_ref[...] = (acc_ref[...] + b2_ref[...]).astype(o_ref.dtype)


def simclr_fused_forward(x2, wb_eff, bb, w1, b1, w2, b2):
    B2, C, HW = x2.shape
    n_steps = FEAT_DIM // HIDDEN_TILE
    return pl.pallas_call(
        _simclr_fused_kernel,
        out_shape=jax.ShapeDtypeStruct((B2, EMBED_DIM), jnp.float32),
        grid_spec=pltpu.PrefetchScalarGridSpec(
            num_scalar_prefetch=0,
            grid=(n_steps,),
            in_specs=[
                pl.BlockSpec((B2, C, HW), lambda k: (0, 0, 0)),            # images
                pl.BlockSpec((C, FEAT_DIM), lambda k: (0, 0)),             # wb
                pl.BlockSpec((1, FEAT_DIM), lambda k: (0, 0)),             # bb
                pl.BlockSpec((FEAT_DIM, HIDDEN_TILE), lambda k: (0, k)),   # W1 chunk
                pl.BlockSpec((1, HIDDEN_TILE), lambda k: (0, k)),          # b1 chunk
                pl.BlockSpec((HIDDEN_TILE, EMBED_DIM), lambda k: (k, 0)),  # W2 chunk
                pl.BlockSpec((1, EMBED_DIM), lambda k: (0, 0)),            # b2
            ],
            out_specs=pl.BlockSpec((B2, EMBED_DIM), lambda k: (0, 0)),
            scratch_shapes=[
                pltpu.VMEM((B2, FEAT_DIM), jnp.bfloat16),   # feats (resident)
                pltpu.VMEM((B2, EMBED_DIM), jnp.float32),   # output accumulator
            ],
        ),
        compiler_params=pltpu.CompilerParams(
            dimension_semantics=("arbitrary",)),   # hidden axis is a reduction
    )(x2, wb_eff, bb.reshape(1, FEAT_DIM), w1, b1.reshape(1, FEAT_DIM),
      w2, b2.reshape(1, EMBED_DIM))


# ----------------------------------------------------------------------------
# SimCLR forward (shared backbone + shared projector; both views in one call)
# ----------------------------------------------------------------------------
@jax.jit
def simclr_forward(inputs_A, inputs_B, params):
    B, C, H, W = inputs_A.shape
    # Concatenate the two views so weights are streamed from HBM only once.
    x2 = jnp.concatenate([inputs_A, inputs_B], axis=0).reshape(2 * B, C, H * W)
    # Fold the 1/(H*W) mean scale into the backbone weight (tiny C x 2048 op).
    wb_eff = params["wb"] * (1.0 / (H * W))
    proj = simclr_fused_forward(x2, wb_eff, params["bb"],
                                params["w1"], params["b1"],
                                params["w2"], params["b2"])
    return proj[:B], proj[B:]


def init_params(key, in_channels):
    k1, k2, k3, k4 = jax.random.split(key, 4)
    # deterministic small-scale init (shapes follow the module's __init__)
    wb = jax.random.normal(k1, (in_channels, FEAT_DIM), jnp.float32) * 0.02
    bb = jnp.zeros((FEAT_DIM,), jnp.float32)
    # Projector weights stored in bf16: halves the dominant HBM weight traffic.
    w1 = (jax.random.normal(k2, (FEAT_DIM, FEAT_DIM), jnp.float32) * 0.02
          ).astype(jnp.bfloat16)
    b1 = jax.random.normal(k3, (FEAT_DIM,), jnp.float32) * 0.01
    w2 = (jax.random.normal(k4, (FEAT_DIM, EMBED_DIM), jnp.float32) * 0.02
          ).astype(jnp.bfloat16)
    b2 = jnp.zeros((EMBED_DIM,), jnp.float32)
    return {"wb": wb, "bb": bb, "w1": w1, "b1": b1, "w2": w2, "b2": b2}


if __name__ == "__main__":
    key = jax.random.PRNGKey(0)
    k_params, k_a, k_b = jax.random.split(key, 3)

    B, C, H, W = 2, 4, 16, 16                     # small NCHW inputs
    inputs_A = jax.random.normal(k_a, (B, C, H, W), jnp.float32)
    inputs_B = jax.random.normal(k_b, (B, C, H, W), jnp.float32)

    params = init_params(k_params, C)

    proj_A, proj_B = simclr_forward(inputs_A, inputs_B, params)
    jax.block_until_ready((proj_A, proj_B))

    assert proj_A.shape == (B, EMBED_DIM) and proj_B.shape == (B, EMBED_DIM)

    # Reference check against plain JAX, mirroring the kernel's dtype flow
    # (bf16 weights / intermediates, f32 accumulate & epilogue).
    x2 = jnp.concatenate([inputs_A, inputs_B], axis=0).reshape(2 * B, C, H * W)
    wb_eff = params["wb"] * (1.0 / (H * W))
    pooled = jnp.sum(x2, axis=-1)
    feats_ref = (pooled @ wb_eff + params["bb"]
                 ).astype(jnp.bfloat16).astype(jnp.float32)
    hidden_ref = jnp.maximum(
        feats_ref @ params["w1"].astype(jnp.float32) + params["b1"], 0.0)
    proj_ref = (hidden_ref.astype(jnp.bfloat16).astype(jnp.float32)
                @ params["w2"].astype(jnp.float32) + params["b2"])
    proj_kernel = jnp.concatenate([proj_A, proj_B], axis=0)
    assert jnp.allclose(proj_kernel, proj_ref, atol=2e-3, rtol=2e-3)

    print("KERNEL_OK")
</pallas_src>

<mosaic_0001>
module attributes {stable_mosaic.version = 11 : i64} {
  func.func @_simclr_fused_kernel(%arg0: i32, %arg1: memref<4x4x256xf32, #tpu.memory_space<vmem>>, %arg2: memref<4x2048xf32, #tpu.memory_space<vmem>>, %arg3: memref<1x2048xf32, #tpu.memory_space<vmem>>, %arg4: memref<2048x512xbf16, #tpu.memory_space<vmem>>, %arg5: memref<1x512xf32, #tpu.memory_space<vmem>>, %arg6: memref<512x128xbf16, #tpu.memory_space<vmem>>, %arg7: memref<1x128xf32, #tpu.memory_space<vmem>>, %arg8: memref<4x128xf32, #tpu.memory_space<vmem>>, %arg9: memref<4x2048xbf16, #tpu.memory_space<vmem>>, %arg10: memref<4x128xf32, #tpu.memory_space<vmem>>) attributes {dimension_semantics = [#tpu.dimension_semantics<arbitrary>], iteration_bounds = array<i64: 4>, scalar_prefetch = 0 : i64, scratch_operands = 2 : i64, tpu.core_type = #tpu.core_type<tc>, window_params = [{pipeline_mode = #tpu.pipeline_mode<synchronous>, transform_indices = @transform_0, window_bounds = array<i64: 4, 4, 256>}, {pipeline_mode = #tpu.pipeline_mode<synchronous>, transform_indices = @transform_1, window_bounds = array<i64: 4, 2048>}, {pipeline_mode = #tpu.pipeline_mode<synchronous>, transform_indices = @transform_2, window_bounds = array<i64: 1, 2048>}, {transform_indices = @transform_3, window_bounds = array<i64: 2048, 512>}, {transform_indices = @transform_4, window_bounds = array<i64: 1, 512>}, {transform_indices = @transform_5, window_bounds = array<i64: 512, 128>}, {pipeline_mode = #tpu.pipeline_mode<synchronous>, transform_indices = @transform_6, window_bounds = array<i64: 1, 128>}, {pipeline_mode = #tpu.pipeline_mode<synchronous>, transform_indices = @transform_7, window_bounds = array<i64: 4, 128>}]} {
    %c0_i32 = arith.constant 0 : i32
    %0 = arith.cmpi eq, %arg0, %c0_i32 : i32
    %1 = arith.extui %0 : i1 to i32
    %c0_i32_0 = arith.constant 0 : i32
    %2 = arith.cmpi ne, %1, %c0_i32_0 : i32
    scf.if %2 {
      %c0_15 = arith.constant 0 : index
      %c0_16 = arith.constant 0 : index
      %c0_17 = arith.constant 0 : index
      %20 = vector.load %arg1[%c0_15, %c0_16, %c0_17] : memref<4x4x256xf32, #tpu.memory_space<vmem>>, vector<4x4x256xf32>
      %cst_18 = arith.constant dense<0.000000e+00> : vector<4x4xf32>
      %21 = vector.multi_reduction <add>, %20, %cst_18 [2] : vector<4x4x256xf32> to vector<4x4xf32>
      %c0_19 = arith.constant 0 : index
      %c0_20 = arith.constant 0 : index
      %22 = vector.load %arg2[%c0_19, %c0_20] : memref<4x2048xf32, #tpu.memory_space<vmem>>, vector<4x2048xf32>
      %cst_21 = arith.constant dense<0.000000e+00> : vector<4x2048xf32>
      %23 = tpu.matmul %21, %22, %cst_21 {dimension_numbers = #tpu.dot_dimension_numbers<[1], [0], [0], [1], [0, 0, 1, 1], [], []>} : vector<4x4xf32>, vector<4x2048xf32>, vector<4x2048xf32> -> vector<4x2048xf32>
      %c0_22 = arith.constant 0 : index
      %c0_23 = arith.constant 0 : index
      %24 = vector.load %arg3[%c0_22, %c0_23] : memref<1x2048xf32, #tpu.memory_space<vmem>>, vector<1x2048xf32>
      %25 = vector.broadcast %24 : vector<1x2048xf32> to vector<4x2048xf32>
      %26 = arith.addf %23, %25 : vector<4x2048xf32>
      %27 = arith.truncf %26 : vector<4x2048xf32> to vector<4x2048xbf16>
      %c0_24 = arith.constant 0 : index
      %c0_25 = arith.constant 0 : index
      %28 = vector.load %arg9[%c0_24, %c0_25] : memref<4x2048xbf16, #tpu.memory_space<vmem>>, vector<4x2048xbf16>
      tpu.vector_store %arg9[%c0_24, %c0_25], %27 {strides = array<i32>} : memref<4x2048xbf16, #tpu.memory_space<vmem>>, vector<4x2048xbf16>,
      %cst_26 = arith.constant 0.000000e+00 : f32
      %29 = vector.broadcast %cst_26 : f32 to vector<4x128xf32>
      %c0_27 = arith.constant 0 : index
      %c0_28 = arith.constant 0 : index
      %30 = vector.load %arg10[%c0_27, %c0_28] : memref<4x128xf32, #tpu.memory_space<vmem>>, vector<4x128xf32>
      tpu.vector_store %arg10[%c0_27, %c0_28], %29 {strides = array<i32>} : memref<4x128xf32, #tpu.memory_space<vmem>>, vector<4x128xf32>,
    } else {
    }
    %c0 = arith.constant 0 : index
    %c0_1 = arith.constant 0 : index
    %3 = vector.load %arg9[%c0, %c0_1] : memref<4x2048xbf16, #tpu.memory_space<vmem>>, vector<4x2048xbf16>
    %c0_2 = arith.constant 0 : index
    %c0_3 = arith.constant 0 : index
    %4 = vector.load %arg4[%c0_2, %c0_3] : memref<2048x512xbf16, #tpu.memory_space<vmem>>, vector<2048x512xbf16>
    %cst = arith.constant dense<0.000000e+00> : vector<4x512xf32>
    %5 = tpu.matmul %3, %4, %cst {dimension_numbers = #tpu.dot_dimension_numbers<[1], [0], [0], [1], [0, 0, 1, 1], [], []>} : vector<4x2048xbf16>, vector<2048x512xbf16>, vector<4x512xf32> -> vector<4x512xf32>
    %c0_4 = arith.constant 0 : index
    %c0_5 = arith.constant 0 : index
    %6 = vector.load %arg5[%c0_4, %c0_5] : memref<1x512xf32, #tpu.memory_space<vmem>>, vector<1x512xf32>
    %7 = vector.broadcast %6 : vector<1x512xf32> to vector<4x512xf32>
    %8 = arith.addf %5, %7 : vector<4x512xf32>
    %cst_6 = arith.constant 0.000000e+00 : f32
    %9 = vector.broadcast %cst_6 : f32 to vector<4x512xf32>
    %10 = arith.maximumf %8, %9 : vector<4x512xf32>
    %c0_7 = arith.constant 0 : index
    %c0_8 = arith.constant 0 : index
    %11 = vector.load %arg10[%c0_7, %c0_8] : memref<4x128xf32, #tpu.memory_space<vmem>>, vector<4x128xf32>
    %12 = arith.truncf %10 : vector<4x512xf32> to vector<4x512xbf16>
    %c0_9 = arith.constant 0 : index
    %c0_10 = arith.constant 0 : index
    %13 = vector.load %arg6[%c0_9, %c0_10] : memref<512x128xbf16, #tpu.memory_space<vmem>>, vector<512x128xbf16>
    %cst_11 = arith.constant dense<0.000000e+00> : vector<4x128xf32>
    %14 = tpu.matmul %12, %13, %cst_11 {dimension_numbers = #tpu.dot_dimension_numbers<[1], [0], [0], [1], [0, 0, 1, 1], [], []>} : vector<4x512xbf16>, vector<512x128xbf16>, vector<4x128xf32> -> vector<4x128xf32>
    %15 = arith.addf %11, %14 : vector<4x128xf32>
    %c0_12 = arith.constant 0 : index
    %c0_13 = arith.constant 0 : index
    %16 = vector.load %arg10[%c0_12, %c0_13] : memref<4x128xf32, #tpu.memory_space<vmem>>, vector<4x128xf32>
    tpu.vector_store %arg10[%c0_12, %c0_13], %15 {strides = array<i32>} : memref<4x128xf32, #tpu.memory_space<vmem>>, vector<4x128xf32>,
    %c3_i32 = arith.constant 3 : i32
    %17 = arith.cmpi eq, %arg0, %c3_i32 : i32
    %18 = arith.extui %17 : i1 to i32
    %c0_i32_14 = arith.constant 0 : i32
    %19 = arith.cmpi ne, %18, %c0_i32_14 : i32
    scf.if %19 {
      %c0_15 = arith.constant 0 : index
      %c0_16 = arith.constant 0 : index
      %20 = vector.load %arg10[%c0_15, %c0_16] : memref<4x128xf32, #tpu.memory_space<vmem>>, vector<4x128xf32>
      %c0_17 = arith.constant 0 : index
      %c0_18 = arith.constant 0 : index
      %21 = vector.load %arg7[%c0_17, %c0_18] : memref<1x128xf32, #tpu.memory_space<vmem>>, vector<1x128xf32>
      %22 = vector.broadcast %21 : vector<1x128xf32> to vector<4x128xf32>
      %23 = arith.addf %20, %22 : vector<4x128xf32>
      %c0_19 = arith.constant 0 : index
      %c0_20 = arith.constant 0 : index
      %24 = vector.load %arg8[%c0_19, %c0_20] : memref<4x128xf32, #tpu.memory_space<vmem>>, vector<4x128xf32>
      tpu.vector_store %arg8[%c0_19, %c0_20], %23 {strides = array<i32>} : memref<4x128xf32, #tpu.memory_space<vmem>>, vector<4x128xf32>,
    } else {
    }
    return
  }
  func.func @transform_0(%arg0: i32) -> (i32, i32, i32) {
    %c0_i32 = arith.constant 0 : i32
    %c0_i32_0 = arith.constant 0 : i32
    %c0_i32_1 = arith.constant 0 : i32
    %c0_i32_2 = arith.constant 0 : i32
    return %c0_i32, %c0_i32_0, %c0_i32_1 : i32, i32, i32
  }
  func.func @transform_1(%arg0: i32) -> (i32, i32) {
    %c0_i32 = arith.constant 0 : i32
    %c0_i32_0 = arith.constant 0 : i32
    %c0_i32_1 = arith.constant 0 : i32
    return %c0_i32, %c0_i32_0 : i32, i32
  }
  func.func @transform_2(%arg0: i32) -> (i32, i32) {
    %c0_i32 = arith.constant 0 : i32
    %c0_i32_0 = arith.constant 0 : i32
    %c0_i32_1 = arith.constant 0 : i32
    return %c0_i32, %c0_i32_0 : i32, i32
  }
  func.func @transform_3(%arg0: i32) -> (i32, i32) {
    %c0_i32 = arith.constant 0 : i32
    %c0_i32_0 = arith.constant 0 : i32
    return %c0_i32, %arg0 : i32, i32
  }
  func.func @transform_4(%arg0: i32) -> (i32, i32) {
    %c0_i32 = arith.constant 0 : i32
    %c0_i32_0 = arith.constant 0 : i32
    return %c0_i32, %arg0 : i32, i32
  }
  func.func @transform_5(%arg0: i32) -> (i32, i32) {
    %c0_i32 = arith.constant 0 : i32
    %c0_i32_0 = arith.constant 0 : i32
    return %arg0, %c0_i32 : i32, i32
  }
  func.func @transform_6(%arg0: i32) -> (i32, i32) {
    %c0_i32 = arith.constant 0 : i32
    %c0_i32_0 = arith.constant 0 : i32
    %c0_i32_1 = arith.constant 0 : i32
    return %c0_i32, %c0_i32_0 : i32, i32
  }
  func.func @transform_7(%arg0: i32) -> (i32, i32) {
    %c0_i32 = arith.constant 0 : i32
    %c0_i32_0 = arith.constant 0 : i32
    %c0_i32_1 = arith.constant 0 : i32
    return %c0_i32, %c0_i32_0 : i32, i32
  }
}

</mosaic_0001>

<llo_original>
// kernel: simclr_forward.1
$region0: #{simclr_forward.1}
  #allocation0 [shape = 'u32[]', space=smem, size = 0x4, offset = 0x4, fixed_abs, tag = 'smem constant byte address 0x4 - core index']
  #allocation1 [shape = 'u32[144,128]{1,0:T(1,128)}', space=vmem, size = 0x12000, scoped, tag = 'internal scratch']
  #allocation2 [shape = 'bf16[4,2048]{1,0:T(4,128)(2,1)}', space=vmem, size = 0x4000, scoped, tag = 'scratch operand']
  #allocation3 [shape = 'f32[4,128]{1,0:T(4,128)}', space=vmem, size = 0x800, scoped, tag = 'scratch operand']
  %s0 = inlined_call_operand.vmem [shape: f32[4,4,256], index: 0, kind: input, shape index: {}]
  %s1 = inlined_call_operand.vmem [shape: f32[4,2048], index: 1, kind: input, shape index: {}]
  %s2 = inlined_call_operand.hbm [shape: f32[1,2048], index: 2, kind: input, shape index: {}]
  %s3 = inlined_call_operand.hbm [shape: bf16[2048,2048], index: 3, kind: input, shape index: {}]
  %s4 = inlined_call_operand.hbm [shape: f32[1,2048], index: 4, kind: input, shape index: {}]
  %s5 = inlined_call_operand.hbm [shape: bf16[2048,128], index: 5, kind: input, shape index: {}]
  %s6 = inlined_call_operand.hbm [shape: f32[1,128], index: 6, kind: input, shape index: {}]
  %s7 = inlined_call_operand.vmem [shape: f32[4,128], index: 7, kind: output, shape index: {}]
  %s8 = sld [smem:[#allocation0]]
  $region89: #{simclr_forward.1} parent=0
    _
  %s10 = ssub.s32 1, %s8
  %s11 = scalar_select 0, %s10, %s8
  $region1: #{simclr_forward.1} parent=0
    #allocation4 [shape = 'u8[8192]{0}', space=vmem, size = 0x2000, scoped, tag = 'input window, operand 2, single buffered']
    #allocation5 [shape = 's32[2]{0}', space=sflag, size = 0x8, scoped, tag = 'scoped memory for simclr_forward.1']
    #allocation6 [shape = 'u8[4194304]{0}', space=vmem, size = 0x400000, scoped, tag = 'input window, operand 3']
    #allocation7 [shape = 's32[2]{0}', space=sflag, size = 0x8, scoped, tag = 'scoped memory for simclr_forward.1']
    #allocation8 [shape = 'u8[4096]{0}', space=vmem, size = 0x1000, scoped, tag = 'input window, operand 4']
    #allocation9 [shape = 'u8[262144]{0}', space=vmem, size = 0x40000, scoped, tag = 'input window, operand 5']
    #allocation10 [shape = 's32[2]{0}', space=sflag, size = 0x8, scoped, tag = 'scoped memory for simclr_forward.1']
    #allocation11 [shape = 'u8[512]{0}', space=vmem, size = 0x400, scoped, tag = 'input window, operand 6, single buffered']
    %12 = vsyncpa [#allocation5], 0
    %13 = vsyncpa [#allocation7], 0
    %s14 = scalar_lea.sflag [#allocation7], 1
    %15 = vsyncpa %s14, 0
    %16 = vsyncpa [#allocation10], 0
    %s17 = scalar_lea.sflag [#allocation10], 1
    %18 = vsyncpa %s17, 0
    loop: start=0, step=1, limit=6
    $region2: #{simclr_forward.1} parent=1 // loop_pre_header
      _
    $region3: #{simclr_forward.1} parent=1 // loop_header
      %s20 = sphi 0, %s24
      %p21 = scmp.ge.s32.totalorder %s20, 6
      %s28 = sphi 0, %s28
      %s30 = sphi 0, %s28
      %s31 = sphi 0, %s30
      %s45 = sphi 0, %s31
      %s49 = sphi 0, %s49
      %s51 = sphi 0, %s49
      %s52 = sphi 0, %s51
      %s66 = sphi 0, %s52
      %s70 = sphi 0, %s70
      %s72 = sphi 0, %s70
      %s73 = sphi 0, %s72
      %s87 = sphi 0, %s73
      %s93 = sphi 0, %s95
      %s96 = sphi 0, %s93
      %s97 = sphi 0, %s96
      %s113 = sphi 0, %s97
      %s119 = sphi 0, %s121
      %s122 = sphi 0, %s119
      %s123 = sphi 0, %s122
      %s139 = sphi 0, %s123
      %s145 = sphi 0, %s147
      %s148 = sphi 0, %s145
      %s149 = sphi 0, %s148
      %s165 = sphi 0, %s149
      %s169 = sphi 0, %s169
      %s171 = sphi 0, %s169
      %s172 = sphi 0, %s171
      %s186 = sphi 0, %s172
      %s190 = sphi 0, %s190
      %s192 = sphi 0, %s190
      %s193 = sphi 0, %s192
      %s207 = sphi 0, %s193
    $region4: #{simclr_forward.1} parent=1 // loop_header_branch
      %23 = sbr.rel (%p21) target = $region8
    $region5: #{simclr_forward.1} parent=1 // loop_body
      %s25 = ssub.s32 %s20, 1
      %s26 = ssub.s32 %s20, 2
      %s27 = sadd.s32 %s20, 1
      %s29 = sadd.s32 %s28, 1
      %p32 = scmp.eq.s32.totalorder %s20, 3
      %p33 = scmp.ne.s32.totalorder %s28, %s30
      %p34 = scmp.eq.s32.totalorder %s20, 0
      %p35 = por %p33, %p34
      %p36 = scmp.ne.s32.totalorder %s28, %s30
      %p37 = scmp.eq.s32.totalorder %s25, 3
      %p38 = por %p36, %p37
      %p39 = scmp.ne.s32.totalorder %s30, %s31
      %p40 = scmp.eq.s32.totalorder %s25, 0
      %p41 = por %p39, %p40
      %p42 = scmp.ne.s32.totalorder %s30, %s31
      %p43 = scmp.eq.s32.totalorder %s26, 3
      %p44 = por %p42, %p43
      %p46 = scmp.ne.s32.totalorder %s31, %s45
      %p47 = scmp.eq.s32.totalorder %s26, 0
      %p48 = por %p46, %p47
      %s50 = sadd.s32 %s49, 1
      %p53 = scmp.eq.s32.totalorder %s20, 3
      %p54 = scmp.ne.s32.totalorder %s49, %s51
      %p55 = scmp.eq.s32.totalorder %s20, 0
      %p56 = por %p54, %p55
      %p57 = scmp.ne.s32.totalorder %s49, %s51
      %p58 = scmp.eq.s32.totalorder %s25, 3
      %p59 = por %p57, %p58
      %p60 = scmp.ne.s32.totalorder %s51, %s52
      %p61 = scmp.eq.s32.totalorder %s25, 0
      %p62 = por %p60, %p61
      %p63 = scmp.ne.s32.totalorder %s51, %s52
      %p64 = scmp.eq.s32.totalorder %s26, 3
      %p65 = por %p63, %p64
      %p67 = scmp.ne.s32.totalorder %s52, %s66
      %p68 = scmp.eq.s32.totalorder %s26, 0
      %p69 = por %p67, %p68
      %s71 = sadd.s32 %s70, 1
      %p74 = scmp.eq.s32.totalorder %s20, 3
      %p75 = scmp.ne.s32.totalorder %s70, %s72
      %p76 = scmp.eq.s32.totalorder %s20, 0
      %p77 = por %p75, %p76
      %p78 = scmp.ne.s32.totalorder %s70, %s72
      %p79 = scmp.eq.s32.totalorder %s25, 3
      %p80 = por %p78, %p79
      %p81 = scmp.ne.s32.totalorder %s72, %s73
      %p82 = scmp.eq.s32.totalorder %s25, 0
      %p83 = por %p81, %p82
      %p84 = scmp.ne.s32.totalorder %s72, %s73
      %p85 = scmp.eq.s32.totalorder %s26, 3
      %p86 = por %p84, %p85
      %p88 = scmp.ne.s32.totalorder %s73, %s87
      %p89 = scmp.eq.s32.totalorder %s26, 0
      %p90 = por %p88, %p89
      %s91 = ssub.s32 %s20, %s27
      %p92 = scmp.eq.s32.totalorder %s91, 0
      %s94 = sadd.s32 %s93, 1
      %s95 = scalar_select %p92, %s93, %s94
      %p98 = pneg %p92
      %p99 = scmp.eq.s32.totalorder %s20, 3
      %p100 = por %p98, %p99
      %p101 = scmp.ne.s32.totalorder %s93, %s96
      %p102 = scmp.eq.s32.totalorder %s20, 0
      %p103 = por %p101, %p102
      %p104 = scmp.ne.s32.totalorder %s93, %s96
      %p105 = scmp.eq.s32.totalorder %s25, 3
      %p106 = por %p104, %p105
      %p107 = scmp.ne.s32.totalorder %s96, %s97
      %p108 = scmp.eq.s32.totalorder %s25, 0
      %p109 = por %p107, %p108
      %p110 = scmp.ne.s32.totalorder %s96, %s97
      %p111 = scmp.eq.s32.totalorder %s26, 3
      %p112 = por %p110, %p111
      %p114 = scmp.ne.s32.totalorder %s97, %s113
      %p115 = scmp.eq.s32.totalorder %s26, 0
      %p116 = por %p114, %p115
      %s117 = ssub.s32 %s20, %s27
      %p118 = scmp.eq.s32.totalorder %s117, 0
      %s120 = sadd.s32 %s119, 1
      %s121 = scalar_select %p118, %s119, %s120
      %p124 = pneg %p118
      %p125 = scmp.eq.s32.totalorder %s20, 3
      %p126 = por %p124, %p125
      %p127 = scmp.ne.s32.totalorder %s119, %s122
      %p128 = scmp.eq.s32.totalorder %s20, 0
      %p129 = por %p127, %p128
      %p130 = scmp.ne.s32.totalorder %s119, %s122
      %p131 = scmp.eq.s32.totalorder %s25, 3
      %p132 = por %p130, %p131
      %p133 = scmp.ne.s32.totalorder %s122, %s123
      %p134 = scmp.eq.s32.totalorder %s25, 0
      %p135 = por %p133, %p134
      %p136 = scmp.ne.s32.totalorder %s122, %s123
      %p137 = scmp.eq.s32.totalorder %s26, 3
      %p138 = por %p136, %p137
      %p140 = scmp.ne.s32.totalorder %s123, %s139
      %p141 = scmp.eq.s32.totalorder %s26, 0
      %p142 = por %p140, %p141
      %s143 = ssub.s32 %s20, %s27
      %p144 = scmp.eq.s32.totalorder %s143, 0
      %s146 = sadd.s32 %s145, 1
      %s147 = scalar_select %p144, %s145, %s146
      %p150 = pneg %p144
      %p151 = scmp.eq.s32.totalorder %s20, 3
      %p152 = por %p150, %p151
      %p153 = scmp.ne.s32.totalorder %s145, %s148
      %p154 = scmp.eq.s32.totalorder %s20, 0
      %p155 = por %p153, %p154
      %p156 = scmp.ne.s32.totalorder %s145, %s148
      %p157 = scmp.eq.s32.totalorder %s25, 3
      %p158 = por %p156, %p157
      %p159 = scmp.ne.s32.totalorder %s148, %s149
      %p160 = scmp.eq.s32.totalorder %s25, 0
      %p161 = por %p159, %p160
      %p162 = scmp.ne.s32.totalorder %s148, %s149
      %p163 = scmp.eq.s32.totalorder %s26, 3
      %p164 = por %p162, %p163
      %p166 = scmp.ne.s32.totalorder %s149, %s165
      %p167 = scmp.eq.s32.totalorder %s26, 0
      %p168 = por %p166, %p167
      %s170 = sadd.s32 %s169, 1
      %p173 = scmp.eq.s32.totalorder %s20, 3
      %p174 = scmp.ne.s32.totalorder %s169, %s171
      %p175 = scmp.eq.s32.totalorder %s20, 0
      %p176 = por %p174, %p175
      %p177 = scmp.ne.s32.totalorder %s169, %s171
      %p178 = scmp.eq.s32.totalorder %s25, 3
      %p179 = por %p177, %p178
      %p180 = scmp.ne.s32.totalorder %s171, %s172
      %p181 = scmp.eq.s32.totalorder %s25, 0
      %p182 = por %p180, %p181
      %p183 = scmp.ne.s32.totalorder %s171, %s172
      %p184 = scmp.eq.s32.totalorder %s26, 3
      %p185 = por %p183, %p184
      %p187 = scmp.ne.s32.totalorder %s172, %s186
      %p188 = scmp.eq.s32.totalorder %s26, 0
      %p189 = por %p187, %p188
      %s191 = sadd.s32 %s190, 1
      %p194 = scmp.eq.s32.totalorder %s20, 3
      %p195 = scmp.ne.s32.totalorder %s190, %s192
      %p196 = scmp.eq.s32.totalorder %s20, 0
      %p197 = por %p195, %p196
      %p198 = scmp.ne.s32.totalorder %s190, %s192
      %p199 = scmp.eq.s32.totalorder %s25, 3
      %p200 = por %p198, %p199
      %p201 = scmp.ne.s32.totalorder %s192, %s193
      %p202 = scmp.eq.s32.totalorder %s25, 0
      %p203 = por %p201, %p202
      %p204 = scmp.ne.s32.totalorder %s192, %s193
      %p205 = scmp.eq.s32.totalorder %s26, 3
      %p206 = por %p204, %p205
      %p208 = scmp.ne.s32.totalorder %s193, %s207
      %p209 = scmp.eq.s32.totalorder %s26, 0
      %p210 = por %p208, %p209
      %p211 = scmp.le.s32.totalorder 1, %s20
      %p212 = scmp.lt.s32.totalorder %s20, 5
      %p213 = pnand %p211, %p212
      %p214 = pneg %p213
      // Predicated region
      $region9: #{simclr_forward.1} parent=5 // pred_check
        _
      $region10: #{simclr_forward.1} parent=5 // pred_check_branch
        %216 = sbr.rel (%p213) target = $region12
      $region11: #{simclr_forward.1} parent=5 // pred_region
        %s217 = ssub.s32 %s20, 1
        // Predicated region
        $region13: #{simclr_forward.1} parent=11 // pred_check
          %p218 = pneg %p41
        $region14: #{simclr_forward.1} parent=11 // pred_check_branch
          %220 = sbr.rel (%p218) target = $region16
        $region15: #{simclr_forward.1} parent=11 // pred_region
          _
        $region16: #{simclr_forward.1} parent=11 // pred_fallthru
          _
        // Predicated region
        $region17: #{simclr_forward.1} parent=11 // pred_check
          %p221 = pneg %p62
        $region18: #{simclr_forward.1} parent=11 // pred_check_branch
          %223 = sbr.rel (%p221) target = $region20
        $region19: #{simclr_forward.1} parent=11 // pred_region
          _
        $region20: #{simclr_forward.1} parent=11 // pred_fallthru
          _
        // Predicated region
        $region21: #{simclr_forward.1} parent=11 // pred_check
          %p224 = pneg %p83
        $region22: #{simclr_forward.1} parent=11 // pred_check_branch
          %226 = sbr.rel (%p224) target = $region24
        $region23: #{simclr_forward.1} parent=11 // pred_region
          %s228 = ssub.s32 256, 256
          %229 = vsyncadd [#allocation5], %s228
          %s231 = sshll.u32 [#allocation4], 4
          %s232 = int_to_ptr.vmem [resolvable:$true] %s231
          %234 = dma.hbm_to_vmem [thread:$0]  %s2, 256, %s232, [#allocation5]
        $region24: #{simclr_forward.1} parent=11 // pred_fallthru
          _
        // Predicated region
        $region25: #{simclr_forward.1} parent=11 // pred_check
          %p235 = pneg %p182
        $region26: #{simclr_forward.1} parent=11 // pred_check_branch
          %237 = sbr.rel (%p235) target = $region28
        $region27: #{simclr_forward.1} parent=11 // pred_region
          %s239 = ssub.s32 16, 16
          %240 = vsyncadd [#allocation10], %s239
          %s242 = sshll.u32 [#allocation11], 4
          %s243 = int_to_ptr.vmem [resolvable:$true] %s242
          %245 = dma.hbm_to_vmem [thread:$0]  %s6, 16, %s243, [#allocation10]
        $region28: #{simclr_forward.1} parent=11 // pred_fallthru
          _
      $region12: #{simclr_forward.1} parent=5 // pred_fallthru
        _
      %p246 = scmp.lt.s32.totalorder %s20, 4
      // Predicated region
      $region29: #{simclr_forward.1} parent=5 // pred_check
        %p247 = pneg %p246
      $region30: #{simclr_forward.1} parent=5 // pred_check_branch
        %249 = sbr.rel (%p247) target = $region32
      $region31: #{simclr_forward.1} parent=5 // pred_region
        // Predicated region
        $region33: #{simclr_forward.1} parent=31 // pred_check
          %p250 = pneg %p103
        $region34: #{simclr_forward.1} parent=31 // pred_check_branch
          %252 = sbr.rel (%p250) target = $region36
        $region35: #{simclr_forward.1} parent=31 // pred_region
          %s253 = sand.u32 %s20, 1
          %s254 = scalar_lea.sflag [#allocation7], %s253
          %s255 = sand.u32 %s93, 1
          %s256 = smul.addr %s255, 4096
          %s257 = scalar_lea.vmem [#allocation6], %s256
          %s258 = smul.u32 4, %s20
          %s260 = ssub.s32 65536, 65536
          %261 = vsyncadd %s254, %s260
          %s262 = smul.addr %s258, 64
          %s263 = scalar_lea.hbm %s3, %s262
          %s264 = sshll.u32 %s257, 4
          %s265 = int_to_ptr.vmem [resolvable:$true] %s264
          %270 = dma.hbm_to_vmem [thread:$0]  %s263, 65536, %s265, %s254, 1024, 256, 16
        $region36: #{simclr_forward.1} parent=31 // pred_fallthru
          _
        // Predicated region
        $region37: #{simclr_forward.1} parent=31 // pred_check
          %p271 = pneg %p129
        $region38: #{simclr_forward.1} parent=31 // pred_check_branch
          %273 = sbr.rel (%p271) target = $region40
        $region39: #{simclr_forward.1} parent=31 // pred_region
          %s274 = sand.u32 %s20, 1
          %s275 = scalar_lea.sflag [#allocation7], %s274
          %s276 = sand.u32 %s119, 1
          %s277 = smul.addr %s276, 4
          %s278 = scalar_lea.vmem [#allocation8], %s277
          %s279 = smul.u32 4, %s20
          %s281 = ssub.s32 64, 64
          %282 = vsyncadd %s275, %s281
          %s283 = smul.addr %s279, 16
          %s284 = scalar_lea.hbm %s4, %s283
          %s286 = sshll.u32 %s278, 4
          %s287 = int_to_ptr.vmem [resolvable:$true] %s286
          %289 = dma.hbm_to_vmem [thread:$0]  %s284, 64, %s287, %s275
        $region40: #{simclr_forward.1} parent=31 // pred_fallthru
          _
        // Predicated region
        $region41: #{simclr_forward.1} parent=31 // pred_check
          %p290 = pneg %p155
        $region42: #{simclr_forward.1} parent=31 // pred_check_branch
          %292 = sbr.rel (%p290) target = $region44
        $region43: #{simclr_forward.1} parent=31 // pred_region
          %s293 = sand.u32 %s20, 1
          %s294 = scalar_lea.sflag [#allocation10], %s293
          %s295 = sand.u32 %s145, 1
          %s296 = smul.addr %s295, 256
          %s297 = scalar_lea.vmem [#allocation9], %s296
          %s298 = smul.u32 64, %s20
          %s300 = ssub.s32 4096, 4096
          %301 = vsyncadd %s294, %s300
          %s302 = smul.addr %s298, 64
          %s303 = scalar_lea.hbm %s5, %s302
          %s304 = sshll.u32 %s297, 4
          %s305 = int_to_ptr.vmem [resolvable:$true] %s304
          %310 = dma.hbm_to_vmem [thread:$0]  %s303, 4096, %s305, %s294, 64, 64, 4
        $region44: #{simclr_forward.1} parent=31 // pred_fallthru
          _
      $region32: #{simclr_forward.1} parent=5 // pred_fallthru
        _
      %p311 = scmp.le.s32.totalorder 1, %s20
      %p312 = scmp.lt.s32.totalorder %s20, 5
      %p313 = pnand %p311, %p312
      %p314 = pneg %p313
      // Predicated region
      $region45: #{simclr_forward.1} parent=5 // pred_check
        _
      $region46: #{simclr_forward.1} parent=5 // pred_check_branch
        %316 = sbr.rel (%p313) target = $region48
      $region47: #{simclr_forward.1} parent=5 // pred_region
        %s317 = ssub.s32 %s20, 1
        // Predicated region
        $region49: #{simclr_forward.1} parent=47 // pred_check
          %p318 = pneg %p83
        $region50: #{simclr_forward.1} parent=47 // pred_check_branch
          %320 = sbr.rel (%p318) target = $region52
        $region51: #{simclr_forward.1} parent=47 // pred_region
          %321 = dma.done [#allocation5], 256
        $region52: #{simclr_forward.1} parent=47 // pred_fallthru
          _
        %s322 = sand.u32 %s25, 1
        %s323 = scalar_lea.sflag [#allocation7], %s322
        %s324 = sand.u32 %s96, 1
        %s325 = smul.addr %s324, 4096
        %s326 = scalar_lea.vmem [#allocation6], %s325
        // Predicated region
        $region53: #{simclr_forward.1} parent=47 // pred_check
          %p327 = pneg %p109
        $region54: #{simclr_forward.1} parent=47 // pred_check_branch
          %329 = sbr.rel (%p327) target = $region56
        $region55: #{simclr_forward.1} parent=47 // pred_region
          %330 = dma.done %s323, 65536
        $region56: #{simclr_forward.1} parent=47 // pred_fallthru
          _
        %s331 = sand.u32 %s25, 1
        %s332 = scalar_lea.sflag [#allocation7], %s331
        %s333 = sand.u32 %s122, 1
        %s334 = smul.addr %s333, 4
        %s335 = scalar_lea.vmem [#allocation8], %s334
        // Predicated region
        $region57: #{simclr_forward.1} parent=47 // pred_check
          %p336 = pneg %p135
        $region58: #{simclr_forward.1} parent=47 // pred_check_branch
          %338 = sbr.rel (%p336) target = $region60
        $region59: #{simclr_forward.1} parent=47 // pred_region
          %339 = dma.done %s332, 64
        $region60: #{simclr_forward.1} parent=47 // pred_fallthru
          _
        %s340 = sand.u32 %s25, 1
        %s341 = scalar_lea.sflag [#allocation10], %s340
        %s342 = sand.u32 %s148, 1
        %s343 = smul.addr %s342, 256
        %s344 = scalar_lea.vmem [#allocation9], %s343
        // Predicated region
        $region61: #{simclr_forward.1} parent=47 // pred_check
          %p345 = pneg %p161
        $region62: #{simclr_forward.1} parent=47 // pred_check_branch
          %347 = sbr.rel (%p345) target = $region64
        $region63: #{simclr_forward.1} parent=47 // pred_region
          %348 = dma.done %s341, 4096
        $region64: #{simclr_forward.1} parent=47 // pred_fallthru
          _
        // Predicated region
        $region65: #{simclr_forward.1} parent=47 // pred_check
          %p349 = pneg %p182
        $region66: #{simclr_forward.1} parent=47 // pred_check_branch
          %351 = sbr.rel (%p349) target = $region68
        $region67: #{simclr_forward.1} parent=47 // pred_region
          %352 = dma.done [#allocation10], 16
        $region68: #{simclr_forward.1} parent=47 // pred_fallthru
          _
        %p353 = pneg %p41
        %p354 = pneg %p38
        %p355 = pneg %p62
        %p356 = pneg %p59
        %p357 = pneg %p83
        %p358 = pneg %p80
        %s359 = sand.u32 %s25, 1
        %s360 = scalar_lea.sflag [#allocation7], %s359
        %s361 = sand.u32 %s96, 1
        %s362 = smul.addr %s361, 4096
        %s363 = scalar_lea.vmem [#allocation6], %s362
        %p364 = pneg %p109
        %p365 = pneg %p106
        %s366 = sand.u32 %s25, 1
        %s367 = scalar_lea.sflag [#allocation7], %s366
        %s368 = sand.u32 %s122, 1
        %s369 = smul.addr %s368, 4
        %s370 = scalar_lea.vmem [#allocation8], %s369
        %p371 = pneg %p135
        %p372 = pneg %p132
        %s373 = sand.u32 %s25, 1
        %s374 = scalar_lea.sflag [#allocation10], %s373
        %s375 = sand.u32 %s148, 1
        %s376 = smul.addr %s375, 256
        %s377 = scalar_lea.vmem [#allocation9], %s376
        %p378 = pneg %p161
        %p379 = pneg %p158
        %p380 = pneg %p182
        %p381 = pneg %p179
        %p382 = pneg %p203
        %p383 = pneg %p200
        %s384 = smul.u32 4, %s25
        %s385 = smul.u32 4, %s25
        %s386 = smul.u32 64, %s25
        %p388 = scmp.eq.s32.totalorder %s25, 0
        // Predicated region
        $region69: #{simclr_forward.1} parent=47 // pred_check
          %p389 = pneg %p388
        $region70: #{simclr_forward.1} parent=47 // pred_check_branch
          %391 = sbr.rel (%p389) target = $region72
        $region71: #{simclr_forward.1} parent=47 // pred_region
          %v392 = vld [vmem:[%s0] sm:$0xff]
          %v393 = vld [vmem:[%s0 + $0x8] sm:$0xff]
          %v394 = vld [vmem:[%s0 + $0x10] sm:$0xff]
          %v395 = vld [vmem:[%s0 + $0x18] sm:$0xff]
          %v400 = vcombine.high %v392, %v392
          %v401 = vcombine.high %v393, %v393
          %v402 = vcombine.high %v394, %v394
          %v403 = vcombine.high %v395, %v395
          %vm408 = vcmask 1043456
          %v409 = vsel %vm408, %v392, 0.0
          %v410 = vsel %vm408, %v400, 0.0
          %v411 = vadd.f32 %v409, %v410
          %412 = vadd.xlane.f32.xlu0 %v411
          %v413 = vpop.xlane.xlu0 %412
          %v414 = vsel %vm408, %v393, 0.0
          %v415 = vsel %vm408, %v401, 0.0
          %v416 = vadd.f32 %v414, %v415
          %417 = vadd.xlane.f32.xlu0 %v416
          %v418 = vpop.xlane.xlu0 %417
          %v419 = vsel %vm408, %v394, 0.0
          %v420 = vsel %vm408, %v402, 0.0
          %v421 = vadd.f32 %v419, %v420
          %422 = vadd.xlane.f32.xlu0 %v421
          %v423 = vpop.xlane.xlu0 %422
          %v424 = vsel %vm408, %v395, 0.0
          %v425 = vsel %vm408, %v403, 0.0
          %v426 = vadd.f32 %v424, %v425
          %427 = vadd.xlane.f32.xlu0 %v426
          %v428 = vpop.xlane.xlu0 %427
          %v429 = vld [vmem:[%s1] sm:$0xff]
          %v430 = vld [vmem:[%s1 + $0x8] sm:$0xff]
          %v431 = vld [vmem:[%s1 + $0x10] sm:$0xff]
          %v432 = vld [vmem:[%s1 + $0x18] sm:$0xff]
          %v433 = vld [vmem:[%s1 + $0x20] sm:$0xff]
          %v434 = vld [vmem:[%s1 + $0x28] sm:$0xff]
          %v435 = vld [vmem:[%s1 + $0x30] sm:$0xff]
          %v436 = vld [vmem:[%s1 + $0x38] sm:$0xff]
          %v437 = vld [vmem:[#allocation4] sm:$0xff]
          %v438 = vld [vmem:[#allocation4 + $0x8] sm:$0xff]
          %v441 = vlaneseq
          %v442 = vshrl.u32 %v441, 7
          %v443 = vsub.s32 0, %v442
          %v444 = vrot.slane %v437, %v443
          %v445 = vlaneseq
          %v446 = vshrl.u32 %v445, 7
          %v447 = vsub.s32 1, %v446
          %v448 = vrot.slane %v437, %v447
          %v449 = vlaneseq
          %v450 = vshrl.u32 %v449, 7
          %v451 = vsub.s32 2, %v450
          %v452 = vrot.slane %v437, %v451
          %v453 = vlaneseq
          %v454 = vshrl.u32 %v453, 7
          %v455 = vsub.s32 3, %v454
          %v456 = vrot.slane %v437, %v455
          %v457 = vlaneseq
          %v458 = vshrl.u32 %v457, 7
          %v459 = vsub.s32 4, %v458
          %v460 = vrot.slane %v437, %v459
          %v461 = vlaneseq
          %v462 = vshrl.u32 %v461, 7
          %v463 = vsub.s32 5, %v462
          %v464 = vrot.slane %v437, %v463
          %v465 = vlaneseq
          %v466 = vshrl.u32 %v465, 7
          %v467 = vsub.s32 6, %v466
          %v468 = vrot.slane %v437, %v467
          %v469 = vlaneseq
          %v470 = vshrl.u32 %v469, 7
          %v471 = vsub.s32 7, %v470
          %v472 = vrot.slane %v437, %v471
          %v473 = vlaneseq
          %v474 = vshrl.u32 %v473, 7
          %v475 = vsub.s32 0, %v474
          %v476 = vrot.slane %v438, %v475
          %v477 = vlaneseq
          %v478 = vshrl.u32 %v477, 7
          %v479 = vsub.s32 1, %v478
          %v480 = vrot.slane %v438, %v479
          %v481 = vlaneseq
          %v482 = vshrl.u32 %v481, 7
          %v483 = vsub.s32 2, %v482
          %v484 = vrot.slane %v438, %v483
          %v485 = vlaneseq
          %v486 = vshrl.u32 %v485, 7
          %v487 = vsub.s32 3, %v486
          %v488 = vrot.slane %v438, %v487
          %v489 = vlaneseq
          %v490 = vshrl.u32 %v489, 7
          %v491 = vsub.s32 4, %v490
          %v492 = vrot.slane %v438, %v491
          %v493 = vlaneseq
          %v494 = vshrl.u32 %v493, 7
          %v495 = vsub.s32 5, %v494
          %v496 = vrot.slane %v438, %v495
          %v497 = vlaneseq
          %v498 = vshrl.u32 %v497, 7
          %v499 = vsub.s32 6, %v498
          %v500 = vrot.slane %v438, %v499
          %v501 = vlaneseq
          %v502 = vshrl.u32 %v501, 7
          %v503 = vsub.s32 7, %v502
          %v504 = vrot.slane %v438, %v503
          %v525 = vlaneseq
          %v526 = vand.u32 %v525, 127
          %v527 = vlaneseq
          %v528 = vshrl.u32 %v527, 7
          %v529 = vsub.s32 %v526, %v528
          %v530 = vrot.slane %v413, %v529
          %v531 = vlaneseq
          %v532 = vshrl.u32 %v531, 7
          %v533 = vsub.s32 %v526, %v532
          %v534 = vrot.slane %v418, %v533
          %v535 = vlaneseq
          %v536 = vshrl.u32 %v535, 7
          %v537 = vsub.s32 %v526, %v536
          %v538 = vrot.slane %v423, %v537
          %v539 = vlaneseq
          %v540 = vshrl.u32 %v539, 7
          %v541 = vsub.s32 %v526, %v540
          %v542 = vrot.slane %v428, %v541
          %vm543 = vcmask 1041409
          %v544 = vsel %vm543, %v534, %v530
          %vm545 = vcmask 1042434
          %v546 = vsel %vm545, %v538, %v544
          %vm547 = vcmask 1043459
          %v548 = vsel %vm547, %v542, %v546
          %v557 = vcombine.high %v429, %v429
          %v558 = vcombine.high %v430, %v430
          %v559 = vcombine.high %v431, %v431
          %v560 = vcombine.high %v432, %v432
          %v561 = vcombine.high %v433, %v433
          %v562 = vcombine.high %v434, %v434
          %v563 = vcombine.high %v435, %v435
          %v564 = vcombine.high %v436, %v436
          %vm565 = vcmask 31744
          %v566 = vsel %vm565, %v548, 0
          %v568 = vsel %vm408, %v429, 0
          %v570 = vsel %vm408, %v557, 0
          %v572 = vsel %vm408, %v430, 0
          %v574 = vsel %vm408, %v558, 0
          %v576 = vsel %vm408, %v431, 0
          %v578 = vsel %vm408, %v559, 0
          %v580 = vsel %vm408, %v432, 0
          %v582 = vsel %vm408, %v560, 0
          %v584 = vsel %vm408, %v433, 0
          %v586 = vsel %vm408, %v561, 0
          %v588 = vsel %vm408, %v434, 0
          %v590 = vsel %vm408, %v562, 0
          %v592 = vsel %vm408, %v435, 0
          %v594 = vsel %vm408, %v563, 0
          %v596 = vsel %vm408, %v436, 0
          %v598 = vsel %vm408, %v564, 0
          %600 = vmatprep.subr.mxu0 %v570
          %601 = vmatpush1.msra.mxu0 %v568
          %602 = vmatprep.subr.mxu0 0.0
          %603 = vmatpush1.msra.mxu0 0.0
          %604 = vmatprep.subr.mxu0 0.0
          %605 = vmatpush1.msra.mxu0 0.0
          %606 = vmatprep.subr.mxu0 0.0
          %607 = vmatpush1.msra.mxu0 0.0
          %608 = vmatprep.subr.mxu0 0.0
          %609 = vmatpush1.msra.mxu0 0.0
          %610 = vmatprep.subr.mxu0 0.0
          %611 = vmatpush1.msra.mxu0 0.0
          %612 = vmatprep.subr.mxu0 0.0
          %613 = vmatpush1.msra.mxu0 0.0
          %614 = vmatprep.subr.mxu0 0.0
          %615 = vmatpush1.msra.mxu0 0.0
          %616 = vmatprep.subr.mxu0 0.0
          %617 = vmatpush1.msra.mxu0 0.0
          %618 = vmatprep.subr.mxu0 0.0
          %619 = vmatpush1.msra.mxu0 0.0
          %620 = vmatprep.subr.mxu0 0.0
          %621 = vmatpush1.msra.mxu0 0.0
          %622 = vmatprep.subr.mxu0 0.0
          %623 = vmatpush1.msra.mxu0 0.0
          %624 = vmatprep.subr.mxu0 0.0
          %625 = vmatpush1.msra.mxu0 0.0
          %626 = vmatprep.subr.mxu0 0.0
          %627 = vmatpush1.msra.mxu0 0.0
          %628 = vmatprep.subr.mxu0 0.0
          %629 = vmatpush1.msra.mxu0 0.0
          %630 = vmatprep.subr.mxu0 0.0
          %631 = vmatpush1.msra.mxu0 0.0
          %632 = vmatprep.subr.mxu0 0.0
          %633 = vmatpush1.msra.mxu0 0.0
          %634 = vmatprep.subr.mxu0 0.0
          %635 = vmatpush1.msra.mxu0 0.0
          %636 = vmatprep.subr.mxu0 0.0
          %637 = vmatpush1.msra.mxu0 0.0
          %638 = vmatprep.subr.mxu0 0.0
          %639 = vmatpush1.msra.mxu0 0.0
          %640 = vmatprep.subr.mxu0 0.0
          %641 = vmatpush1.msra.mxu0 0.0
          %642 = vmatprep.subr.mxu0 0.0
          %643 = vmatpush1.msra.mxu0 0.0
          %644 = vmatprep.subr.mxu0 0.0
          %645 = vmatpush1.msra.mxu0 0.0
          %646 = vmatprep.subr.mxu0 0.0
          %647 = vmatpush1.msra.mxu0 0.0
          %648 = vmatprep.subr.mxu0 0.0
          %649 = vmatpush1.msra.mxu0 0.0
          %650 = vmatprep.subr.mxu0 0.0
          %651 = vmatpush1.msra.mxu0 0.0
          %652 = vmatprep.subr.mxu0 0.0
          %653 = vmatpush1.msra.mxu0 0.0
          %654 = vmatprep.subr.mxu0 0.0
          %655 = vmatpush1.msra.mxu0 0.0
          %656 = vmatprep.subr.mxu0 0.0
          %657 = vmatpush1.msra.mxu0 0.0
          %658 = vmatprep.subr.mxu0 0.0
          %659 = vmatpush1.msra.mxu0 0.0
          %660 = vmatprep.subr.mxu0 0.0
          %661 = vmatpush1.msra.mxu0 0.0
          %662 = vmatprep.subr.mxu0 0.0
          %663 = vmatpush1.msra.mxu0 0.0
          %664 = vmatprep.mubr.f32.mxu0 0.0
          %665 = vmatmul.mubr.f32.gmra.mrb[0].mxu0 %v566
          %v666 = vpop.f32.mrb[0].mxu0
          %v667 = vadd.f32 %v444, %v666
          %v668 = vpop.f32.mrb[0].mxu0
          %v669 = vadd.f32 %v448, %v668
          %670 = vdwg.mxu0
          %671 = vmatprep.subr.mxu0 %v574
          %672 = vmatpush1.msra.mxu0 %v572
          %673 = vmatprep.subr.mxu0 0.0
          %674 = vmatpush1.msra.mxu0 0.0
          %675 = vmatprep.subr.mxu0 0.0
          %676 = vmatpush1.msra.mxu0 0.0
          %677 = vmatprep.subr.mxu0 0.0
          %678 = vmatpush1.msra.mxu0 0.0
          %679 = vmatprep.subr.mxu0 0.0
          %680 = vmatpush1.msra.mxu0 0.0
          %681 = vmatprep.subr.mxu0 0.0
          %682 = vmatpush1.msra.mxu0 0.0
          %683 = vmatprep.subr.mxu0 0.0
          %684 = vmatpush1.msra.mxu0 0.0
          %685 = vmatprep.subr.mxu0 0.0
          %686 = vmatpush1.msra.mxu0 0.0
          %687 = vmatprep.subr.mxu0 0.0
          %688 = vmatpush1.msra.mxu0 0.0
          %689 = vmatprep.subr.mxu0 0.0
          %690 = vmatpush1.msra.mxu0 0.0
          %691 = vmatprep.subr.mxu0 0.0
          %692 = vmatpush1.msra.mxu0 0.0
          %693 = vmatprep.subr.mxu0 0.0
          %694 = vmatpush1.msra.mxu0 0.0
          %695 = vmatprep.subr.mxu0 0.0
          %696 = vmatpush1.msra.mxu0 0.0
          %697 = vmatprep.subr.mxu0 0.0
          %698 = vmatpush1.msra.mxu0 0.0
          %699 = vmatprep.subr.mxu0 0.0
          %700 = vmatpush1.msra.mxu0 0.0
          %701 = vmatprep.subr.mxu0 0.0
          %702 = vmatpush1.msra.mxu0 0.0
          %703 = vmatprep.subr.mxu0 0.0
          %704 = vmatpush1.msra.mxu0 0.0
          %705 = vmatprep.subr.mxu0 0.0
          %706 = vmatpush1.msra.mxu0 0.0
          %707 = vmatprep.subr.mxu0 0.0
          %708 = vmatpush1.msra.mxu0 0.0
          %709 = vmatprep.subr.mxu0 0.0
          %710 = vmatpush1.msra.mxu0 0.0
          %711 = vmatprep.subr.mxu0 0.0
          %712 = vmatpush1.msra.mxu0 0.0
          %713 = vmatprep.subr.mxu0 0.0
          %714 = vmatpush1.msra.mxu0 0.0
          %715 = vmatprep.subr.mxu0 0.0
          %716 = vmatpush1.msra.mxu0 0.0
          %717 = vmatprep.subr.mxu0 0.0
          %718 = vmatpush1.msra.mxu0 0.0
          %719 = vmatprep.subr.mxu0 0.0
          %720 = vmatpush1.msra.mxu0 0.0
          %721 = vmatprep.subr.mxu0 0.0
          %722 = vmatpush1.msra.mxu0 0.0
          %723 = vmatprep.subr.mxu0 0.0
          %724 = vmatpush1.msra.mxu0 0.0
          %725 = vmatprep.subr.mxu0 0.0
          %726 = vmatpush1.msra.mxu0 0.0
          %727 = vmatprep.subr.mxu0 0.0
          %728 = vmatpush1.msra.mxu0 0.0
          %729 = vmatprep.subr.mxu0 0.0
          %730 = vmatpush1.msra.mxu0 0.0
          %731 = vmatprep.subr.mxu0 0.0
          %732 = vmatpush1.msra.mxu0 0.0
          %733 = vmatprep.subr.mxu0 0.0
          %734 = vmatpush1.msra.mxu0 0.0
          %735 = vmatprep.mubr.f32.mxu0 0.0
          %736 = vmatmul.mubr.f32.gmra.mrb[0].mxu0 %v566
          %v737 = vpop.f32.mrb[0].mxu0
          %v738 = vadd.f32 %v452, %v737
          %v739 = vpop.f32.mrb[0].mxu0
          %v740 = vadd.f32 %v456, %v739
          %741 = vdwg.mxu0
          %742 = vmatprep.subr.mxu0 %v578
          %743 = vmatpush1.msra.mxu0 %v576
          %744 = vmatprep.subr.mxu0 0.0
          %745 = vmatpush1.msra.mxu0 0.0
          %746 = vmatprep.subr.mxu0 0.0
          %747 = vmatpush1.msra.mxu0 0.0
          %748 = vmatprep.subr.mxu0 0.0
          %749 = vmatpush1.msra.mxu0 0.0
          %750 = vmatprep.subr.mxu0 0.0
          %751 = vmatpush1.msra.mxu0 0.0
          %752 = vmatprep.subr.mxu0 0.0
          %753 = vmatpush1.msra.mxu0 0.0
          %754 = vmatprep.subr.mxu0 0.0
          %755 = vmatpush1.msra.mxu0 0.0
          %756 = vmatprep.subr.mxu0 0.0
          %757 = vmatpush1.msra.mxu0 0.0
          %758 = vmatprep.subr.mxu0 0.0
          %759 = vmatpush1.msra.mxu0 0.0
          %760 = vmatprep.subr.mxu0 0.0
          %761 = vmatpush1.msra.mxu0 0.0
          %762 = vmatprep.subr.mxu0 0.0
          %763 = vmatpush1.msra.mxu0 0.0
          %764 = vmatprep.subr.mxu0 0.0
          %765 = vmatpush1.msra.mxu0 0.0
          %766 = vmatprep.subr.mxu0 0.0
          %767 = vmatpush1.msra.mxu0 0.0
          %768 = vmatprep.subr.mxu0 0.0
          %769 = vmatpush1.msra.mxu0 0.0
          %770 = vmatprep.subr.mxu0 0.0
          %771 = vmatpush1.msra.mxu0 0.0
          %772 = vmatprep.subr.mxu0 0.0
          %773 = vmatpush1.msra.mxu0 0.0
          %774 = vmatprep.subr.mxu0 0.0
          %775 = vmatpush1.msra.mxu0 0.0
          %776 = vmatprep.subr.mxu0 0.0
          %777 = vmatpush1.msra.mxu0 0.0
          %778 = vmatprep.subr.mxu0 0.0
          %779 = vmatpush1.msra.mxu0 0.0
          %780 = vmatprep.subr.mxu0 0.0
          %781 = vmatpush1.msra.mxu0 0.0
          %782 = vmatprep.subr.mxu0 0.0
          %783 = vmatpush1.msra.mxu0 0.0
          %784 = vmatprep.subr.mxu0 0.0
          %785 = vmatpush1.msra.mxu0 0.0
          %786 = vmatprep.subr.mxu0 0.0
          %787 = vmatpush1.msra.mxu0 0.0
          %788 = vmatprep.subr.mxu0 0.0
          %789 = vmatpush1.msra.mxu0 0.0
          %790 = vmatprep.subr.mxu0 0.0
          %791 = vmatpush1.msra.mxu0 0.0
          %792 = vmatprep.subr.mxu0 0.0
          %793 = vmatpush1.msra.mxu0 0.0
          %794 = vmatprep.subr.mxu0 0.0
          %795 = vmatpush1.msra.mxu0 0.0
          %796 = vmatprep.subr.mxu0 0.0
          %797 = vmatpush1.msra.mxu0 0.0
          %798 = vmatprep.subr.mxu0 0.0
          %799 = vmatpush1.msra.mxu0 0.0
          %800 = vmatprep.subr.mxu0 0.0
          %801 = vmatpush1.msra.mxu0 0.0
          %802 = vmatprep.subr.mxu0 0.0
          %803 = vmatpush1.msra.mxu0 0.0
          %804 = vmatprep.subr.mxu0 0.0
          %805 = vmatpush1.msra.mxu0 0.0
          %806 = vmatprep.mubr.f32.mxu0 0.0
          %807 = vmatmul.mubr.f32.gmra.mrb[0].mxu0 %v566
          %v808 = vpop.f32.mrb[0].mxu0
          %v809 = vadd.f32 %v460, %v808
          %v810 = vpop.f32.mrb[0].mxu0
          %v811 = vadd.f32 %v464, %v810
          %812 = vdwg.mxu0
          %813 = vmatprep.subr.mxu0 %v582
          %814 = vmatpush1.msra.mxu0 %v580
          %815 = vmatprep.subr.mxu0 0.0
          %816 = vmatpush1.msra.mxu0 0.0
          %817 = vmatprep.subr.mxu0 0.0
          %818 = vmatpush1.msra.mxu0 0.0
          %819 = vmatprep.subr.mxu0 0.0
          %820 = vmatpush1.msra.mxu0 0.0
          %821 = vmatprep.subr.mxu0 0.0
          %822 = vmatpush1.msra.mxu0 0.0
          %823 = vmatprep.subr.mxu0 0.0
          %824 = vmatpush1.msra.mxu0 0.0
          %825 = vmatprep.subr.mxu0 0.0
          %826 = vmatpush1.msra.mxu0 0.0
          %827 = vmatprep.subr.mxu0 0.0
          %828 = vmatpush1.msra.mxu0 0.0
          %829 = vmatprep.subr.mxu0 0.0
          %830 = vmatpush1.msra.mxu0 0.0
          %831 = vmatprep.subr.mxu0 0.0
          %832 = vmatpush1.msra.mxu0 0.0
          %833 = vmatprep.subr.mxu0 0.0
          %834 = vmatpush1.msra.mxu0 0.0
          %835 = vmatprep.subr.mxu0 0.0
          %836 = vmatpush1.msra.mxu0 0.0
          %837 = vmatprep.subr.mxu0 0.0
          %838 = vmatpush1.msra.mxu0 0.0
          %839 = vmatprep.subr.mxu0 0.0
          %840 = vmatpush1.msra.mxu0 0.0
          %841 = vmatprep.subr.mxu0 0.0
          %842 = vmatpush1.msra.mxu0 0.0
          %843 = vmatprep.subr.mxu0 0.0
          %844 = vmatpush1.msra.mxu0 0.0
          %845 = vmatprep.subr.mxu0 0.0
          %846 = vmatpush1.msra.mxu0 0.0
          %847 = vmatprep.subr.mxu0 0.0
          %848 = vmatpush1.msra.mxu0 0.0
          %849 = vmatprep.subr.mxu0 0.0
          %850 = vmatpush1.msra.mxu0 0.0
          %851 = vmatprep.subr.mxu0 0.0
          %852 = vmatpush1.msra.mxu0 0.0
          %853 = vmatprep.subr.mxu0 0.0
          %854 = vmatpush1.msra.mxu0 0.0
          %855 = vmatprep.subr.mxu0 0.0
          %856 = vmatpush1.msra.mxu0 0.0
          %857 = vmatprep.subr.mxu0 0.0
          %858 = vmatpush1.msra.mxu0 0.0
          %859 = vmatprep.subr.mxu0 0.0
          %860 = vmatpush1.msra.mxu0 0.0
          %861 = vmatprep.subr.mxu0 0.0
          %862 = vmatpush1.msra.mxu0 0.0
          %863 = vmatprep.subr.mxu0 0.0
          %864 = vmatpush1.msra.mxu0 0.0
          %865 = vmatprep.subr.mxu0 0.0
          %866 = vmatpush1.msra.mxu0 0.0
          %867 = vmatprep.subr.mxu0 0.0
          %868 = vmatpush1.msra.mxu0 0.0
          %869 = vmatprep.subr.mxu0 0.0
          %870 = vmatpush1.msra.mxu0 0.0
          %871 = vmatprep.subr.mxu0 0.0
          %872 = vmatpush1.msra.mxu0 0.0
          %873 = vmatprep.subr.mxu0 0.0
          %874 = vmatpush1.msra.mxu0 0.0
          %875 = vmatprep.subr.mxu0 0.0
          %876 = vmatpush1.msra.mxu0 0.0
          %877 = vmatprep.mubr.f32.mxu0 0.0
          %878 = vmatmul.mubr.f32.gmra.mrb[0].mxu0 %v566
          %v879 = vpop.f32.mrb[0].mxu0
          %v880 = vadd.f32 %v468, %v879
          %v881 = vpop.f32.mrb[0].mxu0
          %v882 = vadd.f32 %v472, %v881
          %883 = vdwg.mxu0
          %884 = vmatprep.subr.mxu0 %v586
          %885 = vmatpush1.msra.mxu0 %v584
          %886 = vmatprep.subr.mxu0 0.0
          %887 = vmatpush1.msra.mxu0 0.0
          %888 = vmatprep.subr.mxu0 0.0
          %889 = vmatpush1.msra.mxu0 0.0
          %890 = vmatprep.subr.mxu0 0.0
          %891 = vmatpush1.msra.mxu0 0.0
          %892 = vmatprep.subr.mxu0 0.0
          %893 = vmatpush1.msra.mxu0 0.0
          %894 = vmatprep.subr.mxu0 0.0
          %895 = vmatpush1.msra.mxu0 0.0
          %896 = vmatprep.subr.mxu0 0.0
          %897 = vmatpush1.msra.mxu0 0.0
          %898 = vmatprep.subr.mxu0 0.0
          %899 = vmatpush1.msra.mxu0 0.0
          %900 = vmatprep.subr.mxu0 0.0
          %901 = vmatpush1.msra.mxu0 0.0
          %902 = vmatprep.subr.mxu0 0.0
          %903 = vmatpush1.msra.mxu0 0.0
          %904 = vmatprep.subr.mxu0 0.0
          %905 = vmatpush1.msra.mxu0 0.0
          %906 = vmatprep.subr.mxu0 0.0
          %907 = vmatpush1.msra.mxu0 0.0
          %908 = vmatprep.subr.mxu0 0.0
          %909 = vmatpush1.msra.mxu0 0.0
          %910 = vmatprep.subr.mxu0 0.0
          %911 = vmatpush1.msra.mxu0 0.0
          %912 = vmatprep.subr.mxu0 0.0
          %913 = vmatpush1.msra.mxu0 0.0
          %914 = vmatprep.subr.mxu0 0.0
          %915 = vmatpush1.msra.mxu0 0.0
          %916 = vmatprep.subr.mxu0 0.0
          %917 = vmatpush1.msra.mxu0 0.0
          %918 = vmatprep.subr.mxu0 0.0
          %919 = vmatpush1.msra.mxu0 0.0
          %920 = vmatprep.subr.mxu0 0.0
          %921 = vmatpush1.msra.mxu0 0.0
          %922 = vmatprep.subr.mxu0 0.0
          %923 = vmatpush1.msra.mxu0 0.0
          %924 = vmatprep.subr.mxu0 0.0
          %925 = vmatpush1.msra.mxu0 0.0
          %926 = vmatprep.subr.mxu0 0.0
          %927 = vmatpush1.msra.mxu0 0.0
          %928 = vmatprep.subr.mxu0 0.0
          %929 = vmatpush1.msra.mxu0 0.0
          %930 = vmatprep.subr.mxu0 0.0
          %931 = vmatpush1.msra.mxu0 0.0
          %932 = vmatprep.subr.mxu0 0.0
          %933 = vmatpush1.msra.mxu0 0.0
          %934 = vmatprep.subr.mxu0 0.0
          %935 = vmatpush1.msra.mxu0 0.0
          %936 = vmatprep.subr.mxu0 0.0
          %937 = vmatpush1.msra.mxu0 0.0
          %938 = vmatprep.subr.mxu0 0.0
          %939 = vmatpush1.msra.mxu0 0.0
          %940 = vmatprep.subr.mxu0 0.0
          %941 = vmatpush1.msra.mxu0 0.0
          %942 = vmatprep.subr.mxu0 0.0
          %943 = vmatpush1.msra.mxu0 0.0
          %944 = vmatprep.subr.mxu0 0.0
          %945 = vmatpush1.msra.mxu0 0.0
          %946 = vmatprep.subr.mxu0 0.0
          %947 = vmatpush1.msra.mxu0 0.0
          %948 = vmatprep.mubr.f32.mxu0 0.0
          %949 = vmatmul.mubr.f32.gmra.mrb[0].mxu0 %v566
          %v950 = vpop.f32.mrb[0].mxu0
          %v951 = vadd.f32 %v476, %v950
          %v952 = vpop.f32.mrb[0].mxu0
          %v953 = vadd.f32 %v480, %v952
          %954 = vdwg.mxu0
          %955 = vmatprep.subr.mxu0 %v590
          %956 = vmatpush1.msra.mxu0 %v588
          %957 = vmatprep.subr.mxu0 0.0
          %958 = vmatpush1.msra.mxu0 0.0
          %959 = vmatprep.subr.mxu0 0.0
          %960 = vmatpush1.msra.mxu0 0.0
          %961 = vmatprep.subr.mxu0 0.0
          %962 = vmatpush1.msra.mxu0 0.0
          %963 = vmatprep.subr.mxu0 0.0
          %964 = vmatpush1.msra.mxu0 0.0
          %965 = vmatprep.subr.mxu0 0.0
          %966 = vmatpush1.msra.mxu0 0.0
          %967 = vmatprep.subr.mxu0 0.0
          %968 = vmatpush1.msra.mxu0 0.0
          %969 = vmatprep.subr.mxu0 0.0
          %970 = vmatpush1.msra.mxu0 0.0
          %971 = vmatprep.subr.mxu0 0.0
          %972 = vmatpush1.msra.mxu0 0.0
          %973 = vmatprep.subr.mxu0 0.0
          %974 = vmatpush1.msra.mxu0 0.0
          %975 = vmatprep.subr.mxu0 0.0
          %976 = vmatpush1.msra.mxu0 0.0
          %977 = vmatprep.subr.mxu0 0.0
          %978 = vmatpush1.msra.mxu0 0.0
          %979 = vmatprep.subr.mxu0 0.0
          %980 = vmatpush1.msra.mxu0 0.0
          %981 = vmatprep.subr.mxu0 0.0
          %982 = vmatpush1.msra.mxu0 0.0
          %983 = vmatprep.subr.mxu0 0.0
          %984 = vmatpush1.msra.mxu0 0.0
          %985 = vmatprep.subr.mxu0 0.0
          %986 = vmatpush1.msra.mxu0 0.0
          %987 = vmatprep.subr.mxu0 0.0
          %988 = vmatpush1.msra.mxu0 0.0
          %989 = vmatprep.subr.mxu0 0.0
          %990 = vmatpush1.msra.mxu0 0.0
          %991 = vmatprep.subr.mxu0 0.0
          %992 = vmatpush1.msra.mxu0 0.0
          %993 = vmatprep.subr.mxu0 0.0
          %994 = vmatpush1.msra.mxu0 0.0
          %995 = vmatprep.subr.mxu0 0.0
          %996 = vmatpush1.msra.mxu0 0.0
          %997 = vmatprep.subr.mxu0 0.0
          %998 = vmatpush1.msra.mxu0 0.0
          %999 = vmatprep.subr.mxu0 0.0
          %1000 = vmatpush1.msra.mxu0 0.0
          %1001 = vmatprep.subr.mxu0 0.0
          %1002 = vmatpush1.msra.mxu0 0.0
          %1003 = vmatprep.subr.mxu0 0.0
          %1004 = vmatpush1.msra.mxu0 0.0
          %1005 = vmatprep.subr.mxu0 0.0
          %1006 = vmatpush1.msra.mxu0 0.0
          %1007 = vmatprep.subr.mxu0 0.0
          %1008 = vmatpush1.msra.mxu0 0.0
          %1009 = vmatprep.subr.mxu0 0.0
          %1010 = vmatpush1.msra.mxu0 0.0
          %1011 = vmatprep.subr.mxu0 0.0
          %1012 = vmatpush1.msra.mxu0 0.0
          %1013 = vmatprep.subr.mxu0 0.0
          %1014 = vmatpush1.msra.mxu0 0.0
          %1015 = vmatprep.subr.mxu0 0.0
          %1016 = vmatpush1.msra.mxu0 0.0
          %1017 = vmatprep.subr.mxu0 0.0
          %1018 = vmatpush1.msra.mxu0 0.0
          %1019 = vmatprep.mubr.f32.mxu0 0.0
          %1020 = vmatmul.mubr.f32.gmra.mrb[0].mxu0 %v566
          %v1021 = vpop.f32.mrb[0].mxu0
          %v1022 = vadd.f32 %v484, %v1021
          %v1023 = vpop.f32.mrb[0].mxu0
          %v1024 = vadd.f32 %v488, %v1023
          %1025 = vdwg.mxu0
          %1026 = vmatprep.subr.mxu0 %v594
          %1027 = vmatpush1.msra.mxu0 %v592
          %1028 = vmatprep.subr.mxu0 0.0
          %1029 = vmatpush1.msra.mxu0 0.0
          %1030 = vmatprep.subr.mxu0 0.0
          %1031 = vmatpush1.msra.mxu0 0.0
          %1032 = vmatprep.subr.mxu0 0.0
          %1033 = vmatpush1.msra.mxu0 0.0
          %1034 = vmatprep.subr.mxu0 0.0
          %1035 = vmatpush1.msra.mxu0 0.0
          %1036 = vmatprep.subr.mxu0 0.0
          %1037 = vmatpush1.msra.mxu0 0.0
          %1038 = vmatprep.subr.mxu0 0.0
          %1039 = vmatpush1.msra.mxu0 0.0
          %1040 = vmatprep.subr.mxu0 0.0
          %1041 = vmatpush1.msra.mxu0 0.0
          %1042 = vmatprep.subr.mxu0 0.0
          %1043 = vmatpush1.msra.mxu0 0.0
          %1044 = vmatprep.subr.mxu0 0.0
          %1045 = vmatpush1.msra.mxu0 0.0
          %1046 = vmatprep.subr.mxu0 0.0
          %1047 = vmatpush1.msra.mxu0 0.0
          %1048 = vmatprep.subr.mxu0 0.0
          %1049 = vmatpush1.msra.mxu0 0.0
          %1050 = vmatprep.subr.mxu0 0.0
          %1051 = vmatpush1.msra.mxu0 0.0
          %1052 = vmatprep.subr.mxu0 0.0
          %1053 = vmatpush1.msra.mxu0 0.0
          %1054 = vmatprep.subr.mxu0 0.0
          %1055 = vmatpush1.msra.mxu0 0.0
          %1056 = vmatprep.subr.mxu0 0.0
          %1057 = vmatpush1.msra.mxu0 0.0
          %1058 = vmatprep.subr.mxu0 0.0
          %1059 = vmatpush1.msra.mxu0 0.0
          %1060 = vmatprep.subr.mxu0 0.0
          %1061 = vmatpush1.msra.mxu0 0.0
          %1062 = vmatprep.subr.mxu0 0.0
          %1063 = vmatpush1.msra.mxu0 0.0
          %1064 = vmatprep.subr.mxu0 0.0
          %1065 = vmatpush1.msra.mxu0 0.0
          %1066 = vmatprep.subr.mxu0 0.0
          %1067 = vmatpush1.msra.mxu0 0.0
          %1068 = vmatprep.subr.mxu0 0.0
          %1069 = vmatpush1.msra.mxu0 0.0
          %1070 = vmatprep.subr.mxu0 0.0
          %1071 = vmatpush1.msra.mxu0 0.0
          %1072 = vmatprep.subr.mxu0 0.0
          %1073 = vmatpush1.msra.mxu0 0.0
          %1074 = vmatprep.subr.mxu0 0.0
          %1075 = vmatpush1.msra.mxu0 0.0
          %1076 = vmatprep.subr.mxu0 0.0
          %1077 = vmatpush1.msra.mxu0 0.0
          %1078 = vmatprep.subr.mxu0 0.0
          %1079 = vmatpush1.msra.mxu0 0.0
          %1080 = vmatprep.subr.mxu0 0.0
          %1081 = vmatpush1.msra.mxu0 0.0
          %1082 = vmatprep.subr.mxu0 0.0
          %1083 = vmatpush1.msra.mxu0 0.0
          %1084 = vmatprep.subr.mxu0 0.0
          %1085 = vmatpush1.msra.mxu0 0.0
          %1086 = vmatprep.subr.mxu0 0.0
          %1087 = vmatpush1.msra.mxu0 0.0
          %1088 = vmatprep.subr.mxu0 0.0
          %1089 = vmatpush1.msra.mxu0 0.0
          %1090 = vmatprep.mubr.f32.mxu0 0.0
          %1091 = vmatmul.mubr.f32.gmra.mrb[0].mxu0 %v566
          %v1092 = vpop.f32.mrb[0].mxu0
          %v1093 = vadd.f32 %v492, %v1092
          %v1094 = vpop.f32.mrb[0].mxu0
          %v1095 = vadd.f32 %v496, %v1094
          %1096 = vdwg.mxu0
          %1097 = vmatprep.subr.mxu0 %v598
          %1098 = vmatpush1.msra.mxu0 %v596
          %1099 = vmatprep.subr.mxu0 0.0
          %1100 = vmatpush1.msra.mxu0 0.0
          %1101 = vmatprep.subr.mxu0 0.0
          %1102 = vmatpush1.msra.mxu0 0.0
          %1103 = vmatprep.subr.mxu0 0.0
          %1104 = vmatpush1.msra.mxu0 0.0
          %1105 = vmatprep.subr.mxu0 0.0
          %1106 = vmatpush1.msra.mxu0 0.0
          %1107 = vmatprep.subr.mxu0 0.0
          %1108 = vmatpush1.msra.mxu0 0.0
          %1109 = vmatprep.subr.mxu0 0.0
          %1110 = vmatpush1.msra.mxu0 0.0
          %1111 = vmatprep.subr.mxu0 0.0
          %1112 = vmatpush1.msra.mxu0 0.0
          %1113 = vmatprep.subr.mxu0 0.0
          %1114 = vmatpush1.msra.mxu0 0.0
          %1115 = vmatprep.subr.mxu0 0.0
          %1116 = vmatpush1.msra.mxu0 0.0
          %1117 = vmatprep.subr.mxu0 0.0
          %1118 = vmatpush1.msra.mxu0 0.0
          %1119 = vmatprep.subr.mxu0 0.0
          %1120 = vmatpush1.msra.mxu0 0.0
          %1121 = vmatprep.subr.mxu0 0.0
          %1122 = vmatpush1.msra.mxu0 0.0
          %1123 = vmatprep.subr.mxu0 0.0
          %1124 = vmatpush1.msra.mxu0 0.0
          %1125 = vmatprep.subr.mxu0 0.0
          %1126 = vmatpush1.msra.mxu0 0.0
          %1127 = vmatprep.subr.mxu0 0.0
          %1128 = vmatpush1.msra.mxu0 0.0
          %1129 = vmatprep.subr.mxu0 0.0
          %1130 = vmatpush1.msra.mxu0 0.0
          %1131 = vmatprep.subr.mxu0 0.0
          %1132 = vmatpush1.msra.mxu0 0.0
          %1133 = vmatprep.subr.mxu0 0.0
          %1134 = vmatpush1.msra.mxu0 0.0
          %1135 = vmatprep.subr.mxu0 0.0
          %1136 = vmatpush1.msra.mxu0 0.0
          %1137 = vmatprep.subr.mxu0 0.0
          %1138 = vmatpush1.msra.mxu0 0.0
          %1139 = vmatprep.subr.mxu0 0.0
          %1140 = vmatpush1.msra.mxu0 0.0
          %1141 = vmatprep.subr.mxu0 0.0
          %1142 = vmatpush1.msra.mxu0 0.0
          %1143 = vmatprep.subr.mxu0 0.0
          %1144 = vmatpush1.msra.mxu0 0.0
          %1145 = vmatprep.subr.mxu0 0.0
          %1146 = vmatpush1.msra.mxu0 0.0
          %1147 = vmatprep.subr.mxu0 0.0
          %1148 = vmatpush1.msra.mxu0 0.0
          %1149 = vmatprep.subr.mxu0 0.0
          %1150 = vmatpush1.msra.mxu0 0.0
          %1151 = vmatprep.subr.mxu0 0.0
          %1152 = vmatpush1.msra.mxu0 0.0
          %1153 = vmatprep.subr.mxu0 0.0
          %1154 = vmatpush1.msra.mxu0 0.0
          %1155 = vmatprep.subr.mxu0 0.0
          %1156 = vmatpush1.msra.mxu0 0.0
          %1157 = vmatprep.subr.mxu0 0.0
          %1158 = vmatpush1.msra.mxu0 0.0
          %1159 = vmatprep.subr.mxu0 0.0
          %1160 = vmatpush1.msra.mxu0 0.0
          %1161 = vmatprep.mubr.f32.mxu0 0.0
          %1162 = vmatmul.mubr.f32.gmra.mrb[0].mxu0 %v566
          %v1163 = vpop.f32.mrb[0].mxu0
          %v1164 = vadd.f32 %v500, %v1163
          %v1165 = vpop.f32.mrb[0].mxu0
          %v1166 = vadd.f32 %v504, %v1165
          %1167 = vdwg.mxu0
          %v1168 = vpack.c.bf16 %v667, %v667
          %v1169 = vpack.c.bf16 %v669, %v669
          %v1170 = vpack.c.bf16 %v738, %v738
          %v1171 = vpack.c.bf16 %v740, %v740
          %v1172 = vpack.c.bf16 %v809, %v809
          %v1173 = vpack.c.bf16 %v811, %v811
          %v1174 = vpack.c.bf16 %v880, %v880
          %v1175 = vpack.c.bf16 %v882, %v882
          %v1176 = vpack.c.bf16 %v951, %v951
          %v1177 = vpack.c.bf16 %v953, %v953
          %v1178 = vpack.c.bf16 %v1022, %v1022
          %v1179 = vpack.c.bf16 %v1024, %v1024
          %v1180 = vpack.c.bf16 %v1093, %v1093
          %v1181 = vpack.c.bf16 %v1095, %v1095
          %v1182 = vpack.c.bf16 %v1164, %v1164
          %v1183 = vpack.c.bf16 %v1166, %v1166
          %v1200 = vcombine.low %v1168, %v1169
          %v1201 = vcombine.low %v1170, %v1171
          %v1203 = vunpack.c.l.s4 1983009808
          %v1204 = vunpack.c.0.s8 %v1203
          %v1205 = vlaneseq
          %v1206 = vshrl.u32 %v1205, 7
          %v1207 = vsub.s32 %v1204, %v1206
          %v1208 = vrot.slane %v1200, %v1207
          %v1210 = vunpack.c.l.s4 1983009808
          %v1211 = vunpack.c.0.s8 %v1210
          %v1212 = vlaneseq
          %v1213 = vshrl.u32 %v1212, 7
          %v1214 = vsub.s32 %v1211, %v1213
          %v1215 = vrot.slane %v1201, %v1214
          %v1216 = vcombine.low %v1208, %v1215
          %v1217 = vcombine.low %v1172, %v1173
          %v1218 = vcombine.low %v1174, %v1175
          %v1220 = vunpack.c.l.s4 1983009808
          %v1221 = vunpack.c.0.s8 %v1220
          %v1222 = vlaneseq
          %v1223 = vshrl.u32 %v1222, 7
          %v1224 = vsub.s32 %v1221, %v1223
          %v1225 = vrot.slane %v1217, %v1224
          %v1227 = vunpack.c.l.s4 1983009808
          %v1228 = vunpack.c.0.s8 %v1227
          %v1229 = vlaneseq
          %v1230 = vshrl.u32 %v1229, 7
          %v1231 = vsub.s32 %v1228, %v1230
          %v1232 = vrot.slane %v1218, %v1231
          %v1233 = vcombine.low %v1225, %v1232
          %v1234 = vcombine.low %v1176, %v1177
          %v1235 = vcombine.low %v1178, %v1179
          %v1237 = vunpack.c.l.s4 1983009808
          %v1238 = vunpack.c.0.s8 %v1237
          %v1239 = vlaneseq
          %v1240 = vshrl.u32 %v1239, 7
          %v1241 = vsub.s32 %v1238, %v1240
          %v1242 = vrot.slane %v1234, %v1241
          %v1244 = vunpack.c.l.s4 1983009808
          %v1245 = vunpack.c.0.s8 %v1244
          %v1246 = vlaneseq
          %v1247 = vshrl.u32 %v1246, 7
          %v1248 = vsub.s32 %v1245, %v1247
          %v1249 = vrot.slane %v1235, %v1248
          %v1250 = vcombine.low %v1242, %v1249
          %v1251 = vcombine.low %v1180, %v1181
          %v1252 = vcombine.low %v1182, %v1183
          %v1254 = vunpack.c.l.s4 1983009808
          %v1255 = vunpack.c.0.s8 %v1254
          %v1256 = vlaneseq
          %v1257 = vshrl.u32 %v1256, 7
          %v1258 = vsub.s32 %v1255, %v1257
          %v1259 = vrot.slane %v1251, %v1258
          %v1261 = vunpack.c.l.s4 1983009808
          %v1262 = vunpack.c.0.s8 %v1261
          %v1263 = vlaneseq
          %v1264 = vshrl.u32 %v1263, 7
          %v1265 = vsub.s32 %v1262, %v1264
          %v1266 = vrot.slane %v1252, %v1265
          %v1267 = vcombine.low %v1259, %v1266
          %1272 = vst [vmem:[#allocation2] sm:$0xff] %v1216
          %1273 = vst [vmem:[#allocation2 + $0x8] sm:$0xff] %v1233
          %1274 = vst [vmem:[#allocation2 + $0x10] sm:$0xff] %v1250
          %1275 = vst [vmem:[#allocation2 + $0x18] sm:$0xff] %v1267
          %1276 = vst [vmem:[#allocation3] sm:$0xf] 0.0
        $region72: #{simclr_forward.1} parent=47 // pred_fallthru
          _
        %v1277 = vld [vmem:[#allocation2] sm:$0xff]
        %v1278 = vld [vmem:[#allocation2 + $0x8] sm:$0xff]
        %v1279 = vld [vmem:[#allocation2 + $0x10] sm:$0xff]
        %v1280 = vld [vmem:[#allocation2 + $0x18] sm:$0xff]
        %v1281 = vld [vmem:[%s326] sm:$0xff]
        %v1282 = vld [vmem:[%s326 + $0x8] sm:$0xff]
        %v1283 = vld [vmem:[%s326 + $0x10] sm:$0xff]
        %v1284 = vld [vmem:[%s326 + $0x18] sm:$0xff]
        %v1285 = vld [vmem:[%s326 + $0x20] sm:$0xff]
        %v1286 = vld [vmem:[%s326 + $0x28] sm:$0xff]
        %v1287 = vld [vmem:[%s326 + $0x30] sm:$0xff]
        %v1288 = vld [vmem:[%s326 + $0x38] sm:$0xff]
        %v1289 = vld [vmem:[%s326 + $0x40] sm:$0xff]
        %v1290 = vld [vmem:[%s326 + $0x48] sm:$0xff]
        %v1291 = vld [vmem:[%s326 + $0x50] sm:$0xff]
        %v1292 = vld [vmem:[%s326 + $0x58] sm:$0xff]
        %v1293 = vld [vmem:[%s326 + $0x60] sm:$0xff]
        %v1294 = vld [vmem:[%s326 + $0x68] sm:$0xff]
        %v1295 = vld [vmem:[%s326 + $0x70] sm:$0xff]
        %v1296 = vld [vmem:[%s326 + $0x78] sm:$0xff]
        %v1297 = vld [vmem:[%s326 + $0x80] sm:$0xff]
        %v1298 = vld [vmem:[%s326 + $0x88] sm:$0xff]
        %v1299 = vld [vmem:[%s326 + $0x90] sm:$0xff]
        %v1300 = vld [vmem:[%s326 + $0x98] sm:$0xff]
        %v1301 = vld [vmem:[%s326 + $0xa0] sm:$0xff]
        %v1302 = vld [vmem:[%s326 + $0xa8] sm:$0xff]
        %v1303 = vld [vmem:[%s326 + $0xb0] sm:$0xff]
        %v1304 = vld [vmem:[%s326 + $0xb8] sm:$0xff]
        %v1305 = vld [vmem:[%s326 + $0xc0] sm:$0xff]
        %v1306 = vld [vmem:[%s326 + $0xc8] sm:$0xff]
        %v1307 = vld [vmem:[%s326 + $0xd0] sm:$0xff]
        %v1308 = vld [vmem:[%s326 + $0xd8] sm:$0xff]
        %v1309 = vld [vmem:[%s326 + $0xe0] sm:$0xff]
        %v1310 = vld [vmem:[%s326 + $0xe8] sm:$0xff]
        %v1311 = vld [vmem:[%s326 + $0xf0] sm:$0xff]
        %v1312 = vld [vmem:[%s326 + $0xf8] sm:$0xff]
        %v1313 = vld [vmem:[%s326 + $0x100] sm:$0xff]
        %v1314 = vld [vmem:[%s326 + $0x108] sm:$0xff]
        %v1315 = vld [vmem:[%s326 + $0x110] sm:$0xff]
        %v1316 = vld [vmem:[%s326 + $0x118] sm:$0xff]
        %v1317 = vld [vmem:[%s326 + $0x120] sm:$0xff]
        %v1318 = vld [vmem:[%s326 + $0x128] sm:$0xff]
        %v1319 = vld [vmem:[%s326 + $0x130] sm:$0xff]
        %v1320 = vld [vmem:[%s326 + $0x138] sm:$0xff]
        %v1321 = vld [vmem:[%s326 + $0x140] sm:$0xff]
        %v1322 = vld [vmem:[%s326 + $0x148] sm:$0xff]
        %v1323 = vld [vmem:[%s326 + $0x150] sm:$0xff]
        %v1324 = vld [vmem:[%s326 + $0x158] sm:$0xff]
        %v1325 = vld [vmem:[%s326 + $0x160] sm:$0xff]
        %v1326 = vld [vmem:[%s326 + $0x168] sm:$0xff]
        %v1327 = vld [vmem:[%s326 + $0x170] sm:$0xff]
        %v1328 = vld [vmem:[%s326 + $0x178] sm:$0xff]
        %v1329 = vld [vmem:[%s326 + $0x180] sm:$0xff]
        %v1330 = vld [vmem:[%s326 + $0x188] sm:$0xff]
        %v1331 = vld [vmem:[%s326 + $0x190] sm:$0xff]
        %v1332 = vld [vmem:[%s326 + $0x198] sm:$0xff]
        %v1333 = vld [vmem:[%s326 + $0x1a0] sm:$0xff]
        %v1334 = vld [vmem:[%s326 + $0x1a8] sm:$0xff]
        %v1335 = vld [vmem:[%s326 + $0x1b0] sm:$0xff]
        %v1336 = vld [vmem:[%s326 + $0x1b8] sm:$0xff]
        %v1337 = vld [vmem:[%s326 + $0x1c0] sm:$0xff]
        %v1338 = vld [vmem:[%s326 + $0x1c8] sm:$0xff]
        %v1339 = vld [vmem:[%s326 + $0x1d0] sm:$0xff]
        %v1340 = vld [vmem:[%s326 + $0x1d8] sm:$0xff]
        %v1341 = vld [vmem:[%s326 + $0x1e0] sm:$0xff]
        %v1342 = vld [vmem:[%s326 + $0x1e8] sm:$0xff]
        %v1343 = vld [vmem:[%s326 + $0x1f0] sm:$0xff]
        %v1344 = vld [vmem:[%s326 + $0x1f8] sm:$0xff]
        %v1345 = vld [vmem:[%s326 + $0x200] sm:$0xff]
        %v1346 = vld [vmem:[%s326 + $0x208] sm:$0xff]
        %v1347 = vld [vmem:[%s326 + $0x210] sm:$0xff]
        %v1348 = vld [vmem:[%s326 + $0x218] sm:$0xff]
        %v1349 = vld [vmem:[%s326 + $0x220] sm:$0xff]
        %v1350 = vld [vmem:[%s326 + $0x228] sm:$0xff]
        %v1351 = vld [vmem:[%s326 + $0x230] sm:$0xff]
        %v1352 = vld [vmem:[%s326 + $0x238] sm:$0xff]
        %v1353 = vld [vmem:[%s326 + $0x240] sm:$0xff]
        %v1354 = vld [vmem:[%s326 + $0x248] sm:$0xff]
        %v1355 = vld [vmem:[%s326 + $0x250] sm:$0xff]
        %v1356 = vld [vmem:[%s326 + $0x258] sm:$0xff]
        %v1357 = vld [vmem:[%s326 + $0x260] sm:$0xff]
        %v1358 = vld [vmem:[%s326 + $0x268] sm:$0xff]
        %v1359 = vld [vmem:[%s326 + $0x270] sm:$0xff]
        %v1360 = vld [vmem:[%s326 + $0x278] sm:$0xff]
        %v1361 = vld [vmem:[%s326 + $0x280] sm:$0xff]
        %v1362 = vld [vmem:[%s326 + $0x288] sm:$0xff]
        %v1363 = vld [vmem:[%s326 + $0x290] sm:$0xff]
        %v1364 = vld [vmem:[%s326 + $0x298] sm:$0xff]
        %v1365 = vld [vmem:[%s326 + $0x2a0] sm:$0xff]
        %v1366 = vld [vmem:[%s326 + $0x2a8] sm:$0xff]
        %v1367 = vld [vmem:[%s326 + $0x2b0] sm:$0xff]
        %v1368 = vld [vmem:[%s326 + $0x2b8] sm:$0xff]
        %v1369 = vld [vmem:[%s326 + $0x2c0] sm:$0xff]
        %v1370 = vld [vmem:[%s326 + $0x2c8] sm:$0xff]
        %v1371 = vld [vmem:[%s326 + $0x2d0] sm:$0xff]
        %v1372 = vld [vmem:[%s326 + $0x2d8] sm:$0xff]
        %v1373 = vld [vmem:[%s326 + $0x2e0] sm:$0xff]
        %v1374 = vld [vmem:[%s326 + $0x2e8] sm:$0xff]
        %v1375 = vld [vmem:[%s326 + $0x2f0] sm:$0xff]
        %v1376 = vld [vmem:[%s326 + $0x2f8] sm:$0xff]
        %v1377 = vld [vmem:[%s326 + $0x300] sm:$0xff]
        %v1378 = vld [vmem:[%s326 + $0x308] sm:$0xff]
        %v1379 = vld [vmem:[%s326 + $0x310] sm:$0xff]
        %v1380 = vld [vmem:[%s326 + $0x318] sm:$0xff]
        %v1381 = vld [vmem:[%s326 + $0x320] sm:$0xff]
        %v1382 = vld [vmem:[%s326 + $0x328] sm:$0xff]
        %v1383 = vld [vmem:[%s326 + $0x330] sm:$0xff]
        %v1384 = vld [vmem:[%s326 + $0x338] sm:$0xff]
        %v1385 = vld [vmem:[%s326 + $0x340] sm:$0xff]
        %v1386 = vld [vmem:[%s326 + $0x348] sm:$0xff]
        %v1387 = vld [vmem:[%s326 + $0x350] sm:$0xff]
        %v1388 = vld [vmem:[%s326 + $0x358] sm:$0xff]
        %v1389 = vld [vmem:[%s326 + $0x360] sm:$0xff]
        %v1390 = vld [vmem:[%s326 + $0x368] sm:$0xff]
        %v1391 = vld [vmem:[%s326 + $0x370] sm:$0xff]
        %v1392 = vld [vmem:[%s326 + $0x378] sm:$0xff]
        %v1393 = vld [vmem:[%s326 + $0x380] sm:$0xff]
        %v1394 = vld [vmem:[%s326 + $0x388] sm:$0xff]
        %v1395 = vld [vmem:[%s326 + $0x390] sm:$0xff]
        %v1396 = vld [vmem:[%s326 + $0x398] sm:$0xff]
        %v1397 = vld [vmem:[%s326 + $0x3a0] sm:$0xff]
        %v1398 = vld [vmem:[%s326 + $0x3a8] sm:$0xff]
        %v1399 = vld [vmem:[%s326 + $0x3b0] sm:$0xff]
        %v1400 = vld [vmem:[%s326 + $0x3b8] sm:$0xff]
        %v1401 = vld [vmem:[%s326 + $0x3c0] sm:$0xff]
        %v1402 = vld [vmem:[%s326 + $0x3c8] sm:$0xff]
        %v1403 = vld [vmem:[%s326 + $0x3d0] sm:$0xff]
        %v1404 = vld [vmem:[%s326 + $0x3d8] sm:$0xff]
        %v1405 = vld [vmem:[%s326 + $0x3e0] sm:$0xff]
        %v1406 = vld [vmem:[%s326 + $0x3e8] sm:$0xff]
        %v1407 = vld [vmem:[%s326 + $0x3f0] sm:$0xff]
        %v1408 = vld [vmem:[%s326 + $0x3f8] sm:$0xff]
        %v1409 = vld [vmem:[%s326 + $0x400] sm:$0xff]
        %v1410 = vld [vmem:[%s326 + $0x408] sm:$0xff]
        %v1411 = vld [vmem:[%s326 + $0x410] sm:$0xff]
        %v1412 = vld [vmem:[%s326 + $0x418] sm:$0xff]
        %v1413 = vld [vmem:[%s326 + $0x420] sm:$0xff]
        %v1414 = vld [vmem:[%s326 + $0x428] sm:$0xff]
        %v1415 = vld [vmem:[%s326 + $0x430] sm:$0xff]
        %v1416 = vld [vmem:[%s326 + $0x438] sm:$0xff]
        %v1417 = vld [vmem:[%s326 + $0x440] sm:$0xff]
        %v1418 = vld [vmem:[%s326 + $0x448] sm:$0xff]
        %v1419 = vld [vmem:[%s326 + $0x450] sm:$0xff]
        %v1420 = vld [vmem:[%s326 + $0x458] sm:$0xff]
        %v1421 = vld [vmem:[%s326 + $0x460] sm:$0xff]
        %v1422 = vld [vmem:[%s326 + $0x468] sm:$0xff]
        %v1423 = vld [vmem:[%s326 + $0x470] sm:$0xff]
        %v1424 = vld [vmem:[%s326 + $0x478] sm:$0xff]
        %v1425 = vld [vmem:[%s326 + $0x480] sm:$0xff]
        %v1426 = vld [vmem:[%s326 + $0x488] sm:$0xff]
        %v1427 = vld [vmem:[%s326 + $0x490] sm:$0xff]
        %v1428 = vld [vmem:[%s326 + $0x498] sm:$0xff]
        %v1429 = vld [vmem:[%s326 + $0x4a0] sm:$0xff]
        %v1430 = vld [vmem:[%s326 + $0x4a8] sm:$0xff]
        %v1431 = vld [vmem:[%s326 + $0x4b0] sm:$0xff]
        %v1432 = vld [vmem:[%s326 + $0x4b8] sm:$0xff]
        %v1433 = vld [vmem:[%s326 + $0x4c0] sm:$0xff]
        %v1434 = vld [vmem:[%s326 + $0x4c8] sm:$0xff]
        %v1435 = vld [vmem:[%s326 + $0x4d0] sm:$0xff]
        %v1436 = vld [vmem:[%s326 + $0x4d8] sm:$0xff]
        %v1437 = vld [vmem:[%s326 + $0x4e0] sm:$0xff]
        %v1438 = vld [vmem:[%s326 + $0x4e8] sm:$0xff]
        %v1439 = vld [vmem:[%s326 + $0x4f0] sm:$0xff]
        %v1440 = vld [vmem:[%s326 + $0x4f8] sm:$0xff]
        %v1441 = vld [vmem:[%s326 + $0x500] sm:$0xff]
        %v1442 = vld [vmem:[%s326 + $0x508] sm:$0xff]
        %v1443 = vld [vmem:[%s326 + $0x510] sm:$0xff]
        %v1444 = vld [vmem:[%s326 + $0x518] sm:$0xff]
        %v1445 = vld [vmem:[%s326 + $0x520] sm:$0xff]
        %v1446 = vld [vmem:[%s326 + $0x528] sm:$0xff]
        %v1447 = vld [vmem:[%s326 + $0x530] sm:$0xff]
        %v1448 = vld [vmem:[%s326 + $0x538] sm:$0xff]
        %v1449 = vld [vmem:[%s326 + $0x540] sm:$0xff]
        %v1450 = vld [vmem:[%s326 + $0x548] sm:$0xff]
        %v1451 = vld [vmem:[%s326 + $0x550] sm:$0xff]
        %v1452 = vld [vmem:[%s326 + $0x558] sm:$0xff]
        %v1453 = vld [vmem:[%s326 + $0x560] sm:$0xff]
        %v1454 = vld [vmem:[%s326 + $0x568] sm:$0xff]
        %v1455 = vld [vmem:[%s326 + $0x570] sm:$0xff]
        %v1456 = vld [vmem:[%s326 + $0x578] sm:$0xff]
        %v1457 = vld [vmem:[%s326 + $0x580] sm:$0xff]
        %v1458 = vld [vmem:[%s326 + $0x588] sm:$0xff]
        %v1459 = vld [vmem:[%s326 + $0x590] sm:$0xff]
        %v1460 = vld [vmem:[%s326 + $0x598] sm:$0xff]
        %v1461 = vld [vmem:[%s326 + $0x5a0] sm:$0xff]
        %v1462 = vld [vmem:[%s326 + $0x5a8] sm:$0xff]
        %v1463 = vld [vmem:[%s326 + $0x5b0] sm:$0xff]
        %v1464 = vld [vmem:[%s326 + $0x5b8] sm:$0xff]
        %v1465 = vld [vmem:[%s326 + $0x5c0] sm:$0xff]
        %v1466 = vld [vmem:[%s326 + $0x5c8] sm:$0xff]
        %v1467 = vld [vmem:[%s326 + $0x5d0] sm:$0xff]
        %v1468 = vld [vmem:[%s326 + $0x5d8] sm:$0xff]
        %v1469 = vld [vmem:[%s326 + $0x5e0] sm:$0xff]
        %v1470 = vld [vmem:[%s326 + $0x5e8] sm:$0xff]
        %v1471 = vld [vmem:[%s326 + $0x5f0] sm:$0xff]
        %v1472 = vld [vmem:[%s326 + $0x5f8] sm:$0xff]
        %v1473 = vld [vmem:[%s326 + $0x600] sm:$0xff]
        %v1474 = vld [vmem:[%s326 + $0x608] sm:$0xff]
        %v1475 = vld [vmem:[%s326 + $0x610] sm:$0xff]
        %v1476 = vld [vmem:[%s326 + $0x618] sm:$0xff]
        %v1477 = vld [vmem:[%s326 + $0x620] sm:$0xff]
        %v1478 = vld [vmem:[%s326 + $0x628] sm:$0xff]
        %v1479 = vld [vmem:[%s326 + $0x630] sm:$0xff]
        %v1480 = vld [vmem:[%s326 + $0x638] sm:$0xff]
        %v1481 = vld [vmem:[%s326 + $0x640] sm:$0xff]
        %v1482 = vld [vmem:[%s326 + $0x648] sm:$0xff]
        %v1483 = vld [vmem:[%s326 + $0x650] sm:$0xff]
        %v1484 = vld [vmem:[%s326 + $0x658] sm:$0xff]
        %v1485 = vld [vmem:[%s326 + $0x660] sm:$0xff]
        %v1486 = vld [vmem:[%s326 + $0x668] sm:$0xff]
        %v1487 = vld [vmem:[%s326 + $0x670] sm:$0xff]
        %v1488 = vld [vmem:[%s326 + $0x678] sm:$0xff]
        %v1489 = vld [vmem:[%s326 + $0x680] sm:$0xff]
        %v1490 = vld [vmem:[%s326 + $0x688] sm:$0xff]
        %v1491 = vld [vmem:[%s326 + $0x690] sm:$0xff]
        %v1492 = vld [vmem:[%s326 + $0x698] sm:$0xff]
        %v1493 = vld [vmem:[%s326 + $0x6a0] sm:$0xff]
        %v1494 = vld [vmem:[%s326 + $0x6a8] sm:$0xff]
        %v1495 = vld [vmem:[%s326 + $0x6b0] sm:$0xff]
        %v1496 = vld [vmem:[%s326 + $0x6b8] sm:$0xff]
        %v1497 = vld [vmem:[%s326 + $0x6c0] sm:$0xff]
        %v1498 = vld [vmem:[%s326 + $0x6c8] sm:$0xff]
        %v1499 = vld [vmem:[%s326 + $0x6d0] sm:$0xff]
        %v1500 = vld [vmem:[%s326 + $0x6d8] sm:$0xff]
        %v1501 = vld [vmem:[%s326 + $0x6e0] sm:$0xff]
        %v1502 = vld [vmem:[%s326 + $0x6e8] sm:$0xff]
        %v1503 = vld [vmem:[%s326 + $0x6f0] sm:$0xff]
        %v1504 = vld [vmem:[%s326 + $0x6f8] sm:$0xff]
        %v1505 = vld [vmem:[%s326 + $0x700] sm:$0xff]
        %v1506 = vld [vmem:[%s326 + $0x708] sm:$0xff]
        %v1507 = vld [vmem:[%s326 + $0x710] sm:$0xff]
        %v1508 = vld [vmem:[%s326 + $0x718] sm:$0xff]
        %v1509 = vld [vmem:[%s326 + $0x720] sm:$0xff]
        %v1510 = vld [vmem:[%s326 + $0x728] sm:$0xff]
        %v1511 = vld [vmem:[%s326 + $0x730] sm:$0xff]
        %v1512 = vld [vmem:[%s326 + $0x738] sm:$0xff]
        %v1513 = vld [vmem:[%s326 + $0x740] sm:$0xff]
        %v1514 = vld [vmem:[%s326 + $0x748] sm:$0xff]
        %v1515 = vld [vmem:[%s326 + $0x750] sm:$0xff]
        %v1516 = vld [vmem:[%s326 + $0x758] sm:$0xff]
        %v1517 = vld [vmem:[%s326 + $0x760] sm:$0xff]
        %v1518 = vld [vmem:[%s326 + $0x768] sm:$0xff]
        %v1519 = vld [vmem:[%s326 + $0x770] sm:$0xff]
        %v1520 = vld [vmem:[%s326 + $0x778] sm:$0xff]
        %v1521 = vld [vmem:[%s326 + $0x780] sm:$0xff]
        %v1522 = vld [vmem:[%s326 + $0x788] sm:$0xff]
        %v1523 = vld [vmem:[%s326 + $0x790] sm:$0xff]
        %v1524 = vld [vmem:[%s326 + $0x798] sm:$0xff]
        %v1525 = vld [vmem:[%s326 + $0x7a0] sm:$0xff]
        %v1526 = vld [vmem:[%s326 + $0x7a8] sm:$0xff]
        %v1527 = vld [vmem:[%s326 + $0x7b0] sm:$0xff]
        %v1528 = vld [vmem:[%s326 + $0x7b8] sm:$0xff]
        %v1529 = vld [vmem:[%s326 + $0x7c0] sm:$0xff]
        %v1530 = vld [vmem:[%s326 + $0x7c8] sm:$0xff]
        %v1531 = vld [vmem:[%s326 + $0x7d0] sm:$0xff]
        %v1532 = vld [vmem:[%s326 + $0x7d8] sm:$0xff]
        %v1533 = vld [vmem:[%s326 + $0x7e0] sm:$0xff]
        %v1534 = vld [vmem:[%s326 + $0x7e8] sm:$0xff]
        %v1535 = vld [vmem:[%s326 + $0x7f0] sm:$0xff]
        %v1536 = vld [vmem:[%s326 + $0x7f8] sm:$0xff]
        %v1537 = vld [vmem:[%s326 + $0x800] sm:$0xff]
        %v1538 = vld [vmem:[%s326 + $0x808] sm:$0xff]
        %v1539 = vld [vmem:[%s326 + $0x810] sm:$0xff]
        %v1540 = vld [vmem:[%s326 + $0x818] sm:$0xff]
        %v1541 = vld [vmem:[%s326 + $0x820] sm:$0xff]
        %v1542 = vld [vmem:[%s326 + $0x828] sm:$0xff]
        %v1543 = vld [vmem:[%s326 + $0x830] sm:$0xff]
        %v1544 = vld [vmem:[%s326 + $0x838] sm:$0xff]
        %v1545 = vld [vmem:[%s326 + $0x840] sm:$0xff]
        %v1546 = vld [vmem:[%s326 + $0x848] sm:$0xff]
        %v1547 = vld [vmem:[%s326 + $0x850] sm:$0xff]
        %v1548 = vld [vmem:[%s326 + $0x858] sm:$0xff]
        %v1549 = vld [vmem:[%s326 + $0x860] sm:$0xff]
        %v1550 = vld [vmem:[%s326 + $0x868] sm:$0xff]
        %v1551 = vld [vmem:[%s326 + $0x870] sm:$0xff]
        %v1552 = vld [vmem:[%s326 + $0x878] sm:$0xff]
        %v1553 = vld [vmem:[%s326 + $0x880] sm:$0xff]
        %v1554 = vld [vmem:[%s326 + $0x888] sm:$0xff]
        %v1555 = vld [vmem:[%s326 + $0x890] sm:$0xff]
        %v1556 = vld [vmem:[%s326 + $0x898] sm:$0xff]
        %v1557 = vld [vmem:[%s326 + $0x8a0] sm:$0xff]
        %v1558 = vld [vmem:[%s326 + $0x8a8] sm:$0xff]
        %v1559 = vld [vmem:[%s326 + $0x8b0] sm:$0xff]
        %v1560 = vld [vmem:[%s326 + $0x8b8] sm:$0xff]
        %v1561 = vld [vmem:[%s326 + $0x8c0] sm:$0xff]
        %v1562 = vld [vmem:[%s326 + $0x8c8] sm:$0xff]
        %v1563 = vld [vmem:[%s326 + $0x8d0] sm:$0xff]
        %v1564 = vld [vmem:[%s326 + $0x8d8] sm:$0xff]
        %v1565 = vld [vmem:[%s326 + $0x8e0] sm:$0xff]
        %v1566 = vld [vmem:[%s326 + $0x8e8] sm:$0xff]
        %v1567 = vld [vmem:[%s326 + $0x8f0] sm:$0xff]
        %v1568 = vld [vmem:[%s326 + $0x8f8] sm:$0xff]
        %v1569 = vld [vmem:[%s326 + $0x900] sm:$0xff]
        %v1570 = vld [vmem:[%s326 + $0x908] sm:$0xff]
        %v1571 = vld [vmem:[%s326 + $0x910] sm:$0xff]
        %v1572 = vld [vmem:[%s326 + $0x918] sm:$0xff]
        %v1573 = vld [vmem:[%s326 + $0x920] sm:$0xff]
        %v1574 = vld [vmem:[%s326 + $0x928] sm:$0xff]
        %v1575 = vld [vmem:[%s326 + $0x930] sm:$0xff]
        %v1576 = vld [vmem:[%s326 + $0x938] sm:$0xff]
        %v1577 = vld [vmem:[%s326 + $0x940] sm:$0xff]
        %v1578 = vld [vmem:[%s326 + $0x948] sm:$0xff]
        %v1579 = vld [vmem:[%s326 + $0x950] sm:$0xff]
        %v1580 = vld [vmem:[%s326 + $0x958] sm:$0xff]
        %v1581 = vld [vmem:[%s326 + $0x960] sm:$0xff]
        %v1582 = vld [vmem:[%s326 + $0x968] sm:$0xff]
        %v1583 = vld [vmem:[%s326 + $0x970] sm:$0xff]
        %v1584 = vld [vmem:[%s326 + $0x978] sm:$0xff]
        %v1585 = vld [vmem:[%s326 + $0x980] sm:$0xff]
        %v1586 = vld [vmem:[%s326 + $0x988] sm:$0xff]
        %v1587 = vld [vmem:[%s326 + $0x990] sm:$0xff]
        %v1588 = vld [vmem:[%s326 + $0x998] sm:$0xff]
        %v1589 = vld [vmem:[%s326 + $0x9a0] sm:$0xff]
        %v1590 = vld [vmem:[%s326 + $0x9a8] sm:$0xff]
        %v1591 = vld [vmem:[%s326 + $0x9b0] sm:$0xff]
        %v1592 = vld [vmem:[%s326 + $0x9b8] sm:$0xff]
        %v1593 = vld [vmem:[%s326 + $0x9c0] sm:$0xff]
        %v1594 = vld [vmem:[%s326 + $0x9c8] sm:$0xff]
        %v1595 = vld [vmem:[%s326 + $0x9d0] sm:$0xff]
        %v1596 = vld [vmem:[%s326 + $0x9d8] sm:$0xff]
        %v1597 = vld [vmem:[%s326 + $0x9e0] sm:$0xff]
        %v1598 = vld [vmem:[%s326 + $0x9e8] sm:$0xff]
        %v1599 = vld [vmem:[%s326 + $0x9f0] sm:$0xff]
        %v1600 = vld [vmem:[%s326 + $0x9f8] sm:$0xff]
        %v1601 = vld [vmem:[%s326 + $0xa00] sm:$0xff]
        %v1602 = vld [vmem:[%s326 + $0xa08] sm:$0xff]
        %v1603 = vld [vmem:[%s326 + $0xa10] sm:$0xff]
        %v1604 = vld [vmem:[%s326 + $0xa18] sm:$0xff]
        %v1605 = vld [vmem:[%s326 + $0xa20] sm:$0xff]
        %v1606 = vld [vmem:[%s326 + $0xa28] sm:$0xff]
        %v1607 = vld [vmem:[%s326 + $0xa30] sm:$0xff]
        %v1608 = vld [vmem:[%s326 + $0xa38] sm:$0xff]
        %v1609 = vld [vmem:[%s326 + $0xa40] sm:$0xff]
        %v1610 = vld [vmem:[%s326 + $0xa48] sm:$0xff]
        %v1611 = vld [vmem:[%s326 + $0xa50] sm:$0xff]
        %v1612 = vld [vmem:[%s326 + $0xa58] sm:$0xff]
        %v1613 = vld [vmem:[%s326 + $0xa60] sm:$0xff]
        %v1614 = vld [vmem:[%s326 + $0xa68] sm:$0xff]
        %v1615 = vld [vmem:[%s326 + $0xa70] sm:$0xff]
        %v1616 = vld [vmem:[%s326 + $0xa78] sm:$0xff]
        %v1617 = vld [vmem:[%s326 + $0xa80] sm:$0xff]
        %v1618 = vld [vmem:[%s326 + $0xa88] sm:$0xff]
        %v1619 = vld [vmem:[%s326 + $0xa90] sm:$0xff]
        %v1620 = vld [vmem:[%s326 + $0xa98] sm:$0xff]
        %v1621 = vld [vmem:[%s326 + $0xaa0] sm:$0xff]
        %v1622 = vld [vmem:[%s326 + $0xaa8] sm:$0xff]
        %v1623 = vld [vmem:[%s326 + $0xab0] sm:$0xff]
        %v1624 = vld [vmem:[%s326 + $0xab8] sm:$0xff]
        %v1625 = vld [vmem:[%s326 + $0xac0] sm:$0xff]
        %v1626 = vld [vmem:[%s326 + $0xac8] sm:$0xff]
        %v1627 = vld [vmem:[%s326 + $0xad0] sm:$0xff]
        %v1628 = vld [vmem:[%s326 + $0xad8] sm:$0xff]
        %v1629 = vld [vmem:[%s326 + $0xae0] sm:$0xff]
        %v1630 = vld [vmem:[%s326 + $0xae8] sm:$0xff]
        %v1631 = vld [vmem:[%s326 + $0xaf0] sm:$0xff]
        %v1632 = vld [vmem:[%s326 + $0xaf8] sm:$0xff]
        %v1633 = vld [vmem:[%s326 + $0xb00] sm:$0xff]
        %v1634 = vld [vmem:[%s326 + $0xb08] sm:$0xff]
        %v1635 = vld [vmem:[%s326 + $0xb10] sm:$0xff]
        %v1636 = vld [vmem:[%s326 + $0xb18] sm:$0xff]
        %v1637 = vld [vmem:[%s326 + $0xb20] sm:$0xff]
        %v1638 = vld [vmem:[%s326 + $0xb28] sm:$0xff]
        %v1639 = vld [vmem:[%s326 + $0xb30] sm:$0xff]
        %v1640 = vld [vmem:[%s326 + $0xb38] sm:$0xff]
        %v1641 = vld [vmem:[%s326 + $0xb40] sm:$0xff]
        %v1642 = vld [vmem:[%s326 + $0xb48] sm:$0xff]
        %v1643 = vld [vmem:[%s326 + $0xb50] sm:$0xff]
        %v1644 = vld [vmem:[%s326 + $0xb58] sm:$0xff]
        %v1645 = vld [vmem:[%s326 + $0xb60] sm:$0xff]
        %v1646 = vld [vmem:[%s326 + $0xb68] sm:$0xff]
        %v1647 = vld [vmem:[%s326 + $0xb70] sm:$0xff]
        %v1648 = vld [vmem:[%s326 + $0xb78] sm:$0xff]
        %v1649 = vld [vmem:[%s326 + $0xb80] sm:$0xff]
        %v1650 = vld [vmem:[%s326 + $0xb88] sm:$0xff]
        %v1651 = vld [vmem:[%s326 + $0xb90] sm:$0xff]
        %v1652 = vld [vmem:[%s326 + $0xb98] sm:$0xff]
        %v1653 = vld [vmem:[%s326 + $0xba0] sm:$0xff]
        %v1654 = vld [vmem:[%s326 + $0xba8] sm:$0xff]
        %v1655 = vld [vmem:[%s326 + $0xbb0] sm:$0xff]
        %v1656 = vld [vmem:[%s326 + $0xbb8] sm:$0xff]
        %v1657 = vld [vmem:[%s326 + $0xbc0] sm:$0xff]
        %v1658 = vld [vmem:[%s326 + $0xbc8] sm:$0xff]
        %v1659 = vld [vmem:[%s326 + $0xbd0] sm:$0xff]
        %v1660 = vld [vmem:[%s326 + $0xbd8] sm:$0xff]
        %v1661 = vld [vmem:[%s326 + $0xbe0] sm:$0xff]
        %v1662 = vld [vmem:[%s326 + $0xbe8] sm:$0xff]
        %v1663 = vld [vmem:[%s326 + $0xbf0] sm:$0xff]
        %v1664 = vld [vmem:[%s326 + $0xbf8] sm:$0xff]
        %v1665 = vld [vmem:[%s326 + $0xc00] sm:$0xff]
        %v1666 = vld [vmem:[%s326 + $0xc08] sm:$0xff]
        %v1667 = vld [vmem:[%s326 + $0xc10] sm:$0xff]
        %v1668 = vld [vmem:[%s326 + $0xc18] sm:$0xff]
        %v1669 = vld [vmem:[%s326 + $0xc20] sm:$0xff]
        %v1670 = vld [vmem:[%s326 + $0xc28] sm:$0xff]
        %v1671 = vld [vmem:[%s326 + $0xc30] sm:$0xff]
        %v1672 = vld [vmem:[%s326 + $0xc38] sm:$0xff]
        %v1673 = vld [vmem:[%s326 + $0xc40] sm:$0xff]
        %v1674 = vld [vmem:[%s326 + $0xc48] sm:$0xff]
        %v1675 = vld [vmem:[%s326 + $0xc50] sm:$0xff]
        %v1676 = vld [vmem:[%s326 + $0xc58] sm:$0xff]
        %v1677 = vld [vmem:[%s326 + $0xc60] sm:$0xff]
        %v1678 = vld [vmem:[%s326 + $0xc68] sm:$0xff]
        %v1679 = vld [vmem:[%s326 + $0xc70] sm:$0xff]
        %v1680 = vld [vmem:[%s326 + $0xc78] sm:$0xff]
        %v1681 = vld [vmem:[%s326 + $0xc80] sm:$0xff]
        %v1682 = vld [vmem:[%s326 + $0xc88] sm:$0xff]
        %v1683 = vld [vmem:[%s326 + $0xc90] sm:$0xff]
        %v1684 = vld [vmem:[%s326 + $0xc98] sm:$0xff]
        %v1685 = vld [vmem:[%s326 + $0xca0] sm:$0xff]
        %v1686 = vld [vmem:[%s326 + $0xca8] sm:$0xff]
        %v1687 = vld [vmem:[%s326 + $0xcb0] sm:$0xff]
        %v1688 = vld [vmem:[%s326 + $0xcb8] sm:$0xff]
        %v1689 = vld [vmem:[%s326 + $0xcc0] sm:$0xff]
        %v1690 = vld [vmem:[%s326 + $0xcc8] sm:$0xff]
        %v1691 = vld [vmem:[%s326 + $0xcd0] sm:$0xff]
        %v1692 = vld [vmem:[%s326 + $0xcd8] sm:$0xff]
        %v1693 = vld [vmem:[%s326 + $0xce0] sm:$0xff]
        %v1694 = vld [vmem:[%s326 + $0xce8] sm:$0xff]
        %v1695 = vld [vmem:[%s326 + $0xcf0] sm:$0xff]
        %v1696 = vld [vmem:[%s326 + $0xcf8] sm:$0xff]
        %v1697 = vld [vmem:[%s326 + $0xd00] sm:$0xff]
        %v1698 = vld [vmem:[%s326 + $0xd08] sm:$0xff]
        %v1699 = vld [vmem:[%s326 + $0xd10] sm:$0xff]
        %v1700 = vld [vmem:[%s326 + $0xd18] sm:$0xff]
        %v1701 = vld [vmem:[%s326 + $0xd20] sm:$0xff]
        %v1702 = vld [vmem:[%s326 + $0xd28] sm:$0xff]
        %v1703 = vld [vmem:[%s326 + $0xd30] sm:$0xff]
        %v1704 = vld [vmem:[%s326 + $0xd38] sm:$0xff]
        %v1705 = vld [vmem:[%s326 + $0xd40] sm:$0xff]
        %v1706 = vld [vmem:[%s326 + $0xd48] sm:$0xff]
        %v1707 = vld [vmem:[%s326 + $0xd50] sm:$0xff]
        %v1708 = vld [vmem:[%s326 + $0xd58] sm:$0xff]
        %v1709 = vld [vmem:[%s326 + $0xd60] sm:$0xff]
        %v1710 = vld [vmem:[%s326 + $0xd68] sm:$0xff]
        %v1711 = vld [vmem:[%s326 + $0xd70] sm:$0xff]
        %v1712 = vld [vmem:[%s326 + $0xd78] sm:$0xff]
        %v1713 = vld [vmem:[%s326 + $0xd80] sm:$0xff]
        %v1714 = vld [vmem:[%s326 + $0xd88] sm:$0xff]
        %v1715 = vld [vmem:[%s326 + $0xd90] sm:$0xff]
        %v1716 = vld [vmem:[%s326 + $0xd98] sm:$0xff]
        %v1717 = vld [vmem:[%s326 + $0xda0] sm:$0xff]
        %v1718 = vld [vmem:[%s326 + $0xda8] sm:$0xff]
        %v1719 = vld [vmem:[%s326 + $0xdb0] sm:$0xff]
        %v1720 = vld [vmem:[%s326 + $0xdb8] sm:$0xff]
        %v1721 = vld [vmem:[%s326 + $0xdc0] sm:$0xff]
        %v1722 = vld [vmem:[%s326 + $0xdc8] sm:$0xff]
        %v1723 = vld [vmem:[%s326 + $0xdd0] sm:$0xff]
        %v1724 = vld [vmem:[%s326 + $0xdd8] sm:$0xff]
        %v1725 = vld [vmem:[%s326 + $0xde0] sm:$0xff]
        %v1726 = vld [vmem:[%s326 + $0xde8] sm:$0xff]
        %v1727 = vld [vmem:[%s326 + $0xdf0] sm:$0xff]
        %v1728 = vld [vmem:[%s326 + $0xdf8] sm:$0xff]
        %v1729 = vld [vmem:[%s326 + $0xe00] sm:$0xff]
        %v1730 = vld [vmem:[%s326 + $0xe08] sm:$0xff]
        %v1731 = vld [vmem:[%s326 + $0xe10] sm:$0xff]
        %v1732 = vld [vmem:[%s326 + $0xe18] sm:$0xff]
        %v1733 = vld [vmem:[%s326 + $0xe20] sm:$0xff]
        %v1734 = vld [vmem:[%s326 + $0xe28] sm:$0xff]
        %v1735 = vld [vmem:[%s326 + $0xe30] sm:$0xff]
        %v1736 = vld [vmem:[%s326 + $0xe38] sm:$0xff]
        %v1737 = vld [vmem:[%s326 + $0xe40] sm:$0xff]
        %v1738 = vld [vmem:[%s326 + $0xe48] sm:$0xff]
        %v1739 = vld [vmem:[%s326 + $0xe50] sm:$0xff]
        %v1740 = vld [vmem:[%s326 + $0xe58] sm:$0xff]
        %v1741 = vld [vmem:[%s326 + $0xe60] sm:$0xff]
        %v1742 = vld [vmem:[%s326 + $0xe68] sm:$0xff]
        %v1743 = vld [vmem:[%s326 + $0xe70] sm:$0xff]
        %v1744 = vld [vmem:[%s326 + $0xe78] sm:$0xff]
        %v1745 = vld [vmem:[%s326 + $0xe80] sm:$0xff]
        %v1746 = vld [vmem:[%s326 + $0xe88] sm:$0xff]
        %v1747 = vld [vmem:[%s326 + $0xe90] sm:$0xff]
        %v1748 = vld [vmem:[%s326 + $0xe98] sm:$0xff]
        %v1749 = vld [vmem:[%s326 + $0xea0] sm:$0xff]
        %v1750 = vld [vmem:[%s326 + $0xea8] sm:$0xff]
        %v1751 = vld [vmem:[%s326 + $0xeb0] sm:$0xff]
        %v1752 = vld [vmem:[%s326 + $0xeb8] sm:$0xff]
        %v1753 = vld [vmem:[%s326 + $0xec0] sm:$0xff]
        %v1754 = vld [vmem:[%s326 + $0xec8] sm:$0xff]
        %v1755 = vld [vmem:[%s326 + $0xed0] sm:$0xff]
        %v1756 = vld [vmem:[%s326 + $0xed8] sm:$0xff]
        %v1757 = vld [vmem:[%s326 + $0xee0] sm:$0xff]
        %v1758 = vld [vmem:[%s326 + $0xee8] sm:$0xff]
        %v1759 = vld [vmem:[%s326 + $0xef0] sm:$0xff]
        %v1760 = vld [vmem:[%s326 + $0xef8] sm:$0xff]
        %v1761 = vld [vmem:[%s326 + $0xf00] sm:$0xff]
        %v1762 = vld [vmem:[%s326 + $0xf08] sm:$0xff]
        %v1763 = vld [vmem:[%s326 + $0xf10] sm:$0xff]
        %v1764 = vld [vmem:[%s326 + $0xf18] sm:$0xff]
        %v1765 = vld [vmem:[%s326 + $0xf20] sm:$0xff]
        %v1766 = vld [vmem:[%s326 + $0xf28] sm:$0xff]
        %v1767 = vld [vmem:[%s326 + $0xf30] sm:$0xff]
        %v1768 = vld [vmem:[%s326 + $0xf38] sm:$0xff]
        %v1769 = vld [vmem:[%s326 + $0xf40] sm:$0xff]
        %v1770 = vld [vmem:[%s326 + $0xf48] sm:$0xff]
        %v1771 = vld [vmem:[%s326 + $0xf50] sm:$0xff]
        %v1772 = vld [vmem:[%s326 + $0xf58] sm:$0xff]
        %v1773 = vld [vmem:[%s326 + $0xf60] sm:$0xff]
        %v1774 = vld [vmem:[%s326 + $0xf68] sm:$0xff]
        %v1775 = vld [vmem:[%s326 + $0xf70] sm:$0xff]
        %v1776 = vld [vmem:[%s326 + $0xf78] sm:$0xff]
        %v1777 = vld [vmem:[%s326 + $0xf80] sm:$0xff]
        %v1778 = vld [vmem:[%s326 + $0xf88] sm:$0xff]
        %v1779 = vld [vmem:[%s326 + $0xf90] sm:$0xff]
        %v1780 = vld [vmem:[%s326 + $0xf98] sm:$0xff]
        %v1781 = vld [vmem:[%s326 + $0xfa0] sm:$0xff]
        %v1782 = vld [vmem:[%s326 + $0xfa8] sm:$0xff]
        %v1783 = vld [vmem:[%s326 + $0xfb0] sm:$0xff]
        %v1784 = vld [vmem:[%s326 + $0xfb8] sm:$0xff]
        %v1785 = vld [vmem:[%s326 + $0xfc0] sm:$0xff]
        %v1786 = vld [vmem:[%s326 + $0xfc8] sm:$0xff]
        %v1787 = vld [vmem:[%s326 + $0xfd0] sm:$0xff]
        %v1788 = vld [vmem:[%s326 + $0xfd8] sm:$0xff]
        %v1789 = vld [vmem:[%s326 + $0xfe0] sm:$0xff]
        %v1790 = vld [vmem:[%s326 + $0xfe8] sm:$0xff]
        %v1791 = vld [vmem:[%s326 + $0xff0] sm:$0xff]
        %v1792 = vld [vmem:[%s326 + $0xff8] sm:$0xff]
        %v1793 = vld [vmem:[%s335] sm:$0xf]
        %v1795 = vlaneseq
        %v1796 = vshrl.u32 %v1795, 7
        %v1797 = vsub.s32 0, %v1796
        %v1798 = vrot.slane %v1793, %v1797
        %v1799 = vlaneseq
        %v1800 = vshrl.u32 %v1799, 7
        %v1801 = vsub.s32 1, %v1800
        %v1802 = vrot.slane %v1793, %v1801
        %v1803 = vlaneseq
        %v1804 = vshrl.u32 %v1803, 7
        %v1805 = vsub.s32 2, %v1804
        %v1806 = vrot.slane %v1793, %v1805
        %v1807 = vlaneseq
        %v1808 = vshrl.u32 %v1807, 7
        %v1809 = vsub.s32 3, %v1808
        %v1810 = vrot.slane %v1793, %v1809
        %v1819 = vcombine.high %v1277, %v1277
        %v1821 = vunpack.c.l.s4 1983009808
        %v1822 = vunpack.c.0.s8 %v1821
        %v1823 = vlaneseq
        %v1824 = vshrl.u32 %v1823, 7
        %v1825 = vsub.s32 %v1822, %v1824
        %v1826 = vrot.slane %v1277, %v1825
        %v1828 = vunpack.c.l.s4 1983009808
        %v1829 = vunpack.c.0.s8 %v1828
        %v1830 = vlaneseq
        %v1831 = vshrl.u32 %v1830, 7
        %v1832 = vsub.s32 %v1829, %v1831
        %v1833 = vrot.slane %v1819, %v1832
        %v1834 = vcombine.high %v1826, %v1826
        %v1835 = vcombine.high %v1833, %v1833
        %v1836 = vcombine.high %v1278, %v1278
        %v1838 = vunpack.c.l.s4 1983009808
        %v1839 = vunpack.c.0.s8 %v1838
        %v1840 = vlaneseq
        %v1841 = vshrl.u32 %v1840, 7
        %v1842 = vsub.s32 %v1839, %v1841
        %v1843 = vrot.slane %v1278, %v1842
        %v1845 = vunpack.c.l.s4 1983009808
        %v1846 = vunpack.c.0.s8 %v1845
        %v1847 = vlaneseq
        %v1848 = vshrl.u32 %v1847, 7
        %v1849 = vsub.s32 %v1846, %v1848
        %v1850 = vrot.slane %v1836, %v1849
        %v1851 = vcombine.high %v1843, %v1843
        %v1852 = vcombine.high %v1850, %v1850
        %v1853 = vcombine.high %v1279, %v1279
        %v1855 = vunpack.c.l.s4 1983009808
        %v1856 = vunpack.c.0.s8 %v1855
        %v1857 = vlaneseq
        %v1858 = vshrl.u32 %v1857, 7
        %v1859 = vsub.s32 %v1856, %v1858
        %v1860 = vrot.slane %v1279, %v1859
        %v1862 = vunpack.c.l.s4 1983009808
        %v1863 = vunpack.c.0.s8 %v1862
        %v1864 = vlaneseq
        %v1865 = vshrl.u32 %v1864, 7
        %v1866 = vsub.s32 %v1863, %v1865
        %v1867 = vrot.slane %v1853, %v1866
        %v1868 = vcombine.high %v1860, %v1860
        %v1869 = vcombine.high %v1867, %v1867
        %v1870 = vcombine.high %v1280, %v1280
        %v1872 = vunpack.c.l.s4 1983009808
        %v1873 = vunpack.c.0.s8 %v1872
        %v1874 = vlaneseq
        %v1875 = vshrl.u32 %v1874, 7
        %v1876 = vsub.s32 %v1873, %v1875
        %v1877 = vrot.slane %v1280, %v1876
        %v1879 = vunpack.c.l.s4 1983009808
        %v1880 = vunpack.c.0.s8 %v1879
        %v1881 = vlaneseq
        %v1882 = vshrl.u32 %v1881, 7
        %v1883 = vsub.s32 %v1880, %v1882
        %v1884 = vrot.slane %v1870, %v1883
        %v1885 = vcombine.high %v1877, %v1877
        %v1886 = vcombine.high %v1884, %v1884
        %v2415 = vunpack.c.l.b16 %v1281
        %v2416 = vunpack.c.h.b16 %v1281
        %v2417 = vunpack.c.l.b16 %v1282
        %v2418 = vunpack.c.h.b16 %v1282
        %v2419 = vunpack.c.l.b16 %v1283
        %v2420 = vunpack.c.h.b16 %v1283
        %v2421 = vunpack.c.l.b16 %v1284
        %v2422 = vunpack.c.h.b16 %v1284
        %v2423 = vunpack.c.l.b16 %v1285
        %v2424 = vunpack.c.h.b16 %v1285
        %v2425 = vunpack.c.l.b16 %v1286
        %v2426 = vunpack.c.h.b16 %v1286
        %v2427 = vunpack.c.l.b16 %v1287
        %v2428 = vunpack.c.h.b16 %v1287
        %v2429 = vunpack.c.l.b16 %v1288
        %v2430 = vunpack.c.h.b16 %v1288
        %v2431 = vunpack.c.l.b16 %v1289
        %v2432 = vunpack.c.h.b16 %v1289
        %v2433 = vunpack.c.l.b16 %v1290
        %v2434 = vunpack.c.h.b16 %v1290
        %v2435 = vunpack.c.l.b16 %v1291
        %v2436 = vunpack.c.h.b16 %v1291
        %v2437 = vunpack.c.l.b16 %v1292
        %v2438 = vunpack.c.h.b16 %v1292
        %v2439 = vunpack.c.l.b16 %v1293
        %v2440 = vunpack.c.h.b16 %v1293
        %v2441 = vunpack.c.l.b16 %v1294
        %v2442 = vunpack.c.h.b16 %v1294
        %v2443 = vunpack.c.l.b16 %v1295
        %v2444 = vunpack.c.h.b16 %v1295
        %v2445 = vunpack.c.l.b16 %v1296
        %v2446 = vunpack.c.h.b16 %v1296
        %v2447 = vunpack.c.l.b16 %v1297
        %v2448 = vunpack.c.h.b16 %v1297
        %v2449 = vunpack.c.l.b16 %v1298
        %v2450 = vunpack.c.h.b16 %v1298
        %v2451 = vunpack.c.l.b16 %v1299
        %v2452 = vunpack.c.h.b16 %v1299
        %v2453 = vunpack.c.l.b16 %v1300
        %v2454 = vunpack.c.h.b16 %v1300
        %v2455 = vunpack.c.l.b16 %v1301
        %v2456 = vunpack.c.h.b16 %v1301
        %v2457 = vunpack.c.l.b16 %v1302
        %v2458 = vunpack.c.h.b16 %v1302
        %v2459 = vunpack.c.l.b16 %v1303
        %v2460 = vunpack.c.h.b16 %v1303
        %v2461 = vunpack.c.l.b16 %v1304
        %v2462 = vunpack.c.h.b16 %v1304
        %v2463 = vunpack.c.l.b16 %v1305
        %v2464 = vunpack.c.h.b16 %v1305
        %v2465 = vunpack.c.l.b16 %v1306
        %v2466 = vunpack.c.h.b16 %v1306
        %v2467 = vunpack.c.l.b16 %v1307
        %v2468 = vunpack.c.h.b16 %v1307
        %v2469 = vunpack.c.l.b16 %v1308
        %v2470 = vunpack.c.h.b16 %v1308
        %v2471 = vunpack.c.l.b16 %v1309
        %v2472 = vunpack.c.h.b16 %v1309
        %v2473 = vunpack.c.l.b16 %v1310
        %v2474 = vunpack.c.h.b16 %v1310
        %v2475 = vunpack.c.l.b16 %v1311
        %v2476 = vunpack.c.h.b16 %v1311
        %v2477 = vunpack.c.l.b16 %v1312
        %v2478 = vunpack.c.h.b16 %v1312
        %v2479 = vunpack.c.l.b16 %v1313
        %v2480 = vunpack.c.h.b16 %v1313
        %v2481 = vunpack.c.l.b16 %v1314
        %v2482 = vunpack.c.h.b16 %v1314
        %v2483 = vunpack.c.l.b16 %v1315
        %v2484 = vunpack.c.h.b16 %v1315
        %v2485 = vunpack.c.l.b16 %v1316
        %v2486 = vunpack.c.h.b16 %v1316
        %v2487 = vunpack.c.l.b16 %v1317
        %v2488 = vunpack.c.h.b16 %v1317
        %v2489 = vunpack.c.l.b16 %v1318
        %v2490 = vunpack.c.h.b16 %v1318
        %v2491 = vunpack.c.l.b16 %v1319
        %v2492 = vunpack.c.h.b16 %v1319
        %v2493 = vunpack.c.l.b16 %v1320
        %v2494 = vunpack.c.h.b16 %v1320
        %v2495 = vunpack.c.l.b16 %v1321
        %v2496 = vunpack.c.h.b16 %v1321
        %v2497 = vunpack.c.l.b16 %v1322
        %v2498 = vunpack.c.h.b16 %v1322
        %v2499 = vunpack.c.l.b16 %v1323
        %v2500 = vunpack.c.h.b16 %v1323
        %v2501 = vunpack.c.l.b16 %v1324
        %v2502 = vunpack.c.h.b16 %v1324
        %v2503 = vunpack.c.l.b16 %v1325
        %v2504 = vunpack.c.h.b16 %v1325
        %v2505 = vunpack.c.l.b16 %v1326
        %v2506 = vunpack.c.h.b16 %v1326
        %v2507 = vunpack.c.l.b16 %v1327
        %v2508 = vunpack.c.h.b16 %v1327
        %v2509 = vunpack.c.l.b16 %v1328
        %v2510 = vunpack.c.h.b16 %v1328
        %v2511 = vunpack.c.l.b16 %v1329
        %v2512 = vunpack.c.h.b16 %v1329
        %v2513 = vunpack.c.l.b16 %v1330
        %v2514 = vunpack.c.h.b16 %v1330
        %v2515 = vunpack.c.l.b16 %v1331
        %v2516 = vunpack.c.h.b16 %v1331
        %v2517 = vunpack.c.l.b16 %v1332
        %v2518 = vunpack.c.h.b16 %v1332
        %v2519 = vunpack.c.l.b16 %v1333
        %v2520 = vunpack.c.h.b16 %v1333
        %v2521 = vunpack.c.l.b16 %v1334
        %v2522 = vunpack.c.h.b16 %v1334
        %v2523 = vunpack.c.l.b16 %v1335
        %v2524 = vunpack.c.h.b16 %v1335
        %v2525 = vunpack.c.l.b16 %v1336
        %v2526 = vunpack.c.h.b16 %v1336
        %v2527 = vunpack.c.l.b16 %v1337
        %v2528 = vunpack.c.h.b16 %v1337
        %v2529 = vunpack.c.l.b16 %v1338
        %v2530 = vunpack.c.h.b16 %v1338
        %v2531 = vunpack.c.l.b16 %v1339
        %v2532 = vunpack.c.h.b16 %v1339
        %v2533 = vunpack.c.l.b16 %v1340
        %v2534 = vunpack.c.h.b16 %v1340
        %v2535 = vunpack.c.l.b16 %v1341
        %v2536 = vunpack.c.h.b16 %v1341
        %v2537 = vunpack.c.l.b16 %v1342
        %v2538 = vunpack.c.h.b16 %v1342
        %v2539 = vunpack.c.l.b16 %v1343
        %v2540 = vunpack.c.h.b16 %v1343
        %v2541 = vunpack.c.l.b16 %v1344
        %v2542 = vunpack.c.h.b16 %v1344
        %v2543 = vunpack.c.l.b16 %v1345
        %v2544 = vunpack.c.h.b16 %v1345
        %v2545 = vunpack.c.l.b16 %v1346
        %v2546 = vunpack.c.h.b16 %v1346
        %v2547 = vunpack.c.l.b16 %v1347
        %v2548 = vunpack.c.h.b16 %v1347
        %v2549 = vunpack.c.l.b16 %v1348
        %v2550 = vunpack.c.h.b16 %v1348
        %v2551 = vunpack.c.l.b16 %v1349
        %v2552 = vunpack.c.h.b16 %v1349
        %v2553 = vunpack.c.l.b16 %v1350
        %v2554 = vunpack.c.h.b16 %v1350
        %v2555 = vunpack.c.l.b16 %v1351
        %v2556 = vunpack.c.h.b16 %v1351
        %v2557 = vunpack.c.l.b16 %v1352
        %v2558 = vunpack.c.h.b16 %v1352
        %v2559 = vunpack.c.l.b16 %v1353
        %v2560 = vunpack.c.h.b16 %v1353
        %v2561 = vunpack.c.l.b16 %v1354
        %v2562 = vunpack.c.h.b16 %v1354
        %v2563 = vunpack.c.l.b16 %v1355
        %v2564 = vunpack.c.h.b16 %v1355
        %v2565 = vunpack.c.l.b16 %v1356
        %v2566 = vunpack.c.h.b16 %v1356
        %v2567 = vunpack.c.l.b16 %v1357
        %v2568 = vunpack.c.h.b16 %v1357
        %v2569 = vunpack.c.l.b16 %v1358
        %v2570 = vunpack.c.h.b16 %v1358
        %v2571 = vunpack.c.l.b16 %v1359
        %v2572 = vunpack.c.h.b16 %v1359
        %v2573 = vunpack.c.l.b16 %v1360
        %v2574 = vunpack.c.h.b16 %v1360
        %v2575 = vunpack.c.l.b16 %v1361
        %v2576 = vunpack.c.h.b16 %v1361
        %v2577 = vunpack.c.l.b16 %v1362
        %v2578 = vunpack.c.h.b16 %v1362
        %v2579 = vunpack.c.l.b16 %v1363
        %v2580 = vunpack.c.h.b16 %v1363
        %v2581 = vunpack.c.l.b16 %v1364
        %v2582 = vunpack.c.h.b16 %v1364
        %v2583 = vunpack.c.l.b16 %v1365
        %v2584 = vunpack.c.h.b16 %v1365
        %v2585 = vunpack.c.l.b16 %v1366
        %v2586 = vunpack.c.h.b16 %v1366
        %v2587 = vunpack.c.l.b16 %v1367
        %v2588 = vunpack.c.h.b16 %v1367
        %v2589 = vunpack.c.l.b16 %v1368
        %v2590 = vunpack.c.h.b16 %v1368
        %v2591 = vunpack.c.l.b16 %v1369
        %v2592 = vunpack.c.h.b16 %v1369
        %v2593 = vunpack.c.l.b16 %v1370
        %v2594 = vunpack.c.h.b16 %v1370
        %v2595 = vunpack.c.l.b16 %v1371
        %v2596 = vunpack.c.h.b16 %v1371
        %v2597 = vunpack.c.l.b16 %v1372
        %v2598 = vunpack.c.h.b16 %v1372
        %v2599 = vunpack.c.l.b16 %v1373
        %v2600 = vunpack.c.h.b16 %v1373
        %v2601 = vunpack.c.l.b16 %v1374
        %v2602 = vunpack.c.h.b16 %v1374
        %v2603 = vunpack.c.l.b16 %v1375
        %v2604 = vunpack.c.h.b16 %v1375
        %v2605 = vunpack.c.l.b16 %v1376
        %v2606 = vunpack.c.h.b16 %v1376
        %v2607 = vunpack.c.l.b16 %v1377
        %v2608 = vunpack.c.h.b16 %v1377
        %v2609 = vunpack.c.l.b16 %v1378
        %v2610 = vunpack.c.h.b16 %v1378
        %v2611 = vunpack.c.l.b16 %v1379
        %v2612 = vunpack.c.h.b16 %v1379
        %v2613 = vunpack.c.l.b16 %v1380
        %v2614 = vunpack.c.h.b16 %v1380
        %v2615 = vunpack.c.l.b16 %v1381
        %v2616 = vunpack.c.h.b16 %v1381
        %v2617 = vunpack.c.l.b16 %v1382
        %v2618 = vunpack.c.h.b16 %v1382
        %v2619 = vunpack.c.l.b16 %v1383
        %v2620 = vunpack.c.h.b16 %v1383
        %v2621 = vunpack.c.l.b16 %v1384
        %v2622 = vunpack.c.h.b16 %v1384
        %v2623 = vunpack.c.l.b16 %v1385
        %v2624 = vunpack.c.h.b16 %v1385
        %v2625 = vunpack.c.l.b16 %v1386
        %v2626 = vunpack.c.h.b16 %v1386
        %v2627 = vunpack.c.l.b16 %v1387
        %v2628 = vunpack.c.h.b16 %v1387
        %v2629 = vunpack.c.l.b16 %v1388
        %v2630 = vunpack.c.h.b16 %v1388
        %v2631 = vunpack.c.l.b16 %v1389
        %v2632 = vunpack.c.h.b16 %v1389
        %v2633 = vunpack.c.l.b16 %v1390
        %v2634 = vunpack.c.h.b16 %v1390
        %v2635 = vunpack.c.l.b16 %v1391
        %v2636 = vunpack.c.h.b16 %v1391
        %v2637 = vunpack.c.l.b16 %v1392
        %v2638 = vunpack.c.h.b16 %v1392
        %v2639 = vunpack.c.l.b16 %v1393
        %v2640 = vunpack.c.h.b16 %v1393
        %v2641 = vunpack.c.l.b16 %v1394
        %v2642 = vunpack.c.h.b16 %v1394
        %v2643 = vunpack.c.l.b16 %v1395
        %v2644 = vunpack.c.h.b16 %v1395
        %v2645 = vunpack.c.l.b16 %v1396
        %v2646 = vunpack.c.h.b16 %v1396
        %v2647 = vunpack.c.l.b16 %v1397
        %v2648 = vunpack.c.h.b16 %v1397
        %v2649 = vunpack.c.l.b16 %v1398
        %v2650 = vunpack.c.h.b16 %v1398
        %v2651 = vunpack.c.l.b16 %v1399
        %v2652 = vunpack.c.h.b16 %v1399
        %v2653 = vunpack.c.l.b16 %v1400
        %v2654 = vunpack.c.h.b16 %v1400
        %v2655 = vunpack.c.l.b16 %v1401
        %v2656 = vunpack.c.h.b16 %v1401
        %v2657 = vunpack.c.l.b16 %v1402
        %v2658 = vunpack.c.h.b16 %v1402
        %v2659 = vunpack.c.l.b16 %v1403
        %v2660 = vunpack.c.h.b16 %v1403
        %v2661 = vunpack.c.l.b16 %v1404
        %v2662 = vunpack.c.h.b16 %v1404
        %v2663 = vunpack.c.l.b16 %v1405
        %v2664 = vunpack.c.h.b16 %v1405
        %v2665 = vunpack.c.l.b16 %v1406
        %v2666 = vunpack.c.h.b16 %v1406
        %v2667 = vunpack.c.l.b16 %v1407
        %v2668 = vunpack.c.h.b16 %v1407
        %v2669 = vunpack.c.l.b16 %v1408
        %v2670 = vunpack.c.h.b16 %v1408
        %v2671 = vunpack.c.l.b16 %v1409
        %v2672 = vunpack.c.h.b16 %v1409
        %v2673 = vunpack.c.l.b16 %v1410
        %v2674 = vunpack.c.h.b16 %v1410
        %v2675 = vunpack.c.l.b16 %v1411
        %v2676 = vunpack.c.h.b16 %v1411
        %v2677 = vunpack.c.l.b16 %v1412
        %v2678 = vunpack.c.h.b16 %v1412
        %v2679 = vunpack.c.l.b16 %v1413
        %v2680 = vunpack.c.h.b16 %v1413
        %v2681 = vunpack.c.l.b16 %v1414
        %v2682 = vunpack.c.h.b16 %v1414
        %v2683 = vunpack.c.l.b16 %v1415
        %v2684 = vunpack.c.h.b16 %v1415
        %v2685 = vunpack.c.l.b16 %v1416
        %v2686 = vunpack.c.h.b16 %v1416
        %v2687 = vunpack.c.l.b16 %v1417
        %v2688 = vunpack.c.h.b16 %v1417
        %v2689 = vunpack.c.l.b16 %v1418
        %v2690 = vunpack.c.h.b16 %v1418
        %v2691 = vunpack.c.l.b16 %v1419
        %v2692 = vunpack.c.h.b16 %v1419
        %v2693 = vunpack.c.l.b16 %v1420
        %v2694 = vunpack.c.h.b16 %v1420
        %v2695 = vunpack.c.l.b16 %v1421
        %v2696 = vunpack.c.h.b16 %v1421
        %v2697 = vunpack.c.l.b16 %v1422
        %v2698 = vunpack.c.h.b16 %v1422
        %v2699 = vunpack.c.l.b16 %v1423
        %v2700 = vunpack.c.h.b16 %v1423
        %v2701 = vunpack.c.l.b16 %v1424
        %v2702 = vunpack.c.h.b16 %v1424
        %v2703 = vunpack.c.l.b16 %v1425
        %v2704 = vunpack.c.h.b16 %v1425
        %v2705 = vunpack.c.l.b16 %v1426
        %v2706 = vunpack.c.h.b16 %v1426
        %v2707 = vunpack.c.l.b16 %v1427
        %v2708 = vunpack.c.h.b16 %v1427
        %v2709 = vunpack.c.l.b16 %v1428
        %v2710 = vunpack.c.h.b16 %v1428
        %v2711 = vunpack.c.l.b16 %v1429
        %v2712 = vunpack.c.h.b16 %v1429
        %v2713 = vunpack.c.l.b16 %v1430
        %v2714 = vunpack.c.h.b16 %v1430
        %v2715 = vunpack.c.l.b16 %v1431
        %v2716 = vunpack.c.h.b16 %v1431
        %v2717 = vunpack.c.l.b16 %v1432
        %v2718 = vunpack.c.h.b16 %v1432
        %v2719 = vunpack.c.l.b16 %v1433
        %v2720 = vunpack.c.h.b16 %v1433
        %v2721 = vunpack.c.l.b16 %v1434
        %v2722 = vunpack.c.h.b16 %v1434
        %v2723 = vunpack.c.l.b16 %v1435
        %v2724 = vunpack.c.h.b16 %v1435
        %v2725 = vunpack.c.l.b16 %v1436
        %v2726 = vunpack.c.h.b16 %v1436
        %v2727 = vunpack.c.l.b16 %v1437
        %v2728 = vunpack.c.h.b16 %v1437
        %v2729 = vunpack.c.l.b16 %v1438
        %v2730 = vunpack.c.h.b16 %v1438
        %v2731 = vunpack.c.l.b16 %v1439
        %v2732 = vunpack.c.h.b16 %v1439
        %v2733 = vunpack.c.l.b16 %v1440
        %v2734 = vunpack.c.h.b16 %v1440
        %v2735 = vunpack.c.l.b16 %v1441
        %v2736 = vunpack.c.h.b16 %v1441
        %v2737 = vunpack.c.l.b16 %v1442
        %v2738 = vunpack.c.h.b16 %v1442
        %v2739 = vunpack.c.l.b16 %v1443
        %v2740 = vunpack.c.h.b16 %v1443
        %v2741 = vunpack.c.l.b16 %v1444
        %v2742 = vunpack.c.h.b16 %v1444
        %v2743 = vunpack.c.l.b16 %v1445
        %v2744 = vunpack.c.h.b16 %v1445
        %v2745 = vunpack.c.l.b16 %v1446
        %v2746 = vunpack.c.h.b16 %v1446
        %v2747 = vunpack.c.l.b16 %v1447
        %v2748 = vunpack.c.h.b16 %v1447
        %v2749 = vunpack.c.l.b16 %v1448
        %v2750 = vunpack.c.h.b16 %v1448
        %v2751 = vunpack.c.l.b16 %v1449
        %v2752 = vunpack.c.h.b16 %v1449
        %v2753 = vunpack.c.l.b16 %v1450
        %v2754 = vunpack.c.h.b16 %v1450
        %v2755 = vunpack.c.l.b16 %v1451
        %v2756 = vunpack.c.h.b16 %v1451
        %v2757 = vunpack.c.l.b16 %v1452
        %v2758 = vunpack.c.h.b16 %v1452
        %v2759 = vunpack.c.l.b16 %v1453
        %v2760 = vunpack.c.h.b16 %v1453
        %v2761 = vunpack.c.l.b16 %v1454
        %v2762 = vunpack.c.h.b16 %v1454
        %v2763 = vunpack.c.l.b16 %v1455
        %v2764 = vunpack.c.h.b16 %v1455
        %v2765 = vunpack.c.l.b16 %v1456
        %v2766 = vunpack.c.h.b16 %v1456
        %v2767 = vunpack.c.l.b16 %v1457
        %v2768 = vunpack.c.h.b16 %v1457
        %v2769 = vunpack.c.l.b16 %v1458
        %v2770 = vunpack.c.h.b16 %v1458
        %v2771 = vunpack.c.l.b16 %v1459
        %v2772 = vunpack.c.h.b16 %v1459
        %v2773 = vunpack.c.l.b16 %v1460
        %v2774 = vunpack.c.h.b16 %v1460
        %v2775 = vunpack.c.l.b16 %v1461
        %v2776 = vunpack.c.h.b16 %v1461
        %v2777 = vunpack.c.l.b16 %v1462
        %v2778 = vunpack.c.h.b16 %v1462
        %v2779 = vunpack.c.l.b16 %v1463
        %v2780 = vunpack.c.h.b16 %v1463
        %v2781 = vunpack.c.l.b16 %v1464
        %v2782 = vunpack.c.h.b16 %v1464
        %v2783 = vunpack.c.l.b16 %v1465
        %v2784 = vunpack.c.h.b16 %v1465
        %v2785 = vunpack.c.l.b16 %v1466
        %v2786 = vunpack.c.h.b16 %v1466
        %v2787 = vunpack.c.l.b16 %v1467
        %v2788 = vunpack.c.h.b16 %v1467
        %v2789 = vunpack.c.l.b16 %v1468
        %v2790 = vunpack.c.h.b16 %v1468
        %v2791 = vunpack.c.l.b16 %v1469
        %v2792 = vunpack.c.h.b16 %v1469
        %v2793 = vunpack.c.l.b16 %v1470
        %v2794 = vunpack.c.h.b16 %v1470
        %v2795 = vunpack.c.l.b16 %v1471
        %v2796 = vunpack.c.h.b16 %v1471
        %v2797 = vunpack.c.l.b16 %v1472
        %v2798 = vunpack.c.h.b16 %v1472
        %v2799 = vunpack.c.l.b16 %v1473
        %v2800 = vunpack.c.h.b16 %v1473
        %v2801 = vunpack.c.l.b16 %v1474
        %v2802 = vunpack.c.h.b16 %v1474
        %v2803 = vunpack.c.l.b16 %v1475
        %v2804 = vunpack.c.h.b16 %v1475
        %v2805 = vunpack.c.l.b16 %v1476
        %v2806 = vunpack.c.h.b16 %v1476
        %v2807 = vunpack.c.l.b16 %v1477
        %v2808 = vunpack.c.h.b16 %v1477
        %v2809 = vunpack.c.l.b16 %v1478
        %v2810 = vunpack.c.h.b16 %v1478
        %v2811 = vunpack.c.l.b16 %v1479
        %v2812 = vunpack.c.h.b16 %v1479
        %v2813 = vunpack.c.l.b16 %v1480
        %v2814 = vunpack.c.h.b16 %v1480
        %v2815 = vunpack.c.l.b16 %v1481
        %v2816 = vunpack.c.h.b16 %v1481
        %v2817 = vunpack.c.l.b16 %v1482
        %v2818 = vunpack.c.h.b16 %v1482
        %v2819 = vunpack.c.l.b16 %v1483
        %v2820 = vunpack.c.h.b16 %v1483
        %v2821 = vunpack.c.l.b16 %v1484
        %v2822 = vunpack.c.h.b16 %v1484
        %v2823 = vunpack.c.l.b16 %v1485
        %v2824 = vunpack.c.h.b16 %v1485
        %v2825 = vunpack.c.l.b16 %v1486
        %v2826 = vunpack.c.h.b16 %v1486
        %v2827 = vunpack.c.l.b16 %v1487
        %v2828 = vunpack.c.h.b16 %v1487
        %v2829 = vunpack.c.l.b16 %v1488
        %v2830 = vunpack.c.h.b16 %v1488
        %v2831 = vunpack.c.l.b16 %v1489
        %v2832 = vunpack.c.h.b16 %v1489
        %v2833 = vunpack.c.l.b16 %v1490
        %v2834 = vunpack.c.h.b16 %v1490
        %v2835 = vunpack.c.l.b16 %v1491
        %v2836 = vunpack.c.h.b16 %v1491
        %v2837 = vunpack.c.l.b16 %v1492
        %v2838 = vunpack.c.h.b16 %v1492
        %v2839 = vunpack.c.l.b16 %v1493
        %v2840 = vunpack.c.h.b16 %v1493
        %v2841 = vunpack.c.l.b16 %v1494
        %v2842 = vunpack.c.h.b16 %v1494
        %v2843 = vunpack.c.l.b16 %v1495
        %v2844 = vunpack.c.h.b16 %v1495
        %v2845 = vunpack.c.l.b16 %v1496
        %v2846 = vunpack.c.h.b16 %v1496
        %v2847 = vunpack.c.l.b16 %v1497
        %v2848 = vunpack.c.h.b16 %v1497
        %v2849 = vunpack.c.l.b16 %v1498
        %v2850 = vunpack.c.h.b16 %v1498
        %v2851 = vunpack.c.l.b16 %v1499
        %v2852 = vunpack.c.h.b16 %v1499
        %v2853 = vunpack.c.l.b16 %v1500
        %v2854 = vunpack.c.h.b16 %v1500
        %v2855 = vunpack.c.l.b16 %v1501
        %v2856 = vunpack.c.h.b16 %v1501
        %v2857 = vunpack.c.l.b16 %v1502
        %v2858 = vunpack.c.h.b16 %v1502
        %v2859 = vunpack.c.l.b16 %v1503
        %v2860 = vunpack.c.h.b16 %v1503
        %v2861 = vunpack.c.l.b16 %v1504
        %v2862 = vunpack.c.h.b16 %v1504
        %v2863 = vunpack.c.l.b16 %v1505
        %v2864 = vunpack.c.h.b16 %v1505
        %v2865 = vunpack.c.l.b16 %v1506
        %v2866 = vunpack.c.h.b16 %v1506
        %v2867 = vunpack.c.l.b16 %v1507
        %v2868 = vunpack.c.h.b16 %v1507
        %v2869 = vunpack.c.l.b16 %v1508
        %v2870 = vunpack.c.h.b16 %v1508
        %v2871 = vunpack.c.l.b16 %v1509
        %v2872 = vunpack.c.h.b16 %v1509
        %v2873 = vunpack.c.l.b16 %v1510
        %v2874 = vunpack.c.h.b16 %v1510
        %v2875 = vunpack.c.l.b16 %v1511
        %v2876 = vunpack.c.h.b16 %v1511
        %v2877 = vunpack.c.l.b16 %v1512
        %v2878 = vunpack.c.h.b16 %v1512
        %v2879 = vunpack.c.l.b16 %v1513
        %v2880 = vunpack.c.h.b16 %v1513
        %v2881 = vunpack.c.l.b16 %v1514
        %v2882 = vunpack.c.h.b16 %v1514
        %v2883 = vunpack.c.l.b16 %v1515
        %v2884 = vunpack.c.h.b16 %v1515
        %v2885 = vunpack.c.l.b16 %v1516
        %v2886 = vunpack.c.h.b16 %v1516
        %v2887 = vunpack.c.l.b16 %v1517
        %v2888 = vunpack.c.h.b16 %v1517
        %v2889 = vunpack.c.l.b16 %v1518
        %v2890 = vunpack.c.h.b16 %v1518
        %v2891 = vunpack.c.l.b16 %v1519
        %v2892 = vunpack.c.h.b16 %v1519
        %v2893 = vunpack.c.l.b16 %v1520
        %v2894 = vunpack.c.h.b16 %v1520
        %v2895 = vunpack.c.l.b16 %v1521
        %v2896 = vunpack.c.h.b16 %v1521
        %v2897 = vunpack.c.l.b16 %v1522
        %v2898 = vunpack.c.h.b16 %v1522
        %v2899 = vunpack.c.l.b16 %v1523
        %v2900 = vunpack.c.h.b16 %v1523
        %v2901 = vunpack.c.l.b16 %v1524
        %v2902 = vunpack.c.h.b16 %v1524
        %v2903 = vunpack.c.l.b16 %v1525
        %v2904 = vunpack.c.h.b16 %v1525
        %v2905 = vunpack.c.l.b16 %v1526
        %v2906 = vunpack.c.h.b16 %v1526
        %v2907 = vunpack.c.l.b16 %v1527
        %v2908 = vunpack.c.h.b16 %v1527
        %v2909 = vunpack.c.l.b16 %v1528
        %v2910 = vunpack.c.h.b16 %v1528
        %v2911 = vunpack.c.l.b16 %v1529
        %v2912 = vunpack.c.h.b16 %v1529
        %v2913 = vunpack.c.l.b16 %v1530
        %v2914 = vunpack.c.h.b16 %v1530
        %v2915 = vunpack.c.l.b16 %v1531
        %v2916 = vunpack.c.h.b16 %v1531
        %v2917 = vunpack.c.l.b16 %v1532
        %v2918 = vunpack.c.h.b16 %v1532
        %v2919 = vunpack.c.l.b16 %v1533
        %v2920 = vunpack.c.h.b16 %v1533
        %v2921 = vunpack.c.l.b16 %v1534
        %v2922 = vunpack.c.h.b16 %v1534
        %v2923 = vunpack.c.l.b16 %v1535
        %v2924 = vunpack.c.h.b16 %v1535
        %v2925 = vunpack.c.l.b16 %v1536
        %v2926 = vunpack.c.h.b16 %v1536
        %v2927 = vunpack.c.l.b16 %v1537
        %v2928 = vunpack.c.h.b16 %v1537
        %v2929 = vunpack.c.l.b16 %v1538
        %v2930 = vunpack.c.h.b16 %v1538
        %v2931 = vunpack.c.l.b16 %v1539
        %v2932 = vunpack.c.h.b16 %v1539
        %v2933 = vunpack.c.l.b16 %v1540
        %v2934 = vunpack.c.h.b16 %v1540
        %v2935 = vunpack.c.l.b16 %v1541
        %v2936 = vunpack.c.h.b16 %v1541
        %v2937 = vunpack.c.l.b16 %v1542
        %v2938 = vunpack.c.h.b16 %v1542
        %v2939 = vunpack.c.l.b16 %v1543
        %v2940 = vunpack.c.h.b16 %v1543
        %v2941 = vunpack.c.l.b16 %v1544
        %v2942 = vunpack.c.h.b16 %v1544
        %v2943 = vunpack.c.l.b16 %v1545
        %v2944 = vunpack.c.h.b16 %v1545
        %v2945 = vunpack.c.l.b16 %v1546
        %v2946 = vunpack.c.h.b16 %v1546
        %v2947 = vunpack.c.l.b16 %v1547
        %v2948 = vunpack.c.h.b16 %v1547
        %v2949 = vunpack.c.l.b16 %v1548
        %v2950 = vunpack.c.h.b16 %v1548
        %v2951 = vunpack.c.l.b16 %v1549
        %v2952 = vunpack.c.h.b16 %v1549
        %v2953 = vunpack.c.l.b16 %v1550
        %v2954 = vunpack.c.h.b16 %v1550
        %v2955 = vunpack.c.l.b16 %v1551
        %v2956 = vunpack.c.h.b16 %v1551
        %v2957 = vunpack.c.l.b16 %v1552
        %v2958 = vunpack.c.h.b16 %v1552
        %v2959 = vunpack.c.l.b16 %v1553
        %v2960 = vunpack.c.h.b16 %v1553
        %v2961 = vunpack.c.l.b16 %v1554
        %v2962 = vunpack.c.h.b16 %v1554
        %v2963 = vunpack.c.l.b16 %v1555
        %v2964 = vunpack.c.h.b16 %v1555
        %v2965 = vunpack.c.l.b16 %v1556
        %v2966 = vunpack.c.h.b16 %v1556
        %v2967 = vunpack.c.l.b16 %v1557
        %v2968 = vunpack.c.h.b16 %v1557
        %v2969 = vunpack.c.l.b16 %v1558
        %v2970 = vunpack.c.h.b16 %v1558
        %v2971 = vunpack.c.l.b16 %v1559
        %v2972 = vunpack.c.h.b16 %v1559
        %v2973 = vunpack.c.l.b16 %v1560
        %v2974 = vunpack.c.h.b16 %v1560
        %v2975 = vunpack.c.l.b16 %v1561
        %v2976 = vunpack.c.h.b16 %v1561
        %v2977 = vunpack.c.l.b16 %v1562
        %v2978 = vunpack.c.h.b16 %v1562
        %v2979 = vunpack.c.l.b16 %v1563
        %v2980 = vunpack.c.h.b16 %v1563
        %v2981 = vunpack.c.l.b16 %v1564
        %v2982 = vunpack.c.h.b16 %v1564
        %v2983 = vunpack.c.l.b16 %v1565
        %v2984 = vunpack.c.h.b16 %v1565
        %v2985 = vunpack.c.l.b16 %v1566
        %v2986 = vunpack.c.h.b16 %v1566
        %v2987 = vunpack.c.l.b16 %v1567
        %v2988 = vunpack.c.h.b16 %v1567
        %v2989 = vunpack.c.l.b16 %v1568
        %v2990 = vunpack.c.h.b16 %v1568
        %v2991 = vunpack.c.l.b16 %v1569
        %v2992 = vunpack.c.h.b16 %v1569
        %v2993 = vunpack.c.l.b16 %v1570
        %v2994 = vunpack.c.h.b16 %v1570
        %v2995 = vunpack.c.l.b16 %v1571
        %v2996 = vunpack.c.h.b16 %v1571
        %v2997 = vunpack.c.l.b16 %v1572
        %v2998 = vunpack.c.h.b16 %v1572
        %v2999 = vunpack.c.l.b16 %v1573
        %v3000 = vunpack.c.h.b16 %v1573
        %v3001 = vunpack.c.l.b16 %v1574
        %v3002 = vunpack.c.h.b16 %v1574
        %v3003 = vunpack.c.l.b16 %v1575
        %v3004 = vunpack.c.h.b16 %v1575
        %v3005 = vunpack.c.l.b16 %v1576
        %v3006 = vunpack.c.h.b16 %v1576
        %v3007 = vunpack.c.l.b16 %v1577
        %v3008 = vunpack.c.h.b16 %v1577
        %v3009 = vunpack.c.l.b16 %v1578
        %v3010 = vunpack.c.h.b16 %v1578
        %v3011 = vunpack.c.l.b16 %v1579
        %v3012 = vunpack.c.h.b16 %v1579
        %v3013 = vunpack.c.l.b16 %v1580
        %v3014 = vunpack.c.h.b16 %v1580
        %v3015 = vunpack.c.l.b16 %v1581
        %v3016 = vunpack.c.h.b16 %v1581
        %v3017 = vunpack.c.l.b16 %v1582
        %v3018 = vunpack.c.h.b16 %v1582
        %v3019 = vunpack.c.l.b16 %v1583
        %v3020 = vunpack.c.h.b16 %v1583
        %v3021 = vunpack.c.l.b16 %v1584
        %v3022 = vunpack.c.h.b16 %v1584
        %v3023 = vunpack.c.l.b16 %v1585
        %v3024 = vunpack.c.h.b16 %v1585
        %v3025 = vunpack.c.l.b16 %v1586
        %v3026 = vunpack.c.h.b16 %v1586
        %v3027 = vunpack.c.l.b16 %v1587
        %v3028 = vunpack.c.h.b16 %v1587
        %v3029 = vunpack.c.l.b16 %v1588
        %v3030 = vunpack.c.h.b16 %v1588
        %v3031 = vunpack.c.l.b16 %v1589
        %v3032 = vunpack.c.h.b16 %v1589
        %v3033 = vunpack.c.l.b16 %v1590
        %v3034 = vunpack.c.h.b16 %v1590
        %v3035 = vunpack.c.l.b16 %v1591
        %v3036 = vunpack.c.h.b16 %v1591
        %v3037 = vunpack.c.l.b16 %v1592
        %v3038 = vunpack.c.h.b16 %v1592
        %v3039 = vunpack.c.l.b16 %v1593
        %v3040 = vunpack.c.h.b16 %v1593
        %v3041 = vunpack.c.l.b16 %v1594
        %v3042 = vunpack.c.h.b16 %v1594
        %v3043 = vunpack.c.l.b16 %v1595
        %v3044 = vunpack.c.h.b16 %v1595
        %v3045 = vunpack.c.l.b16 %v1596
        %v3046 = vunpack.c.h.b16 %v1596
        %v3047 = vunpack.c.l.b16 %v1597
        %v3048 = vunpack.c.h.b16 %v1597
        %v3049 = vunpack.c.l.b16 %v1598
        %v3050 = vunpack.c.h.b16 %v1598
        %v3051 = vunpack.c.l.b16 %v1599
        %v3052 = vunpack.c.h.b16 %v1599
        %v3053 = vunpack.c.l.b16 %v1600
        %v3054 = vunpack.c.h.b16 %v1600
        %v3055 = vunpack.c.l.b16 %v1601
        %v3056 = vunpack.c.h.b16 %v1601
        %v3057 = vunpack.c.l.b16 %v1602
        %v3058 = vunpack.c.h.b16 %v1602
        %v3059 = vunpack.c.l.b16 %v1603
        %v3060 = vunpack.c.h.b16 %v1603
        %v3061 = vunpack.c.l.b16 %v1604
        %v3062 = vunpack.c.h.b16 %v1604
        %v3063 = vunpack.c.l.b16 %v1605
        %v3064 = vunpack.c.h.b16 %v1605
        %v3065 = vunpack.c.l.b16 %v1606
        %v3066 = vunpack.c.h.b16 %v1606
        %v3067 = vunpack.c.l.b16 %v1607
        %v3068 = vunpack.c.h.b16 %v1607
        %v3069 = vunpack.c.l.b16 %v1608
        %v3070 = vunpack.c.h.b16 %v1608
        %v3071 = vunpack.c.l.b16 %v1609
        %v3072 = vunpack.c.h.b16 %v1609
        %v3073 = vunpack.c.l.b16 %v1610
        %v3074 = vunpack.c.h.b16 %v1610
        %v3075 = vunpack.c.l.b16 %v1611
        %v3076 = vunpack.c.h.b16 %v1611
        %v3077 = vunpack.c.l.b16 %v1612
        %v3078 = vunpack.c.h.b16 %v1612
        %v3079 = vunpack.c.l.b16 %v1613
        %v3080 = vunpack.c.h.b16 %v1613
        %v3081 = vunpack.c.l.b16 %v1614
        %v3082 = vunpack.c.h.b16 %v1614
        %v3083 = vunpack.c.l.b16 %v1615
        %v3084 = vunpack.c.h.b16 %v1615
        %v3085 = vunpack.c.l.b16 %v1616
        %v3086 = vunpack.c.h.b16 %v1616
        %v3087 = vunpack.c.l.b16 %v1617
        %v3088 = vunpack.c.h.b16 %v1617
        %v3089 = vunpack.c.l.b16 %v1618
        %v3090 = vunpack.c.h.b16 %v1618
        %v3091 = vunpack.c.l.b16 %v1619
        %v3092 = vunpack.c.h.b16 %v1619
        %v3093 = vunpack.c.l.b16 %v1620
        %v3094 = vunpack.c.h.b16 %v1620
        %v3095 = vunpack.c.l.b16 %v1621
        %v3096 = vunpack.c.h.b16 %v1621
        %v3097 = vunpack.c.l.b16 %v1622
        %v3098 = vunpack.c.h.b16 %v1622
        %v3099 = vunpack.c.l.b16 %v1623
        %v3100 = vunpack.c.h.b16 %v1623
        %v3101 = vunpack.c.l.b16 %v1624
        %v3102 = vunpack.c.h.b16 %v1624
        %v3103 = vunpack.c.l.b16 %v1625
        %v3104 = vunpack.c.h.b16 %v1625
        %v3105 = vunpack.c.l.b16 %v1626
        %v3106 = vunpack.c.h.b16 %v1626
        %v3107 = vunpack.c.l.b16 %v1627
        %v3108 = vunpack.c.h.b16 %v1627
        %v3109 = vunpack.c.l.b16 %v1628
        %v3110 = vunpack.c.h.b16 %v1628
        %v3111 = vunpack.c.l.b16 %v1629
        %v3112 = vunpack.c.h.b16 %v1629
        %v3113 = vunpack.c.l.b16 %v1630
        %v3114 = vunpack.c.h.b16 %v1630
        %v3115 = vunpack.c.l.b16 %v1631
        %v3116 = vunpack.c.h.b16 %v1631
        %v3117 = vunpack.c.l.b16 %v1632
        %v3118 = vunpack.c.h.b16 %v1632
        %v3119 = vunpack.c.l.b16 %v1633
        %v3120 = vunpack.c.h.b16 %v1633
        %v3121 = vunpack.c.l.b16 %v1634
        %v3122 = vunpack.c.h.b16 %v1634
        %v3123 = vunpack.c.l.b16 %v1635
        %v3124 = vunpack.c.h.b16 %v1635
        %v3125 = vunpack.c.l.b16 %v1636
        %v3126 = vunpack.c.h.b16 %v1636
        %v3127 = vunpack.c.l.b16 %v1637
        %v3128 = vunpack.c.h.b16 %v1637
        %v3129 = vunpack.c.l.b16 %v1638
        %v3130 = vunpack.c.h.b16 %v1638
        %v3131 = vunpack.c.l.b16 %v1639
        %v3132 = vunpack.c.h.b16 %v1639
        %v3133 = vunpack.c.l.b16 %v1640
        %v3134 = vunpack.c.h.b16 %v1640
        %v3135 = vunpack.c.l.b16 %v1641
        %v3136 = vunpack.c.h.b16 %v1641
        %v3137 = vunpack.c.l.b16 %v1642
        %v3138 = vunpack.c.h.b16 %v1642
        %v3139 = vunpack.c.l.b16 %v1643
        %v3140 = vunpack.c.h.b16 %v1643
        %v3141 = vunpack.c.l.b16 %v1644
        %v3142 = vunpack.c.h.b16 %v1644
        %v3143 = vunpack.c.l.b16 %v1645
        %v3144 = vunpack.c.h.b16 %v1645
        %v3145 = vunpack.c.l.b16 %v1646
        %v3146 = vunpack.c.h.b16 %v1646
        %v3147 = vunpack.c.l.b16 %v1647
        %v3148 = vunpack.c.h.b16 %v1647
        %v3149 = vunpack.c.l.b16 %v1648
        %v3150 = vunpack.c.h.b16 %v1648
        %v3151 = vunpack.c.l.b16 %v1649
        %v3152 = vunpack.c.h.b16 %v1649
        %v3153 = vunpack.c.l.b16 %v1650
        %v3154 = vunpack.c.h.b16 %v1650
        %v3155 = vunpack.c.l.b16 %v1651
        %v3156 = vunpack.c.h.b16 %v1651
        %v3157 = vunpack.c.l.b16 %v1652
        %v3158 = vunpack.c.h.b16 %v1652
        %v3159 = vunpack.c.l.b16 %v1653
        %v3160 = vunpack.c.h.b16 %v1653
        %v3161 = vunpack.c.l.b16 %v1654
        %v3162 = vunpack.c.h.b16 %v1654
        %v3163 = vunpack.c.l.b16 %v1655
        %v3164 = vunpack.c.h.b16 %v1655
        %v3165 = vunpack.c.l.b16 %v1656
        %v3166 = vunpack.c.h.b16 %v1656
        %v3167 = vunpack.c.l.b16 %v1657
        %v3168 = vunpack.c.h.b16 %v1657
        %v3169 = vunpack.c.l.b16 %v1658
        %v3170 = vunpack.c.h.b16 %v1658
        %v3171 = vunpack.c.l.b16 %v1659
        %v3172 = vunpack.c.h.b16 %v1659
        %v3173 = vunpack.c.l.b16 %v1660
        %v3174 = vunpack.c.h.b16 %v1660
        %v3175 = vunpack.c.l.b16 %v1661
        %v3176 = vunpack.c.h.b16 %v1661
        %v3177 = vunpack.c.l.b16 %v1662
        %v3178 = vunpack.c.h.b16 %v1662
        %v3179 = vunpack.c.l.b16 %v1663
        %v3180 = vunpack.c.h.b16 %v1663
        %v3181 = vunpack.c.l.b16 %v1664
        %v3182 = vunpack.c.h.b16 %v1664
        %v3183 = vunpack.c.l.b16 %v1665
        %v3184 = vunpack.c.h.b16 %v1665
        %v3185 = vunpack.c.l.b16 %v1666
        %v3186 = vunpack.c.h.b16 %v1666
        %v3187 = vunpack.c.l.b16 %v1667
        %v3188 = vunpack.c.h.b16 %v1667
        %v3189 = vunpack.c.l.b16 %v1668
        %v3190 = vunpack.c.h.b16 %v1668
        %v3191 = vunpack.c.l.b16 %v1669
        %v3192 = vunpack.c.h.b16 %v1669
        %v3193 = vunpack.c.l.b16 %v1670
        %v3194 = vunpack.c.h.b16 %v1670
        %v3195 = vunpack.c.l.b16 %v1671
        %v3196 = vunpack.c.h.b16 %v1671
        %v3197 = vunpack.c.l.b16 %v1672
        %v3198 = vunpack.c.h.b16 %v1672
        %v3199 = vunpack.c.l.b16 %v1673
        %v3200 = vunpack.c.h.b16 %v1673
        %v3201 = vunpack.c.l.b16 %v1674
        %v3202 = vunpack.c.h.b16 %v1674
        %v3203 = vunpack.c.l.b16 %v1675
        %v3204 = vunpack.c.h.b16 %v1675
        %v3205 = vunpack.c.l.b16 %v1676
        %v3206 = vunpack.c.h.b16 %v1676
        %v3207 = vunpack.c.l.b16 %v1677
        %v3208 = vunpack.c.h.b16 %v1677
        %v3209 = vunpack.c.l.b16 %v1678
        %v3210 = vunpack.c.h.b16 %v1678
        %v3211 = vunpack.c.l.b16 %v1679
        %v3212 = vunpack.c.h.b16 %v1679
        %v3213 = vunpack.c.l.b16 %v1680
        %v3214 = vunpack.c.h.b16 %v1680
        %v3215 = vunpack.c.l.b16 %v1681
        %v3216 = vunpack.c.h.b16 %v1681
        %v3217 = vunpack.c.l.b16 %v1682
        %v3218 = vunpack.c.h.b16 %v1682
        %v3219 = vunpack.c.l.b16 %v1683
        %v3220 = vunpack.c.h.b16 %v1683
        %v3221 = vunpack.c.l.b16 %v1684
        %v3222 = vunpack.c.h.b16 %v1684
        %v3223 = vunpack.c.l.b16 %v1685
        %v3224 = vunpack.c.h.b16 %v1685
        %v3225 = vunpack.c.l.b16 %v1686
        %v3226 = vunpack.c.h.b16 %v1686
        %v3227 = vunpack.c.l.b16 %v1687
        %v3228 = vunpack.c.h.b16 %v1687
        %v3229 = vunpack.c.l.b16 %v1688
        %v3230 = vunpack.c.h.b16 %v1688
        %v3231 = vunpack.c.l.b16 %v1689
        %v3232 = vunpack.c.h.b16 %v1689
        %v3233 = vunpack.c.l.b16 %v1690
        %v3234 = vunpack.c.h.b16 %v1690
        %v3235 = vunpack.c.l.b16 %v1691
        %v3236 = vunpack.c.h.b16 %v1691
        %v3237 = vunpack.c.l.b16 %v1692
        %v3238 = vunpack.c.h.b16 %v1692
        %v3239 = vunpack.c.l.b16 %v1693
        %v3240 = vunpack.c.h.b16 %v1693
        %v3241 = vunpack.c.l.b16 %v1694
        %v3242 = vunpack.c.h.b16 %v1694
        %v3243 = vunpack.c.l.b16 %v1695
        %v3244 = vunpack.c.h.b16 %v1695
        %v3245 = vunpack.c.l.b16 %v1696
        %v3246 = vunpack.c.h.b16 %v1696
        %v3247 = vunpack.c.l.b16 %v1697
        %v3248 = vunpack.c.h.b16 %v1697
        %v3249 = vunpack.c.l.b16 %v1698
        %v3250 = vunpack.c.h.b16 %v1698
        %v3251 = vunpack.c.l.b16 %v1699
        %v3252 = vunpack.c.h.b16 %v1699
        %v3253 = vunpack.c.l.b16 %v1700
        %v3254 = vunpack.c.h.b16 %v1700
        %v3255 = vunpack.c.l.b16 %v1701
        %v3256 = vunpack.c.h.b16 %v1701
        %v3257 = vunpack.c.l.b16 %v1702
        %v3258 = vunpack.c.h.b16 %v1702
        %v3259 = vunpack.c.l.b16 %v1703
        %v3260 = vunpack.c.h.b16 %v1703
        %v3261 = vunpack.c.l.b16 %v1704
        %v3262 = vunpack.c.h.b16 %v1704
        %v3263 = vunpack.c.l.b16 %v1705
        %v3264 = vunpack.c.h.b16 %v1705
        %v3265 = vunpack.c.l.b16 %v1706
        %v3266 = vunpack.c.h.b16 %v1706
        %v3267 = vunpack.c.l.b16 %v1707
        %v3268 = vunpack.c.h.b16 %v1707
        %v3269 = vunpack.c.l.b16 %v1708
        %v3270 = vunpack.c.h.b16 %v1708
        %v3271 = vunpack.c.l.b16 %v1709
        %v3272 = vunpack.c.h.b16 %v1709
        %v3273 = vunpack.c.l.b16 %v1710
        %v3274 = vunpack.c.h.b16 %v1710
        %v3275 = vunpack.c.l.b16 %v1711
        %v3276 = vunpack.c.h.b16 %v1711
        %v3277 = vunpack.c.l.b16 %v1712
        %v3278 = vunpack.c.h.b16 %v1712
        %v3279 = vunpack.c.l.b16 %v1713
        %v3280 = vunpack.c.h.b16 %v1713
        %v3281 = vunpack.c.l.b16 %v1714
        %v3282 = vunpack.c.h.b16 %v1714
        %v3283 = vunpack.c.l.b16 %v1715
        %v3284 = vunpack.c.h.b16 %v1715
        %v3285 = vunpack.c.l.b16 %v1716
        %v3286 = vunpack.c.h.b16 %v1716
        %v3287 = vunpack.c.l.b16 %v1717
        %v3288 = vunpack.c.h.b16 %v1717
        %v3289 = vunpack.c.l.b16 %v1718
        %v3290 = vunpack.c.h.b16 %v1718
        %v3291 = vunpack.c.l.b16 %v1719
        %v3292 = vunpack.c.h.b16 %v1719
        %v3293 = vunpack.c.l.b16 %v1720
        %v3294 = vunpack.c.h.b16 %v1720
        %v3295 = vunpack.c.l.b16 %v1721
        %v3296 = vunpack.c.h.b16 %v1721
        %v3297 = vunpack.c.l.b16 %v1722
        %v3298 = vunpack.c.h.b16 %v1722
        %v3299 = vunpack.c.l.b16 %v1723
        %v3300 = vunpack.c.h.b16 %v1723
        %v3301 = vunpack.c.l.b16 %v1724
        %v3302 = vunpack.c.h.b16 %v1724
        %v3303 = vunpack.c.l.b16 %v1725
        %v3304 = vunpack.c.h.b16 %v1725
        %v3305 = vunpack.c.l.b16 %v1726
        %v3306 = vunpack.c.h.b16 %v1726
        %v3307 = vunpack.c.l.b16 %v1727
        %v3308 = vunpack.c.h.b16 %v1727
        %v3309 = vunpack.c.l.b16 %v1728
        %v3310 = vunpack.c.h.b16 %v1728
        %v3311 = vunpack.c.l.b16 %v1729
        %v3312 = vunpack.c.h.b16 %v1729
        %v3313 = vunpack.c.l.b16 %v1730
        %v3314 = vunpack.c.h.b16 %v1730
        %v3315 = vunpack.c.l.b16 %v1731
        %v3316 = vunpack.c.h.b16 %v1731
        %v3317 = vunpack.c.l.b16 %v1732
        %v3318 = vunpack.c.h.b16 %v1732
        %v3319 = vunpack.c.l.b16 %v1733
        %v3320 = vunpack.c.h.b16 %v1733
        %v3321 = vunpack.c.l.b16 %v1734
        %v3322 = vunpack.c.h.b16 %v1734
        %v3323 = vunpack.c.l.b16 %v1735
        %v3324 = vunpack.c.h.b16 %v1735
        %v3325 = vunpack.c.l.b16 %v1736
        %v3326 = vunpack.c.h.b16 %v1736
        %v3327 = vunpack.c.l.b16 %v1737
        %v3328 = vunpack.c.h.b16 %v1737
        %v3329 = vunpack.c.l.b16 %v1738
        %v3330 = vunpack.c.h.b16 %v1738
        %v3331 = vunpack.c.l.b16 %v1739
        %v3332 = vunpack.c.h.b16 %v1739
        %v3333 = vunpack.c.l.b16 %v1740
        %v3334 = vunpack.c.h.b16 %v1740
        %v3335 = vunpack.c.l.b16 %v1741
        %v3336 = vunpack.c.h.b16 %v1741
        %v3337 = vunpack.c.l.b16 %v1742
        %v3338 = vunpack.c.h.b16 %v1742
        %v3339 = vunpack.c.l.b16 %v1743
        %v3340 = vunpack.c.h.b16 %v1743
        %v3341 = vunpack.c.l.b16 %v1744
        %v3342 = vunpack.c.h.b16 %v1744
        %v3343 = vunpack.c.l.b16 %v1745
        %v3344 = vunpack.c.h.b16 %v1745
        %v3345 = vunpack.c.l.b16 %v1746
        %v3346 = vunpack.c.h.b16 %v1746
        %v3347 = vunpack.c.l.b16 %v1747
        %v3348 = vunpack.c.h.b16 %v1747
        %v3349 = vunpack.c.l.b16 %v1748
        %v3350 = vunpack.c.h.b16 %v1748
        %v3351 = vunpack.c.l.b16 %v1749
        %v3352 = vunpack.c.h.b16 %v1749
        %v3353 = vunpack.c.l.b16 %v1750
        %v3354 = vunpack.c.h.b16 %v1750
        %v3355 = vunpack.c.l.b16 %v1751
        %v3356 = vunpack.c.h.b16 %v1751
        %v3357 = vunpack.c.l.b16 %v1752
        %v3358 = vunpack.c.h.b16 %v1752
        %v3359 = vunpack.c.l.b16 %v1753
        %v3360 = vunpack.c.h.b16 %v1753
        %v3361 = vunpack.c.l.b16 %v1754
        %v3362 = vunpack.c.h.b16 %v1754
        %v3363 = vunpack.c.l.b16 %v1755
        %v3364 = vunpack.c.h.b16 %v1755
        %v3365 = vunpack.c.l.b16 %v1756
        %v3366 = vunpack.c.h.b16 %v1756
        %v3367 = vunpack.c.l.b16 %v1757
        %v3368 = vunpack.c.h.b16 %v1757
        %v3369 = vunpack.c.l.b16 %v1758
        %v3370 = vunpack.c.h.b16 %v1758
        %v3371 = vunpack.c.l.b16 %v1759
        %v3372 = vunpack.c.h.b16 %v1759
        %v3373 = vunpack.c.l.b16 %v1760
        %v3374 = vunpack.c.h.b16 %v1760
        %v3375 = vunpack.c.l.b16 %v1761
        %v3376 = vunpack.c.h.b16 %v1761
        %v3377 = vunpack.c.l.b16 %v1762
        %v3378 = vunpack.c.h.b16 %v1762
        %v3379 = vunpack.c.l.b16 %v1763
        %v3380 = vunpack.c.h.b16 %v1763
        %v3381 = vunpack.c.l.b16 %v1764
        %v3382 = vunpack.c.h.b16 %v1764
        %v3383 = vunpack.c.l.b16 %v1765
        %v3384 = vunpack.c.h.b16 %v1765
        %v3385 = vunpack.c.l.b16 %v1766
        %v3386 = vunpack.c.h.b16 %v1766
        %v3387 = vunpack.c.l.b16 %v1767
        %v3388 = vunpack.c.h.b16 %v1767
        %v3389 = vunpack.c.l.b16 %v1768
        %v3390 = vunpack.c.h.b16 %v1768
        %v3391 = vunpack.c.l.b16 %v1769
        %v3392 = vunpack.c.h.b16 %v1769
        %v3393 = vunpack.c.l.b16 %v1770
        %v3394 = vunpack.c.h.b16 %v1770
        %v3395 = vunpack.c.l.b16 %v1771
        %v3396 = vunpack.c.h.b16 %v1771
        %v3397 = vunpack.c.l.b16 %v1772
        %v3398 = vunpack.c.h.b16 %v1772
        %v3399 = vunpack.c.l.b16 %v1773
        %v3400 = vunpack.c.h.b16 %v1773
        %v3401 = vunpack.c.l.b16 %v1774
        %v3402 = vunpack.c.h.b16 %v1774
        %v3403 = vunpack.c.l.b16 %v1775
        %v3404 = vunpack.c.h.b16 %v1775
        %v3405 = vunpack.c.l.b16 %v1776
        %v3406 = vunpack.c.h.b16 %v1776
        %v3407 = vunpack.c.l.b16 %v1777
        %v3408 = vunpack.c.h.b16 %v1777
        %v3409 = vunpack.c.l.b16 %v1778
        %v3410 = vunpack.c.h.b16 %v1778
        %v3411 = vunpack.c.l.b16 %v1779
        %v3412 = vunpack.c.h.b16 %v1779
        %v3413 = vunpack.c.l.b16 %v1780
        %v3414 = vunpack.c.h.b16 %v1780
        %v3415 = vunpack.c.l.b16 %v1781
        %v3416 = vunpack.c.h.b16 %v1781
        %v3417 = vunpack.c.l.b16 %v1782
        %v3418 = vunpack.c.h.b16 %v1782
        %v3419 = vunpack.c.l.b16 %v1783
        %v3420 = vunpack.c.h.b16 %v1783
        %v3421 = vunpack.c.l.b16 %v1784
        %v3422 = vunpack.c.h.b16 %v1784
        %v3423 = vunpack.c.l.b16 %v1785
        %v3424 = vunpack.c.h.b16 %v1785
        %v3425 = vunpack.c.l.b16 %v1786
        %v3426 = vunpack.c.h.b16 %v1786
        %v3427 = vunpack.c.l.b16 %v1787
        %v3428 = vunpack.c.h.b16 %v1787
        %v3429 = vunpack.c.l.b16 %v1788
        %v3430 = vunpack.c.h.b16 %v1788
        %v3431 = vunpack.c.l.b16 %v1789
        %v3432 = vunpack.c.h.b16 %v1789
        %v3433 = vunpack.c.l.b16 %v1790
        %v3434 = vunpack.c.h.b16 %v1790
        %v3435 = vunpack.c.l.b16 %v1791
        %v3436 = vunpack.c.h.b16 %v1791
        %v3437 = vunpack.c.l.b16 %v1792
        %v3438 = vunpack.c.h.b16 %v1792
        %v3439 = vpack.c.b16 %v2419, %v2415
        %v3440 = vpack.c.b16 %v2420, %v2416
        %v3441 = vpack.c.b16 %v2421, %v2417
        %v3442 = vpack.c.b16 %v2422, %v2418
        %v3443 = vpack.c.b16 %v2427, %v2423
        %v3444 = vpack.c.b16 %v2428, %v2424
        %v3445 = vpack.c.b16 %v2429, %v2425
        %v3446 = vpack.c.b16 %v2430, %v2426
        %v3447 = vpack.c.b16 %v2435, %v2431
        %v3448 = vpack.c.b16 %v2436, %v2432
        %v3449 = vpack.c.b16 %v2437, %v2433
        %v3450 = vpack.c.b16 %v2438, %v2434
        %v3451 = vpack.c.b16 %v2443, %v2439
        %v3452 = vpack.c.b16 %v2444, %v2440
        %v3453 = vpack.c.b16 %v2445, %v2441
        %v3454 = vpack.c.b16 %v2446, %v2442
        %v3455 = vpack.c.b16 %v2451, %v2447
        %v3456 = vpack.c.b16 %v2452, %v2448
        %v3457 = vpack.c.b16 %v2453, %v2449
        %v3458 = vpack.c.b16 %v2454, %v2450
        %v3459 = vpack.c.b16 %v2459, %v2455
        %v3460 = vpack.c.b16 %v2460, %v2456
        %v3461 = vpack.c.b16 %v2461, %v2457
        %v3462 = vpack.c.b16 %v2462, %v2458
        %v3463 = vpack.c.b16 %v2467, %v2463
        %v3464 = vpack.c.b16 %v2468, %v2464
        %v3465 = vpack.c.b16 %v2469, %v2465
        %v3466 = vpack.c.b16 %v2470, %v2466
        %v3467 = vpack.c.b16 %v2475, %v2471
        %v3468 = vpack.c.b16 %v2476, %v2472
        %v3469 = vpack.c.b16 %v2477, %v2473
        %v3470 = vpack.c.b16 %v2478, %v2474
        %v3471 = vpack.c.b16 %v2483, %v2479
        %v3472 = vpack.c.b16 %v2484, %v2480
        %v3473 = vpack.c.b16 %v2485, %v2481
        %v3474 = vpack.c.b16 %v2486, %v2482
        %v3475 = vpack.c.b16 %v2491, %v2487
        %v3476 = vpack.c.b16 %v2492, %v2488
        %v3477 = vpack.c.b16 %v2493, %v2489
        %v3478 = vpack.c.b16 %v2494, %v2490
        %v3479 = vpack.c.b16 %v2499, %v2495
        %v3480 = vpack.c.b16 %v2500, %v2496
        %v3481 = vpack.c.b16 %v2501, %v2497
        %v3482 = vpack.c.b16 %v2502, %v2498
        %v3483 = vpack.c.b16 %v2507, %v2503
        %v3484 = vpack.c.b16 %v2508, %v2504
        %v3485 = vpack.c.b16 %v2509, %v2505
        %v3486 = vpack.c.b16 %v2510, %v2506
        %v3487 = vpack.c.b16 %v2515, %v2511
        %v3488 = vpack.c.b16 %v2516, %v2512
        %v3489 = vpack.c.b16 %v2517, %v2513
        %v3490 = vpack.c.b16 %v2518, %v2514
        %v3491 = vpack.c.b16 %v2523, %v2519
        %v3492 = vpack.c.b16 %v2524, %v2520
        %v3493 = vpack.c.b16 %v2525, %v2521
        %v3494 = vpack.c.b16 %v2526, %v2522
        %v3495 = vpack.c.b16 %v2531, %v2527
        %v3496 = vpack.c.b16 %v2532, %v2528
        %v3497 = vpack.c.b16 %v2533, %v2529
        %v3498 = vpack.c.b16 %v2534, %v2530
        %v3499 = vpack.c.b16 %v2539, %v2535
        %v3500 = vpack.c.b16 %v2540, %v2536
        %v3501 = vpack.c.b16 %v2541, %v2537
        %v3502 = vpack.c.b16 %v2542, %v2538
        %v3503 = vpack.c.b16 %v2547, %v2543
        %v3504 = vpack.c.b16 %v2548, %v2544
        %v3505 = vpack.c.b16 %v2549, %v2545
        %v3506 = vpack.c.b16 %v2550, %v2546
        %v3507 = vpack.c.b16 %v2555, %v2551
        %v3508 = vpack.c.b16 %v2556, %v2552
        %v3509 = vpack.c.b16 %v2557, %v2553
        %v3510 = vpack.c.b16 %v2558, %v2554
        %v3511 = vpack.c.b16 %v2563, %v2559
        %v3512 = vpack.c.b16 %v2564, %v2560
        %v3513 = vpack.c.b16 %v2565, %v2561
        %v3514 = vpack.c.b16 %v2566, %v2562
        %v3515 = vpack.c.b16 %v2571, %v2567
        %v3516 = vpack.c.b16 %v2572, %v2568
        %v3517 = vpack.c.b16 %v2573, %v2569
        %v3518 = vpack.c.b16 %v2574, %v2570
        %v3519 = vpack.c.b16 %v2579, %v2575
        %v3520 = vpack.c.b16 %v2580, %v2576
        %v3521 = vpack.c.b16 %v2581, %v2577
        %v3522 = vpack.c.b16 %v2582, %v2578
        %v3523 = vpack.c.b16 %v2587, %v2583
        %v3524 = vpack.c.b16 %v2588, %v2584
        %v3525 = vpack.c.b16 %v2589, %v2585
        %v3526 = vpack.c.b16 %v2590, %v2586
        %v3527 = vpack.c.b16 %v2595, %v2591
        %v3528 = vpack.c.b16 %v2596, %v2592
        %v3529 = vpack.c.b16 %v2597, %v2593
        %v3530 = vpack.c.b16 %v2598, %v2594
        %v3531 = vpack.c.b16 %v2603, %v2599
        %v3532 = vpack.c.b16 %v2604, %v2600
        %v3533 = vpack.c.b16 %v2605, %v2601
        %v3534 = vpack.c.b16 %v2606, %v2602
        %v3535 = vpack.c.b16 %v2611, %v2607
        %v3536 = vpack.c.b16 %v2612, %v2608
        %v3537 = vpack.c.b16 %v2613, %v2609
        %v3538 = vpack.c.b16 %v2614, %v2610
        %v3539 = vpack.c.b16 %v2619, %v2615
        %v3540 = vpack.c.b16 %v2620, %v2616
        %v3541 = vpack.c.b16 %v2621, %v2617
        %v3542 = vpack.c.b16 %v2622, %v2618
        %v3543 = vpack.c.b16 %v2627, %v2623
        %v3544 = vpack.c.b16 %v2628, %v2624
        %v3545 = vpack.c.b16 %v2629, %v2625
        %v3546 = vpack.c.b16 %v2630, %v2626
        %v3547 = vpack.c.b16 %v2635, %v2631
        %v3548 = vpack.c.b16 %v2636, %v2632
        %v3549 = vpack.c.b16 %v2637, %v2633
        %v3550 = vpack.c.b16 %v2638, %v2634
        %v3551 = vpack.c.b16 %v2643, %v2639
        %v3552 = vpack.c.b16 %v2644, %v2640
        %v3553 = vpack.c.b16 %v2645, %v2641
        %v3554 = vpack.c.b16 %v2646, %v2642
        %v3555 = vpack.c.b16 %v2651, %v2647
        %v3556 = vpack.c.b16 %v2652, %v2648
        %v3557 = vpack.c.b16 %v2653, %v2649
        %v3558 = vpack.c.b16 %v2654, %v2650
        %v3559 = vpack.c.b16 %v2659, %v2655
        %v3560 = vpack.c.b16 %v2660, %v2656
        %v3561 = vpack.c.b16 %v2661, %v2657
        %v3562 = vpack.c.b16 %v2662, %v2658
        %v3563 = vpack.c.b16 %v2667, %v2663
        %v3564 = vpack.c.b16 %v2668, %v2664
        %v3565 = vpack.c.b16 %v2669, %v2665
        %v3566 = vpack.c.b16 %v2670, %v2666
        %v3567 = vpack.c.b16 %v2675, %v2671
        %v3568 = vpack.c.b16 %v2676, %v2672
        %v3569 = vpack.c.b16 %v2677, %v2673
        %v3570 = vpack.c.b16 %v2678, %v2674
        %v3571 = vpack.c.b16 %v2683, %v2679
        %v3572 = vpack.c.b16 %v2684, %v2680
        %v3573 = vpack.c.b16 %v2685, %v2681
        %v3574 = vpack.c.b16 %v2686, %v2682
        %v3575 = vpack.c.b16 %v2691, %v2687
        %v3576 = vpack.c.b16 %v2692, %v2688
        %v3577 = vpack.c.b16 %v2693, %v2689
        %v3578 = vpack.c.b16 %v2694, %v2690
        %v3579 = vpack.c.b16 %v2699, %v2695
        %v3580 = vpack.c.b16 %v2700, %v2696
        %v3581 = vpack.c.b16 %v2701, %v2697
        %v3582 = vpack.c.b16 %v2702, %v2698
        %v3583 = vpack.c.b16 %v2707, %v2703
        %v3584 = vpack.c.b16 %v2708, %v2704
        %v3585 = vpack.c.b16 %v2709, %v2705
        %v3586 = vpack.c.b16 %v2710, %v2706
        %v3587 = vpack.c.b16 %v2715, %v2711
        %v3588 = vpack.c.b16 %v2716, %v2712
        %v3589 = vpack.c.b16 %v2717, %v2713
        %v3590 = vpack.c.b16 %v2718, %v2714
        %v3591 = vpack.c.b16 %v2723, %v2719
        %v3592 = vpack.c.b16 %v2724, %v2720
        %v3593 = vpack.c.b16 %v2725, %v2721
        %v3594 = vpack.c.b16 %v2726, %v2722
        %v3595 = vpack.c.b16 %v2731, %v2727
        %v3596 = vpack.c.b16 %v2732, %v2728
        %v3597 = vpack.c.b16 %v2733, %v2729
        %v3598 = vpack.c.b16 %v2734, %v2730
        %v3599 = vpack.c.b16 %v2739, %v2735
        %v3600 = vpack.c.b16 %v2740, %v2736
        %v3601 = vpack.c.b16 %v2741, %v2737
        %v3602 = vpack.c.b16 %v2742, %v2738
        %v3603 = vpack.c.b16 %v2747, %v2743
        %v3604 = vpack.c.b16 %v2748, %v2744
        %v3605 = vpack.c.b16 %v2749, %v2745
        %v3606 = vpack.c.b16 %v2750, %v2746
        %v3607 = vpack.c.b16 %v2755, %v2751
        %v3608 = vpack.c.b16 %v2756, %v2752
        %v3609 = vpack.c.b16 %v2757, %v2753
        %v3610 = vpack.c.b16 %v2758, %v2754
        %v3611 = vpack.c.b16 %v2763, %v2759
        %v3612 = vpack.c.b16 %v2764, %v2760
        %v3613 = vpack.c.b16 %v2765, %v2761
        %v3614 = vpack.c.b16 %v2766, %v2762
        %v3615 = vpack.c.b16 %v2771, %v2767
        %v3616 = vpack.c.b16 %v2772, %v2768
        %v3617 = vpack.c.b16 %v2773, %v2769
        %v3618 = vpack.c.b16 %v2774, %v2770
        %v3619 = vpack.c.b16 %v2779, %v2775
        %v3620 = vpack.c.b16 %v2780, %v2776
        %v3621 = vpack.c.b16 %v2781, %v2777
        %v3622 = vpack.c.b16 %v2782, %v2778
        %v3623 = vpack.c.b16 %v2787, %v2783
        %v3624 = vpack.c.b16 %v2788, %v2784
        %v3625 = vpack.c.b16 %v2789, %v2785
        %v3626 = vpack.c.b16 %v2790, %v2786
        %v3627 = vpack.c.b16 %v2795, %v2791
        %v3628 = vpack.c.b16 %v2796, %v2792
        %v3629 = vpack.c.b16 %v2797, %v2793
        %v3630 = vpack.c.b16 %v2798, %v2794
        %v3631 = vpack.c.b16 %v2803, %v2799
        %v3632 = vpack.c.b16 %v2804, %v2800
        %v3633 = vpack.c.b16 %v2805, %v2801
        %v3634 = vpack.c.b16 %v2806, %v2802
        %v3635 = vpack.c.b16 %v2811, %v2807
        %v3636 = vpack.c.b16 %v2812, %v2808
        %v3637 = vpack.c.b16 %v2813, %v2809
        %v3638 = vpack.c.b16 %v2814, %v2810
        %v3639 = vpack.c.b16 %v2819, %v2815
        %v3640 = vpack.c.b16 %v2820, %v2816
        %v3641 = vpack.c.b16 %v2821, %v2817
        %v3642 = vpack.c.b16 %v2822, %v2818
        %v3643 = vpack.c.b16 %v2827, %v2823
        %v3644 = vpack.c.b16 %v2828, %v2824
        %v3645 = vpack.c.b16 %v2829, %v2825
        %v3646 = vpack.c.b16 %v2830, %v2826
        %v3647 = vpack.c.b16 %v2835, %v2831
        %v3648 = vpack.c.b16 %v2836, %v2832
        %v3649 = vpack.c.b16 %v2837, %v2833
        %v3650 = vpack.c.b16 %v2838, %v2834
        %v3651 = vpack.c.b16 %v2843, %v2839
        %v3652 = vpack.c.b16 %v2844, %v2840
        %v3653 = vpack.c.b16 %v2845, %v2841
        %v3654 = vpack.c.b16 %v2846, %v2842
        %v3655 = vpack.c.b16 %v2851, %v2847
        %v3656 = vpack.c.b16 %v2852, %v2848
        %v3657 = vpack.c.b16 %v2853, %v2849
        %v3658 = vpack.c.b16 %v2854, %v2850
        %v3659 = vpack.c.b16 %v2859, %v2855
        %v3660 = vpack.c.b16 %v2860, %v2856
        %v3661 = vpack.c.b16 %v2861, %v2857
        %v3662 = vpack.c.b16 %v2862, %v2858
        %v3663 = vpack.c.b16 %v2867, %v2863
        %v3664 = vpack.c.b16 %v2868, %v2864
        %v3665 = vpack.c.b16 %v2869, %v2865
        %v3666 = vpack.c.b16 %v2870, %v2866
        %v3667 = vpack.c.b16 %v2875, %v2871
        %v3668 = vpack.c.b16 %v2876, %v2872
        %v3669 = vpack.c.b16 %v2877, %v2873
        %v3670 = vpack.c.b16 %v2878, %v2874
        %v3671 = vpack.c.b16 %v2883, %v2879
        %v3672 = vpack.c.b16 %v2884, %v2880
        %v3673 = vpack.c.b16 %v2885, %v2881
        %v3674 = vpack.c.b16 %v2886, %v2882
        %v3675 = vpack.c.b16 %v2891, %v2887
        %v3676 = vpack.c.b16 %v2892, %v2888
        %v3677 = vpack.c.b16 %v2893, %v2889
        %v3678 = vpack.c.b16 %v2894, %v2890
        %v3679 = vpack.c.b16 %v2899, %v2895
        %v3680 = vpack.c.b16 %v2900, %v2896
        %v3681 = vpack.c.b16 %v2901, %v2897
        %v3682 = vpack.c.b16 %v2902, %v2898
        %v3683 = vpack.c.b16 %v2907, %v2903
        %v3684 = vpack.c.b16 %v2908, %v2904
        %v3685 = vpack.c.b16 %v2909, %v2905
        %v3686 = vpack.c.b16 %v2910, %v2906
        %v3687 = vpack.c.b16 %v2915, %v2911
        %v3688 = vpack.c.b16 %v2916, %v2912
        %v3689 = vpack.c.b16 %v2917, %v2913
        %v3690 = vpack.c.b16 %v2918, %v2914
        %v3691 = vpack.c.b16 %v2923, %v2919
        %v3692 = vpack.c.b16 %v2924, %v2920
        %v3693 = vpack.c.b16 %v2925, %v2921
        %v3694 = vpack.c.b16 %v2926, %v2922
        %v3695 = vpack.c.b16 %v2931, %v2927
        %v3696 = vpack.c.b16 %v2932, %v2928
        %v3697 = vpack.c.b16 %v2933, %v2929
        %v3698 = vpack.c.b16 %v2934, %v2930
        %v3699 = vpack.c.b16 %v2939, %v2935
        %v3700 = vpack.c.b16 %v2940, %v2936
        %v3701 = vpack.c.b16 %v2941, %v2937
        %v3702 = vpack.c.b16 %v2942, %v2938
        %v3703 = vpack.c.b16 %v2947, %v2943
        %v3704 = vpack.c.b16 %v2948, %v2944
        %v3705 = vpack.c.b16 %v2949, %v2945
        %v3706 = vpack.c.b16 %v2950, %v2946
        %v3707 = vpack.c.b16 %v2955, %v2951
        %v3708 = vpack.c.b16 %v2956, %v2952
        %v3709 = vpack.c.b16 %v2957, %v2953
        %v3710 = vpack.c.b16 %v2958, %v2954
        %v3711 = vpack.c.b16 %v2963, %v2959
        %v3712 = vpack.c.b16 %v2964, %v2960
        %v3713 = vpack.c.b16 %v2965, %v2961
        %v3714 = vpack.c.b16 %v2966, %v2962
        %v3715 = vpack.c.b16 %v2971, %v2967
        %v3716 = vpack.c.b16 %v2972, %v2968
        %v3717 = vpack.c.b16 %v2973, %v2969
        %v3718 = vpack.c.b16 %v2974, %v2970
        %v3719 = vpack.c.b16 %v2979, %v2975
        %v3720 = vpack.c.b16 %v2980, %v2976
        %v3721 = vpack.c.b16 %v2981, %v2977
        %v3722 = vpack.c.b16 %v2982, %v2978
        %v3723 = vpack.c.b16 %v2987, %v2983
        %v3724 = vpack.c.b16 %v2988, %v2984
        %v3725 = vpack.c.b16 %v2989, %v2985
        %v3726 = vpack.c.b16 %v2990, %v2986
        %v3727 = vpack.c.b16 %v2995, %v2991
        %v3728 = vpack.c.b16 %v2996, %v2992
        %v3729 = vpack.c.b16 %v2997, %v2993
        %v3730 = vpack.c.b16 %v2998, %v2994
        %v3731 = vpack.c.b16 %v3003, %v2999
        %v3732 = vpack.c.b16 %v3004, %v3000
        %v3733 = vpack.c.b16 %v3005, %v3001
        %v3734 = vpack.c.b16 %v3006, %v3002
        %v3735 = vpack.c.b16 %v3011, %v3007
        %v3736 = vpack.c.b16 %v3012, %v3008
        %v3737 = vpack.c.b16 %v3013, %v3009
        %v3738 = vpack.c.b16 %v3014, %v3010
        %v3739 = vpack.c.b16 %v3019, %v3015
        %v3740 = vpack.c.b16 %v3020, %v3016
        %v3741 = vpack.c.b16 %v3021, %v3017
        %v3742 = vpack.c.b16 %v3022, %v3018
        %v3743 = vpack.c.b16 %v3027, %v3023
        %v3744 = vpack.c.b16 %v3028, %v3024
        %v3745 = vpack.c.b16 %v3029, %v3025
        %v3746 = vpack.c.b16 %v3030, %v3026
        %v3747 = vpack.c.b16 %v3035, %v3031
        %v3748 = vpack.c.b16 %v3036, %v3032
        %v3749 = vpack.c.b16 %v3037, %v3033
        %v3750 = vpack.c.b16 %v3038, %v3034
        %v3751 = vpack.c.b16 %v3043, %v3039
        %v3752 = vpack.c.b16 %v3044, %v3040
        %v3753 = vpack.c.b16 %v3045, %v3041
        %v3754 = vpack.c.b16 %v3046, %v3042
        %v3755 = vpack.c.b16 %v3051, %v3047
        %v3756 = vpack.c.b16 %v3052, %v3048
        %v3757 = vpack.c.b16 %v3053, %v3049
        %v3758 = vpack.c.b16 %v3054, %v3050
        %v3759 = vpack.c.b16 %v3059, %v3055
        %v3760 = vpack.c.b16 %v3060, %v3056
        %v3761 = vpack.c.b16 %v3061, %v3057
        %v3762 = vpack.c.b16 %v3062, %v3058
        %v3763 = vpack.c.b16 %v3067, %v3063
        %v3764 = vpack.c.b16 %v3068, %v3064
        %v3765 = vpack.c.b16 %v3069, %v3065
        %v3766 = vpack.c.b16 %v3070, %v3066
        %v3767 = vpack.c.b16 %v3075, %v3071
        %v3768 = vpack.c.b16 %v3076, %v3072
        %v3769 = vpack.c.b16 %v3077, %v3073
        %v3770 = vpack.c.b16 %v3078, %v3074
        %v3771 = vpack.c.b16 %v3083, %v3079
        %v3772 = vpack.c.b16 %v3084, %v3080
        %v3773 = vpack.c.b16 %v3085, %v3081
        %v3774 = vpack.c.b16 %v3086, %v3082
        %v3775 = vpack.c.b16 %v3091, %v3087
        %v3776 = vpack.c.b16 %v3092, %v3088
        %v3777 = vpack.c.b16 %v3093, %v3089
        %v3778 = vpack.c.b16 %v3094, %v3090
        %v3779 = vpack.c.b16 %v3099, %v3095
        %v3780 = vpack.c.b16 %v3100, %v3096
        %v3781 = vpack.c.b16 %v3101, %v3097
        %v3782 = vpack.c.b16 %v3102, %v3098
        %v3783 = vpack.c.b16 %v3107, %v3103
        %v3784 = vpack.c.b16 %v3108, %v3104
        %v3785 = vpack.c.b16 %v3109, %v3105
        %v3786 = vpack.c.b16 %v3110, %v3106
        %v3787 = vpack.c.b16 %v3115, %v3111
        %v3788 = vpack.c.b16 %v3116, %v3112
        %v3789 = vpack.c.b16 %v3117, %v3113
        %v3790 = vpack.c.b16 %v3118, %v3114
        %v3791 = vpack.c.b16 %v3123, %v3119
        %v3792 = vpack.c.b16 %v3124, %v3120
        %v3793 = vpack.c.b16 %v3125, %v3121
        %v3794 = vpack.c.b16 %v3126, %v3122
        %v3795 = vpack.c.b16 %v3131, %v3127
        %v3796 = vpack.c.b16 %v3132, %v3128
        %v3797 = vpack.c.b16 %v3133, %v3129
        %v3798 = vpack.c.b16 %v3134, %v3130
        %v3799 = vpack.c.b16 %v3139, %v3135
        %v3800 = vpack.c.b16 %v3140, %v3136
        %v3801 = vpack.c.b16 %v3141, %v3137
        %v3802 = vpack.c.b16 %v3142, %v3138
        %v3803 = vpack.c.b16 %v3147, %v3143
        %v3804 = vpack.c.b16 %v3148, %v3144
        %v3805 = vpack.c.b16 %v3149, %v3145
        %v3806 = vpack.c.b16 %v3150, %v3146
        %v3807 = vpack.c.b16 %v3155, %v3151
        %v3808 = vpack.c.b16 %v3156, %v3152
        %v3809 = vpack.c.b16 %v3157, %v3153
        %v3810 = vpack.c.b16 %v3158, %v3154
        %v3811 = vpack.c.b16 %v3163, %v3159
        %v3812 = vpack.c.b16 %v3164, %v3160
        %v3813 = vpack.c.b16 %v3165, %v3161
        %v3814 = vpack.c.b16 %v3166, %v3162
        %v3815 = vpack.c.b16 %v3171, %v3167
        %v3816 = vpack.c.b16 %v3172, %v3168
        %v3817 = vpack.c.b16 %v3173, %v3169
        %v3818 = vpack.c.b16 %v3174, %v3170
        %v3819 = vpack.c.b16 %v3179, %v3175
        %v3820 = vpack.c.b16 %v3180, %v3176
        %v3821 = vpack.c.b16 %v3181, %v3177
        %v3822 = vpack.c.b16 %v3182, %v3178
        %v3823 = vpack.c.b16 %v3187, %v3183
        %v3824 = vpack.c.b16 %v3188, %v3184
        %v3825 = vpack.c.b16 %v3189, %v3185
        %v3826 = vpack.c.b16 %v3190, %v3186
        %v3827 = vpack.c.b16 %v3195, %v3191
        %v3828 = vpack.c.b16 %v3196, %v3192
        %v3829 = vpack.c.b16 %v3197, %v3193
        %v3830 = vpack.c.b16 %v3198, %v3194
        %v3831 = vpack.c.b16 %v3203, %v3199
        %v3832 = vpack.c.b16 %v3204, %v3200
        %v3833 = vpack.c.b16 %v3205, %v3201
        %v3834 = vpack.c.b16 %v3206, %v3202
        %v3835 = vpack.c.b16 %v3211, %v3207
        %v3836 = vpack.c.b16 %v3212, %v3208
        %v3837 = vpack.c.b16 %v3213, %v3209
        %v3838 = vpack.c.b16 %v3214, %v3210
        %v3839 = vpack.c.b16 %v3219, %v3215
        %v3840 = vpack.c.b16 %v3220, %v3216
        %v3841 = vpack.c.b16 %v3221, %v3217
        %v3842 = vpack.c.b16 %v3222, %v3218
        %v3843 = vpack.c.b16 %v3227, %v3223
        %v3844 = vpack.c.b16 %v3228, %v3224
        %v3845 = vpack.c.b16 %v3229, %v3225
        %v3846 = vpack.c.b16 %v3230, %v3226
        %v3847 = vpack.c.b16 %v3235, %v3231
        %v3848 = vpack.c.b16 %v3236, %v3232
        %v3849 = vpack.c.b16 %v3237, %v3233
        %v3850 = vpack.c.b16 %v3238, %v3234
        %v3851 = vpack.c.b16 %v3243, %v3239
        %v3852 = vpack.c.b16 %v3244, %v3240
        %v3853 = vpack.c.b16 %v3245, %v3241
        %v3854 = vpack.c.b16 %v3246, %v3242
        %v3855 = vpack.c.b16 %v3251, %v3247
        %v3856 = vpack.c.b16 %v3252, %v3248
        %v3857 = vpack.c.b16 %v3253, %v3249
        %v3858 = vpack.c.b16 %v3254, %v3250
        %v3859 = vpack.c.b16 %v3259, %v3255
        %v3860 = vpack.c.b16 %v3260, %v3256
        %v3861 = vpack.c.b16 %v3261, %v3257
        %v3862 = vpack.c.b16 %v3262, %v3258
        %v3863 = vpack.c.b16 %v3267, %v3263
        %v3864 = vpack.c.b16 %v3268, %v3264
        %v3865 = vpack.c.b16 %v3269, %v3265
        %v3866 = vpack.c.b16 %v3270, %v3266
        %v3867 = vpack.c.b16 %v3275, %v3271
        %v3868 = vpack.c.b16 %v3276, %v3272
        %v3869 = vpack.c.b16 %v3277, %v3273
        %v3870 = vpack.c.b16 %v3278, %v3274
        %v3871 = vpack.c.b16 %v3283, %v3279
        %v3872 = vpack.c.b16 %v3284, %v3280
        %v3873 = vpack.c.b16 %v3285, %v3281
        %v3874 = vpack.c.b16 %v3286, %v3282
        %v3875 = vpack.c.b16 %v3291, %v3287
        %v3876 = vpack.c.b16 %v3292, %v3288
        %v3877 = vpack.c.b16 %v3293, %v3289
        %v3878 = vpack.c.b16 %v3294, %v3290
        %v3879 = vpack.c.b16 %v3299, %v3295
        %v3880 = vpack.c.b16 %v3300, %v3296
        %v3881 = vpack.c.b16 %v3301, %v3297
        %v3882 = vpack.c.b16 %v3302, %v3298
        %v3883 = vpack.c.b16 %v3307, %v3303
        %v3884 = vpack.c.b16 %v3308, %v3304
        %v3885 = vpack.c.b16 %v3309, %v3305
        %v3886 = vpack.c.b16 %v3310, %v3306
        %v3887 = vpack.c.b16 %v3315, %v3311
        %v3888 = vpack.c.b16 %v3316, %v3312
        %v3889 = vpack.c.b16 %v3317, %v3313
        %v3890 = vpack.c.b16 %v3318, %v3314
        %v3891 = vpack.c.b16 %v3323, %v3319
        %v3892 = vpack.c.b16 %v3324, %v3320
        %v3893 = vpack.c.b16 %v3325, %v3321
        %v3894 = vpack.c.b16 %v3326, %v3322
        %v3895 = vpack.c.b16 %v3331, %v3327
        %v3896 = vpack.c.b16 %v3332, %v3328
        %v3897 = vpack.c.b16 %v3333, %v3329
        %v3898 = vpack.c.b16 %v3334, %v3330
        %v3899 = vpack.c.b16 %v3339, %v3335
        %v3900 = vpack.c.b16 %v3340, %v3336
        %v3901 = vpack.c.b16 %v3341, %v3337
        %v3902 = vpack.c.b16 %v3342, %v3338
        %v3903 = vpack.c.b16 %v3347, %v3343
        %v3904 = vpack.c.b16 %v3348, %v3344
        %v3905 = vpack.c.b16 %v3349, %v3345
        %v3906 = vpack.c.b16 %v3350, %v3346
        %v3907 = vpack.c.b16 %v3355, %v3351
        %v3908 = vpack.c.b16 %v3356, %v3352
        %v3909 = vpack.c.b16 %v3357, %v3353
        %v3910 = vpack.c.b16 %v3358, %v3354
        %v3911 = vpack.c.b16 %v3363, %v3359
        %v3912 = vpack.c.b16 %v3364, %v3360
        %v3913 = vpack.c.b16 %v3365, %v3361
        %v3914 = vpack.c.b16 %v3366, %v3362
        %v3915 = vpack.c.b16 %v3371, %v3367
        %v3916 = vpack.c.b16 %v3372, %v3368
        %v3917 = vpack.c.b16 %v3373, %v3369
        %v3918 = vpack.c.b16 %v3374, %v3370
        %v3919 = vpack.c.b16 %v3379, %v3375
        %v3920 = vpack.c.b16 %v3380, %v3376
        %v3921 = vpack.c.b16 %v3381, %v3377
        %v3922 = vpack.c.b16 %v3382, %v3378
        %v3923 = vpack.c.b16 %v3387, %v3383
        %v3924 = vpack.c.b16 %v3388, %v3384
        %v3925 = vpack.c.b16 %v3389, %v3385
        %v3926 = vpack.c.b16 %v3390, %v3386
        %v3927 = vpack.c.b16 %v3395, %v3391
        %v3928 = vpack.c.b16 %v3396, %v3392
        %v3929 = vpack.c.b16 %v3397, %v3393
        %v3930 = vpack.c.b16 %v3398, %v3394
        %v3931 = vpack.c.b16 %v3403, %v3399
        %v3932 = vpack.c.b16 %v3404, %v3400
        %v3933 = vpack.c.b16 %v3405, %v3401
        %v3934 = vpack.c.b16 %v3406, %v3402
        %v3935 = vpack.c.b16 %v3411, %v3407
        %v3936 = vpack.c.b16 %v3412, %v3408
        %v3937 = vpack.c.b16 %v3413, %v3409
        %v3938 = vpack.c.b16 %v3414, %v3410
        %v3939 = vpack.c.b16 %v3419, %v3415
        %v3940 = vpack.c.b16 %v3420, %v3416
        %v3941 = vpack.c.b16 %v3421, %v3417
        %v3942 = vpack.c.b16 %v3422, %v3418
        %v3943 = vpack.c.b16 %v3427, %v3423
        %v3944 = vpack.c.b16 %v3428, %v3424
        %v3945 = vpack.c.b16 %v3429, %v3425
        %v3946 = vpack.c.b16 %v3430, %v3426
        %v3947 = vpack.c.b16 %v3435, %v3431
        %v3948 = vpack.c.b16 %v3436, %v3432
        %v3949 = vpack.c.b16 %v3437, %v3433
        %v3950 = vpack.c.b16 %v3438, %v3434
        %4463 = vmatprep.subr.bf16.mxu0 %v3440
        %4464 = vmatpush1.bf16.msra.mxu0 %v3439
        %4465 = vmatprep.subr.bf16.mxu0 %v3444
        %4466 = vmatpush1.bf16.msra.mxu0 %v3443
        %4467 = vmatprep.subr.bf16.mxu0 %v3448
        %4468 = vmatpush1.bf16.msra.mxu0 %v3447
        %4469 = vmatprep.subr.bf16.mxu0 %v3452
        %4470 = vmatpush1.bf16.msra.mxu0 %v3451
        %4471 = vmatprep.subr.bf16.mxu0 %v3456
        %4472 = vmatpush1.bf16.msra.mxu0 %v3455
        %4473 = vmatprep.subr.bf16.mxu0 %v3460
        %4474 = vmatpush1.bf16.msra.mxu0 %v3459
        %4475 = vmatprep.subr.bf16.mxu0 %v3464
        %4476 = vmatpush1.bf16.msra.mxu0 %v3463
        %4477 = vmatprep.subr.bf16.mxu0 %v3468
        %4478 = vmatpush1.bf16.msra.mxu0 %v3467
        %4479 = vmatprep.subr.bf16.mxu0 %v3472
        %4480 = vmatpush1.bf16.msra.mxu0 %v3471
        %4481 = vmatprep.subr.bf16.mxu0 %v3476
        %4482 = vmatpush1.bf16.msra.mxu0 %v3475
        %4483 = vmatprep.subr.bf16.mxu0 %v3480
        %4484 = vmatpush1.bf16.msra.mxu0 %v3479
        %4485 = vmatprep.subr.bf16.mxu0 %v3484
        %4486 = vmatpush1.bf16.msra.mxu0 %v3483
        %4487 = vmatprep.subr.bf16.mxu0 %v3488
        %4488 = vmatpush1.bf16.msra.mxu0 %v3487
        %4489 = vmatprep.subr.bf16.mxu0 %v3492
        %4490 = vmatpush1.bf16.msra.mxu0 %v3491
        %4491 = vmatprep.subr.bf16.mxu0 %v3496
        %4492 = vmatpush1.bf16.msra.mxu0 %v3495
        %4493 = vmatprep.subr.bf16.mxu0 %v3500
        %4494 = vmatpush1.bf16.msra.mxu0 %v3499
        %4495 = vmatprep.mubr.bf16.mxu0 %v1834
        %4496 = vmatmul.mubr.bf16.gmra.mrb[0].mxu0 %v1826
        %v4497 = vpop.f32.mrb[0].mxu0
        %v4498 = vadd.f32 %v1798, %v4497
        %v4499 = vpop.f32.mrb[0].mxu0
        %v4500 = vadd.f32 %v1802, %v4499
        %v4501 = vpop.f32.mrb[0].mxu0
        %v4502 = vpop.f32.mrb[0].mxu0
        %4503 = vdwg.mxu0
        %4504 = vmatprep.subr.bf16.mxu0 %v3504
        %4505 = vmatpush1.bf16.msra.mxu0 %v3503
        %4506 = vmatprep.subr.bf16.mxu0 %v3508
        %4507 = vmatpush1.bf16.msra.mxu0 %v3507
        %4508 = vmatprep.subr.bf16.mxu0 %v3512
        %4509 = vmatpush1.bf16.msra.mxu0 %v3511
        %4510 = vmatprep.subr.bf16.mxu0 %v3516
        %4511 = vmatpush1.bf16.msra.mxu0 %v3515
        %4512 = vmatprep.subr.bf16.mxu0 %v3520
        %4513 = vmatpush1.bf16.msra.mxu0 %v3519
        %4514 = vmatprep.subr.bf16.mxu0 %v3524
        %4515 = vmatpush1.bf16.msra.mxu0 %v3523
        %4516 = vmatprep.subr.bf16.mxu0 %v3528
        %4517 = vmatpush1.bf16.msra.mxu0 %v3527
        %4518 = vmatprep.subr.bf16.mxu0 %v3532
        %4519 = vmatpush1.bf16.msra.mxu0 %v3531
        %4520 = vmatprep.subr.bf16.mxu0 %v3536
        %4521 = vmatpush1.bf16.msra.mxu0 %v3535
        %4522 = vmatprep.subr.bf16.mxu0 %v3540
        %4523 = vmatpush1.bf16.msra.mxu0 %v3539
        %4524 = vmatprep.subr.bf16.mxu0 %v3544
        %4525 = vmatpush1.bf16.msra.mxu0 %v3543
        %4526 = vmatprep.subr.bf16.mxu0 %v3548
        %4527 = vmatpush1.bf16.msra.mxu0 %v3547
        %4528 = vmatprep.subr.bf16.mxu0 %v3552
        %4529 = vmatpush1.bf16.msra.mxu0 %v3551
        %4530 = vmatprep.subr.bf16.mxu0 %v3556
        %4531 = vmatpush1.bf16.msra.mxu0 %v3555
        %4532 = vmatprep.subr.bf16.mxu0 %v3560
        %4533 = vmatpush1.bf16.msra.mxu0 %v3559
        %4534 = vmatprep.subr.bf16.mxu0 %v3564
        %4535 = vmatpush1.bf16.msra.mxu0 %v3563
        %4536 = vmatprep.mubr.bf16.mxu0 %v1835
        %4537 = vmatmul.mubr.bf16.gmra.mrb[0].mxu0 %v1833
        %v4538 = vpop.f32.mrb[0].mxu0
        %v4539 = vadd.f32 %v4498, %v4538
        %v4540 = vpop.f32.mrb[0].mxu0
        %v4541 = vadd.f32 %v4500, %v4540
        %v4542 = vpop.f32.mrb[0].mxu0
        %v4543 = vpop.f32.mrb[0].mxu0
        %4544 = vdwg.mxu0
        %4545 = vmatprep.subr.bf16.mxu0 %v3568
        %4546 = vmatpush1.bf16.msra.mxu0 %v3567
        %4547 = vmatprep.subr.bf16.mxu0 %v3572
        %4548 = vmatpush1.bf16.msra.mxu0 %v3571
        %4549 = vmatprep.subr.bf16.mxu0 %v3576
        %4550 = vmatpush1.bf16.msra.mxu0 %v3575
        %4551 = vmatprep.subr.bf16.mxu0 %v3580
        %4552 = vmatpush1.bf16.msra.mxu0 %v3579
        %4553 = vmatprep.subr.bf16.mxu0 %v3584
        %4554 = vmatpush1.bf16.msra.mxu0 %v3583
        %4555 = vmatprep.subr.bf16.mxu0 %v3588
        %4556 = vmatpush1.bf16.msra.mxu0 %v3587
        %4557 = vmatprep.subr.bf16.mxu0 %v3592
        %4558 = vmatpush1.bf16.msra.mxu0 %v3591
        %4559 = vmatprep.subr.bf16.mxu0 %v3596
        %4560 = vmatpush1.bf16.msra.mxu0 %v3595
        %4561 = vmatprep.subr.bf16.mxu0 %v3600
        %4562 = vmatpush1.bf16.msra.mxu0 %v3599
        %4563 = vmatprep.subr.bf16.mxu0 %v3604
        %4564 = vmatpush1.bf16.msra.mxu0 %v3603
        %4565 = vmatprep.subr.bf16.mxu0 %v3608
        %4566 = vmatpush1.bf16.msra.mxu0 %v3607
        %4567 = vmatprep.subr.bf16.mxu0 %v3612
        %4568 = vmatpush1.bf16.msra.mxu0 %v3611
        %4569 = vmatprep.subr.bf16.mxu0 %v3616
        %4570 = vmatpush1.bf16.msra.mxu0 %v3615
        %4571 = vmatprep.subr.bf16.mxu0 %v3620
        %4572 = vmatpush1.bf16.msra.mxu0 %v3619
        %4573 = vmatprep.subr.bf16.mxu0 %v3624
        %4574 = vmatpush1.bf16.msra.mxu0 %v3623
        %4575 = vmatprep.subr.bf16.mxu0 %v3628
        %4576 = vmatpush1.bf16.msra.mxu0 %v3627
        %4577 = vmatprep.mubr.bf16.mxu0 %v1851
        %4578 = vmatmul.mubr.bf16.gmra.mrb[0].mxu0 %v1843
        %v4579 = vpop.f32.mrb[0].mxu0
        %v4580 = vadd.f32 %v4539, %v4579
        %v4581 = vpop.f32.mrb[0].mxu0
        %v4582 = vadd.f32 %v4541, %v4581
        %v4583 = vpop.f32.mrb[0].mxu0
        %v4584 = vpop.f32.mrb[0].mxu0
        %4585 = vdwg.mxu0
        %4586 = vmatprep.subr.bf16.mxu0 %v3632
        %4587 = vmatpush1.bf16.msra.mxu0 %v3631
        %4588 = vmatprep.subr.bf16.mxu0 %v3636
        %4589 = vmatpush1.bf16.msra.mxu0 %v3635
        %4590 = vmatprep.subr.bf16.mxu0 %v3640
        %4591 = vmatpush1.bf16.msra.mxu0 %v3639
        %4592 = vmatprep.subr.bf16.mxu0 %v3644
        %4593 = vmatpush1.bf16.msra.mxu0 %v3643
        %4594 = vmatprep.subr.bf16.mxu0 %v3648
        %4595 = vmatpush1.bf16.msra.mxu0 %v3647
        %4596 = vmatprep.subr.bf16.mxu0 %v3652
        %4597 = vmatpush1.bf16.msra.mxu0 %v3651
        %4598 = vmatprep.subr.bf16.mxu0 %v3656
        %4599 = vmatpush1.bf16.msra.mxu0 %v3655
        %4600 = vmatprep.subr.bf16.mxu0 %v3660
        %4601 = vmatpush1.bf16.msra.mxu0 %v3659
        %4602 = vmatprep.subr.bf16.mxu0 %v3664
        %4603 = vmatpush1.bf16.msra.mxu0 %v3663
        %4604 = vmatprep.subr.bf16.mxu0 %v3668
        %4605 = vmatpush1.bf16.msra.mxu0 %v3667
        %4606 = vmatprep.subr.bf16.mxu0 %v3672
        %4607 = vmatpush1.bf16.msra.mxu0 %v3671
        %4608 = vmatprep.subr.bf16.mxu0 %v3676
        %4609 = vmatpush1.bf16.msra.mxu0 %v3675
        %4610 = vmatprep.subr.bf16.mxu0 %v3680
        %4611 = vmatpush1.bf16.msra.mxu0 %v3679
        %4612 = vmatprep.subr.bf16.mxu0 %v3684
        %4613 = vmatpush1.bf16.msra.mxu0 %v3683
        %4614 = vmatprep.subr.bf16.mxu0 %v3688
        %4615 = vmatpush1.bf16.msra.mxu0 %v3687
        %4616 = vmatprep.subr.bf16.mxu0 %v3692
        %4617 = vmatpush1.bf16.msra.mxu0 %v3691
        %4618 = vmatprep.mubr.bf16.mxu0 %v1852
        %4619 = vmatmul.mubr.bf16.gmra.mrb[0].mxu0 %v1850
        %v4620 = vpop.f32.mrb[0].mxu0
        %v4621 = vadd.f32 %v4580, %v4620
        %v4622 = vpop.f32.mrb[0].mxu0
        %v4623 = vadd.f32 %v4582, %v4622
        %v4624 = vpop.f32.mrb[0].mxu0
        %v4625 = vpop.f32.mrb[0].mxu0
        %4626 = vdwg.mxu0
        %4627 = vmatprep.subr.bf16.mxu0 %v3696
        %4628 = vmatpush1.bf16.msra.mxu0 %v3695
        %4629 = vmatprep.subr.bf16.mxu0 %v3700
        %4630 = vmatpush1.bf16.msra.mxu0 %v3699
        %4631 = vmatprep.subr.bf16.mxu0 %v3704
        %4632 = vmatpush1.bf16.msra.mxu0 %v3703
        %4633 = vmatprep.subr.bf16.mxu0 %v3708
        %4634 = vmatpush1.bf16.msra.mxu0 %v3707
        %4635 = vmatprep.subr.bf16.mxu0 %v3712
        %4636 = vmatpush1.bf16.msra.mxu0 %v3711
        %4637 = vmatprep.subr.bf16.mxu0 %v3716
        %4638 = vmatpush1.bf16.msra.mxu0 %v3715
        %4639 = vmatprep.subr.bf16.mxu0 %v3720
        %4640 = vmatpush1.bf16.msra.mxu0 %v3719
        %4641 = vmatprep.subr.bf16.mxu0 %v3724
        %4642 = vmatpush1.bf16.msra.mxu0 %v3723
        %4643 = vmatprep.subr.bf16.mxu0 %v3728
        %4644 = vmatpush1.bf16.msra.mxu0 %v3727
        %4645 = vmatprep.subr.bf16.mxu0 %v3732
        %4646 = vmatpush1.bf16.msra.mxu0 %v3731
        %4647 = vmatprep.subr.bf16.mxu0 %v3736
        %4648 = vmatpush1.bf16.msra.mxu0 %v3735
        %4649 = vmatprep.subr.bf16.mxu0 %v3740
        %4650 = vmatpush1.bf16.msra.mxu0 %v3739
        %4651 = vmatprep.subr.bf16.mxu0 %v3744
        %4652 = vmatpush1.bf16.msra.mxu0 %v3743
        %4653 = vmatprep.subr.bf16.mxu0 %v3748
        %4654 = vmatpush1.bf16.msra.mxu0 %v3747
        %4655 = vmatprep.subr.bf16.mxu0 %v3752
        %4656 = vmatpush1.bf16.msra.mxu0 %v3751
        %4657 = vmatprep.subr.bf16.mxu0 %v3756
        %4658 = vmatpush1.bf16.msra.mxu0 %v3755
        %4659 = vmatprep.mubr.bf16.mxu0 %v1868
        %4660 = vmatmul.mubr.bf16.gmra.mrb[0].mxu0 %v1860
        %v4661 = vpop.f32.mrb[0].mxu0
        %v4662 = vadd.f32 %v4621, %v4661
        %v4663 = vpop.f32.mrb[0].mxu0
        %v4664 = vadd.f32 %v4623, %v4663
        %v4665 = vpop.f32.mrb[0].mxu0
        %v4666 = vpop.f32.mrb[0].mxu0
        %4667 = vdwg.mxu0
        %4668 = vmatprep.subr.bf16.mxu0 %v3760
        %4669 = vmatpush1.bf16.msra.mxu0 %v3759
        %4670 = vmatprep.subr.bf16.mxu0 %v3764
        %4671 = vmatpush1.bf16.msra.mxu0 %v3763
        %4672 = vmatprep.subr.bf16.mxu0 %v3768
        %4673 = vmatpush1.bf16.msra.mxu0 %v3767
        %4674 = vmatprep.subr.bf16.mxu0 %v3772
        %4675 = vmatpush1.bf16.msra.mxu0 %v3771
        %4676 = vmatprep.subr.bf16.mxu0 %v3776
        %4677 = vmatpush1.bf16.msra.mxu0 %v3775
        %4678 = vmatprep.subr.bf16.mxu0 %v3780
        %4679 = vmatpush1.bf16.msra.mxu0 %v3779
        %4680 = vmatprep.subr.bf16.mxu0 %v3784
        %4681 = vmatpush1.bf16.msra.mxu0 %v3783
        %4682 = vmatprep.subr.bf16.mxu0 %v3788
        %4683 = vmatpush1.bf16.msra.mxu0 %v3787
        %4684 = vmatprep.subr.bf16.mxu0 %v3792
        %4685 = vmatpush1.bf16.msra.mxu0 %v3791
        %4686 = vmatprep.subr.bf16.mxu0 %v3796
        %4687 = vmatpush1.bf16.msra.mxu0 %v3795
        %4688 = vmatprep.subr.bf16.mxu0 %v3800
        %4689 = vmatpush1.bf16.msra.mxu0 %v3799
        %4690 = vmatprep.subr.bf16.mxu0 %v3804
        %4691 = vmatpush1.bf16.msra.mxu0 %v3803
        %4692 = vmatprep.subr.bf16.mxu0 %v3808
        %4693 = vmatpush1.bf16.msra.mxu0 %v3807
        %4694 = vmatprep.subr.bf16.mxu0 %v3812
        %4695 = vmatpush1.bf16.msra.mxu0 %v3811
        %4696 = vmatprep.subr.bf16.mxu0 %v3816
        %4697 = vmatpush1.bf16.msra.mxu0 %v3815
        %4698 = vmatprep.subr.bf16.mxu0 %v3820
        %4699 = vmatpush1.bf16.msra.mxu0 %v3819
        %4700 = vmatprep.mubr.bf16.mxu0 %v1869
        %4701 = vmatmul.mubr.bf16.gmra.mrb[0].mxu0 %v1867
        %v4702 = vpop.f32.mrb[0].mxu0
        %v4703 = vadd.f32 %v4662, %v4702
        %v4704 = vpop.f32.mrb[0].mxu0
        %v4705 = vadd.f32 %v4664, %v4704
        %v4706 = vpop.f32.mrb[0].mxu0
        %v4707 = vpop.f32.mrb[0].mxu0
        %4708 = vdwg.mxu0
        %4709 = vmatprep.subr.bf16.mxu0 %v3824
        %4710 = vmatpush1.bf16.msra.mxu0 %v3823
        %4711 = vmatprep.subr.bf16.mxu0 %v3828
        %4712 = vmatpush1.bf16.msra.mxu0 %v3827
        %4713 = vmatprep.subr.bf16.mxu0 %v3832
        %4714 = vmatpush1.bf16.msra.mxu0 %v3831
        %4715 = vmatprep.subr.bf16.mxu0 %v3836
        %4716 = vmatpush1.bf16.msra.mxu0 %v3835
        %4717 = vmatprep.subr.bf16.mxu0 %v3840
        %4718 = vmatpush1.bf16.msra.mxu0 %v3839
        %4719 = vmatprep.subr.bf16.mxu0 %v3844
        %4720 = vmatpush1.bf16.msra.mxu0 %v3843
        %4721 = vmatprep.subr.bf16.mxu0 %v3848
        %4722 = vmatpush1.bf16.msra.mxu0 %v3847
        %4723 = vmatprep.subr.bf16.mxu0 %v3852
        %4724 = vmatpush1.bf16.msra.mxu0 %v3851
        %4725 = vmatprep.subr.bf16.mxu0 %v3856
        %4726 = vmatpush1.bf16.msra.mxu0 %v3855
        %4727 = vmatprep.subr.bf16.mxu0 %v3860
        %4728 = vmatpush1.bf16.msra.mxu0 %v3859
        %4729 = vmatprep.subr.bf16.mxu0 %v3864
        %4730 = vmatpush1.bf16.msra.mxu0 %v3863
        %4731 = vmatprep.subr.bf16.mxu0 %v3868
        %4732 = vmatpush1.bf16.msra.mxu0 %v3867
        %4733 = vmatprep.subr.bf16.mxu0 %v3872
        %4734 = vmatpush1.bf16.msra.mxu0 %v3871
        %4735 = vmatprep.subr.bf16.mxu0 %v3876
        %4736 = vmatpush1.bf16.msra.mxu0 %v3875
        %4737 = vmatprep.subr.bf16.mxu0 %v3880
        %4738 = vmatpush1.bf16.msra.mxu0 %v3879
        %4739 = vmatprep.subr.bf16.mxu0 %v3884
        %4740 = vmatpush1.bf16.msra.mxu0 %v3883
        %4741 = vmatprep.mubr.bf16.mxu0 %v1885
        %4742 = vmatmul.mubr.bf16.gmra.mrb[0].mxu0 %v1877
        %v4743 = vpop.f32.mrb[0].mxu0
        %v4744 = vadd.f32 %v4703, %v4743
        %v4745 = vpop.f32.mrb[0].mxu0
        %v4746 = vadd.f32 %v4705, %v4745
        %v4747 = vpop.f32.mrb[0].mxu0
        %v4748 = vpop.f32.mrb[0].mxu0
        %4749 = vdwg.mxu0
        %4750 = vmatprep.subr.bf16.mxu0 %v3888
        %4751 = vmatpush1.bf16.msra.mxu0 %v3887
        %4752 = vmatprep.subr.bf16.mxu0 %v3892
        %4753 = vmatpush1.bf16.msra.mxu0 %v3891
        %4754 = vmatprep.subr.bf16.mxu0 %v3896
        %4755 = vmatpush1.bf16.msra.mxu0 %v3895
        %4756 = vmatprep.subr.bf16.mxu0 %v3900
        %4757 = vmatpush1.bf16.msra.mxu0 %v3899
        %4758 = vmatprep.subr.bf16.mxu0 %v3904
        %4759 = vmatpush1.bf16.msra.mxu0 %v3903
        %4760 = vmatprep.subr.bf16.mxu0 %v3908
        %4761 = vmatpush1.bf16.msra.mxu0 %v3907
        %4762 = vmatprep.subr.bf16.mxu0 %v3912
        %4763 = vmatpush1.bf16.msra.mxu0 %v3911
        %4764 = vmatprep.subr.bf16.mxu0 %v3916
        %4765 = vmatpush1.bf16.msra.mxu0 %v3915
        %4766 = vmatprep.subr.bf16.mxu0 %v3920
        %4767 = vmatpush1.bf16.msra.mxu0 %v3919
        %4768 = vmatprep.subr.bf16.mxu0 %v3924
        %4769 = vmatpush1.bf16.msra.mxu0 %v3923
        %4770 = vmatprep.subr.bf16.mxu0 %v3928
        %4771 = vmatpush1.bf16.msra.mxu0 %v3927
        %4772 = vmatprep.subr.bf16.mxu0 %v3932
        %4773 = vmatpush1.bf16.msra.mxu0 %v3931
        %4774 = vmatprep.subr.bf16.mxu0 %v3936
        %4775 = vmatpush1.bf16.msra.mxu0 %v3935
        %4776 = vmatprep.subr.bf16.mxu0 %v3940
        %4777 = vmatpush1.bf16.msra.mxu0 %v3939
        %4778 = vmatprep.subr.bf16.mxu0 %v3944
        %4779 = vmatpush1.bf16.msra.mxu0 %v3943
        %4780 = vmatprep.subr.bf16.mxu0 %v3948
        %4781 = vmatpush1.bf16.msra.mxu0 %v3947
        %4782 = vmatprep.mubr.bf16.mxu0 %v1886
        %4783 = vmatmul.mubr.bf16.gmra.mrb[0].mxu0 %v1884
        %v4784 = vpop.f32.mrb[0].mxu0
        %v4785 = vadd.f32 %v4744, %v4784
        %v4786 = vpop.f32.mrb[0].mxu0
        %v4787 = vadd.f32 %v4746, %v4786
        %v4788 = vpop.f32.mrb[0].mxu0
        %v4789 = vpop.f32.mrb[0].mxu0
        %4790 = vdwg.mxu0
        %4791 = vmatprep.subr.bf16.mxu0 %v3442
        %4792 = vmatpush1.bf16.msra.mxu0 %v3441
        %4793 = vmatprep.subr.bf16.mxu0 %v3446
        %4794 = vmatpush1.bf16.msra.mxu0 %v3445
        %4795 = vmatprep.subr.bf16.mxu0 %v3450
        %4796 = vmatpush1.bf16.msra.mxu0 %v3449
        %4797 = vmatprep.subr.bf16.mxu0 %v3454
        %4798 = vmatpush1.bf16.msra.mxu0 %v3453
        %4799 = vmatprep.subr.bf16.mxu0 %v3458
        %4800 = vmatpush1.bf16.msra.mxu0 %v3457
        %4801 = vmatprep.subr.bf16.mxu0 %v3462
        %4802 = vmatpush1.bf16.msra.mxu0 %v3461
        %4803 = vmatprep.subr.bf16.mxu0 %v3466
        %4804 = vmatpush1.bf16.msra.mxu0 %v3465
        %4805 = vmatprep.subr.bf16.mxu0 %v3470
        %4806 = vmatpush1.bf16.msra.mxu0 %v3469
        %4807 = vmatprep.subr.bf16.mxu0 %v3474
        %4808 = vmatpush1.bf16.msra.mxu0 %v3473
        %4809 = vmatprep.subr.bf16.mxu0 %v3478
        %4810 = vmatpush1.bf16.msra.mxu0 %v3477
        %4811 = vmatprep.subr.bf16.mxu0 %v3482
        %4812 = vmatpush1.bf16.msra.mxu0 %v3481
        %4813 = vmatprep.subr.bf16.mxu0 %v3486
        %4814 = vmatpush1.bf16.msra.mxu0 %v3485
        %4815 = vmatprep.subr.bf16.mxu0 %v3490
        %4816 = vmatpush1.bf16.msra.mxu0 %v3489
        %4817 = vmatprep.subr.bf16.mxu0 %v3494
        %4818 = vmatpush1.bf16.msra.mxu0 %v3493
        %4819 = vmatprep.subr.bf16.mxu0 %v3498
        %4820 = vmatpush1.bf16.msra.mxu0 %v3497
        %4821 = vmatprep.subr.bf16.mxu0 %v3502
        %4822 = vmatpush1.bf16.msra.mxu0 %v3501
        %4823 = vmatprep.mubr.bf16.mxu0 %v1834
        %4824 = vmatmul.mubr.bf16.gmra.mrb[0].mxu0 %v1826
        %v4825 = vpop.f32.mrb[0].mxu0
        %v4826 = vadd.f32 %v1806, %v4825
        %v4827 = vpop.f32.mrb[0].mxu0
        %v4828 = vadd.f32 %v1810, %v4827
        %v4829 = vpop.f32.mrb[0].mxu0
        %v4830 = vpop.f32.mrb[0].mxu0
        %4831 = vdwg.mxu0
        %4832 = vmatprep.subr.bf16.mxu0 %v3506
        %4833 = vmatpush1.bf16.msra.mxu0 %v3505
        %4834 = vmatprep.subr.bf16.mxu0 %v3510
        %4835 = vmatpush1.bf16.msra.mxu0 %v3509
        %4836 = vmatprep.subr.bf16.mxu0 %v3514
        %4837 = vmatpush1.bf16.msra.mxu0 %v3513
        %4838 = vmatprep.subr.bf16.mxu0 %v3518
        %4839 = vmatpush1.bf16.msra.mxu0 %v3517
        %4840 = vmatprep.subr.bf16.mxu0 %v3522
        %4841 = vmatpush1.bf16.msra.mxu0 %v3521
        %4842 = vmatprep.subr.bf16.mxu0 %v3526
        %4843 = vmatpush1.bf16.msra.mxu0 %v3525
        %4844 = vmatprep.subr.bf16.mxu0 %v3530
        %4845 = vmatpush1.bf16.msra.mxu0 %v3529
        %4846 = vmatprep.subr.bf16.mxu0 %v3534
        %4847 = vmatpush1.bf16.msra.mxu0 %v3533
        %4848 = vmatprep.subr.bf16.mxu0 %v3538
        %4849 = vmatpush1.bf16.msra.mxu0 %v3537
        %4850 = vmatprep.subr.bf16.mxu0 %v3542
        %4851 = vmatpush1.bf16.msra.mxu0 %v3541
        %4852 = vmatprep.subr.bf16.mxu0 %v3546
        %4853 = vmatpush1.bf16.msra.mxu0 %v3545
        %4854 = vmatprep.subr.bf16.mxu0 %v3550
        %4855 = vmatpush1.bf16.msra.mxu0 %v3549
        %4856 = vmatprep.subr.bf16.mxu0 %v3554
        %4857 = vmatpush1.bf16.msra.mxu0 %v3553
        %4858 = vmatprep.subr.bf16.mxu0 %v3558
        %4859 = vmatpush1.bf16.msra.mxu0 %v3557
        %4860 = vmatprep.subr.bf16.mxu0 %v3562
        %4861 = vmatpush1.bf16.msra.mxu0 %v3561
        %4862 = vmatprep.subr.bf16.mxu0 %v3566
        %4863 = vmatpush1.bf16.msra.mxu0 %v3565
        %4864 = vmatprep.mubr.bf16.mxu0 %v1835
        %4865 = vmatmul.mubr.bf16.gmra.mrb[0].mxu0 %v1833
        %v4866 = vpop.f32.mrb[0].mxu0
        %v4867 = vadd.f32 %v4826, %v4866
        %v4868 = vpop.f32.mrb[0].mxu0
        %v4869 = vadd.f32 %v4828, %v4868
        %v4870 = vpop.f32.mrb[0].mxu0
        %v4871 = vpop.f32.mrb[0].mxu0
        %4872 = vdwg.mxu0
        %4873 = vmatprep.subr.bf16.mxu0 %v3570
        %4874 = vmatpush1.bf16.msra.mxu0 %v3569
        %4875 = vmatprep.subr.bf16.mxu0 %v3574
        %4876 = vmatpush1.bf16.msra.mxu0 %v3573
        %4877 = vmatprep.subr.bf16.mxu0 %v3578
        %4878 = vmatpush1.bf16.msra.mxu0 %v3577
        %4879 = vmatprep.subr.bf16.mxu0 %v3582
        %4880 = vmatpush1.bf16.msra.mxu0 %v3581
        %4881 = vmatprep.subr.bf16.mxu0 %v3586
        %4882 = vmatpush1.bf16.msra.mxu0 %v3585
        %4883 = vmatprep.subr.bf16.mxu0 %v3590
        %4884 = vmatpush1.bf16.msra.mxu0 %v3589
        %4885 = vmatprep.subr.bf16.mxu0 %v3594
        %4886 = vmatpush1.bf16.msra.mxu0 %v3593
        %4887 = vmatprep.subr.bf16.mxu0 %v3598
        %4888 = vmatpush1.bf16.msra.mxu0 %v3597
        %4889 = vmatprep.subr.bf16.mxu0 %v3602
        %4890 = vmatpush1.bf16.msra.mxu0 %v3601
        %4891 = vmatprep.subr.bf16.mxu0 %v3606
        %4892 = vmatpush1.bf16.msra.mxu0 %v3605
        %4893 = vmatprep.subr.bf16.mxu0 %v3610
        %4894 = vmatpush1.bf16.msra.mxu0 %v3609
        %4895 = vmatprep.subr.bf16.mxu0 %v3614
        %4896 = vmatpush1.bf16.msra.mxu0 %v3613
        %4897 = vmatprep.subr.bf16.mxu0 %v3618
        %4898 = vmatpush1.bf16.msra.mxu0 %v3617
        %4899 = vmatprep.subr.bf16.mxu0 %v3622
        %4900 = vmatpush1.bf16.msra.mxu0 %v3621
        %4901 = vmatprep.subr.bf16.mxu0 %v3626
        %4902 = vmatpush1.bf16.msra.mxu0 %v3625
        %4903 = vmatprep.subr.bf16.mxu0 %v3630
        %4904 = vmatpush1.bf16.msra.mxu0 %v3629
        %4905 = vmatprep.mubr.bf16.mxu0 %v1851
        %4906 = vmatmul.mubr.bf16.gmra.mrb[0].mxu0 %v1843
        %v4907 = vpop.f32.mrb[0].mxu0
        %v4908 = vadd.f32 %v4867, %v4907
        %v4909 = vpop.f32.mrb[0].mxu0
        %v4910 = vadd.f32 %v4869, %v4909
        %v4911 = vpop.f32.mrb[0].mxu0
        %v4912 = vpop.f32.mrb[0].mxu0
        %4913 = vdwg.mxu0
        %4914 = vmatprep.subr.bf16.mxu0 %v3634
        %4915 = vmatpush1.bf16.msra.mxu0 %v3633
        %4916 = vmatprep.subr.bf16.mxu0 %v3638
        %4917 = vmatpush1.bf16.msra.mxu0 %v3637
        %4918 = vmatprep.subr.bf16.mxu0 %v3642
        %4919 = vmatpush1.bf16.msra.mxu0 %v3641
        %4920 = vmatprep.subr.bf16.mxu0 %v3646
        %4921 = vmatpush1.bf16.msra.mxu0 %v3645
        %4922 = vmatprep.subr.bf16.mxu0 %v3650
        %4923 = vmatpush1.bf16.msra.mxu0 %v3649
        %4924 = vmatprep.subr.bf16.mxu0 %v3654
        %4925 = vmatpush1.bf16.msra.mxu0 %v3653
        %4926 = vmatprep.subr.bf16.mxu0 %v3658
        %4927 = vmatpush1.bf16.msra.mxu0 %v3657
        %4928 = vmatprep.subr.bf16.mxu0 %v3662
        %4929 = vmatpush1.bf16.msra.mxu0 %v3661
        %4930 = vmatprep.subr.bf16.mxu0 %v3666
        %4931 = vmatpush1.bf16.msra.mxu0 %v3665
        %4932 = vmatprep.subr.bf16.mxu0 %v3670
        %4933 = vmatpush1.bf16.msra.mxu0 %v3669
        %4934 = vmatprep.subr.bf16.mxu0 %v3674
        %4935 = vmatpush1.bf16.msra.mxu0 %v3673
        %4936 = vmatprep.subr.bf16.mxu0 %v3678
        %4937 = vmatpush1.bf16.msra.mxu0 %v3677
        %4938 = vmatprep.subr.bf16.mxu0 %v3682
        %4939 = vmatpush1.bf16.msra.mxu0 %v3681
        %4940 = vmatprep.subr.bf16.mxu0 %v3686
        %4941 = vmatpush1.bf16.msra.mxu0 %v3685
        %4942 = vmatprep.subr.bf16.mxu0 %v3690
        %4943 = vmatpush1.bf16.msra.mxu0 %v3689
        %4944 = vmatprep.subr.bf16.mxu0 %v3694
        %4945 = vmatpush1.bf16.msra.mxu0 %v3693
        %4946 = vmatprep.mubr.bf16.mxu0 %v1852
        %4947 = vmatmul.mubr.bf16.gmra.mrb[0].mxu0 %v1850
        %v4948 = vpop.f32.mrb[0].mxu0
        %v4949 = vadd.f32 %v4908, %v4948
        %v4950 = vpop.f32.mrb[0].mxu0
        %v4951 = vadd.f32 %v4910, %v4950
        %v4952 = vpop.f32.mrb[0].mxu0
        %v4953 = vpop.f32.mrb[0].mxu0
        %4954 = vdwg.mxu0
        %4955 = vmatprep.subr.bf16.mxu0 %v3698
        %4956 = vmatpush1.bf16.msra.mxu0 %v3697
        %4957 = vmatprep.subr.bf16.mxu0 %v3702
        %4958 = vmatpush1.bf16.msra.mxu0 %v3701
        %4959 = vmatprep.subr.bf16.mxu0 %v3706
        %4960 = vmatpush1.bf16.msra.mxu0 %v3705
        %4961 = vmatprep.subr.bf16.mxu0 %v3710
        %4962 = vmatpush1.bf16.msra.mxu0 %v3709
        %4963 = vmatprep.subr.bf16.mxu0 %v3714
        %4964 = vmatpush1.bf16.msra.mxu0 %v3713
        %4965 = vmatprep.subr.bf16.mxu0 %v3718
        %4966 = vmatpush1.bf16.msra.mxu0 %v3717
        %4967 = vmatprep.subr.bf16.mxu0 %v3722
        %4968 = vmatpush1.bf16.msra.mxu0 %v3721
        %4969 = vmatprep.subr.bf16.mxu0 %v3726
        %4970 = vmatpush1.bf16.msra.mxu0 %v3725
        %4971 = vmatprep.subr.bf16.mxu0 %v3730
        %4972 = vmatpush1.bf16.msra.mxu0 %v3729
        %4973 = vmatprep.subr.bf16.mxu0 %v3734
        %4974 = vmatpush1.bf16.msra.mxu0 %v3733
        %4975 = vmatprep.subr.bf16.mxu0 %v3738
        %4976 = vmatpush1.bf16.msra.mxu0 %v3737
        %4977 = vmatprep.subr.bf16.mxu0 %v3742
        %4978 = vmatpush1.bf16.msra.mxu0 %v3741
        %4979 = vmatprep.subr.bf16.mxu0 %v3746
        %4980 = vmatpush1.bf16.msra.mxu0 %v3745
        %4981 = vmatprep.subr.bf16.mxu0 %v3750
        %4982 = vmatpush1.bf16.msra.mxu0 %v3749
        %4983 = vmatprep.subr.bf16.mxu0 %v3754
        %4984 = vmatpush1.bf16.msra.mxu0 %v3753
        %4985 = vmatprep.subr.bf16.mxu0 %v3758
        %4986 = vmatpush1.bf16.msra.mxu0 %v3757
        %4987 = vmatprep.mubr.bf16.mxu0 %v1868
        %4988 = vmatmul.mubr.bf16.gmra.mrb[0].mxu0 %v1860
        %v4989 = vpop.f32.mrb[0].mxu0
        %v4990 = vadd.f32 %v4949, %v4989
        %v4991 = vpop.f32.mrb[0].mxu0
        %v4992 = vadd.f32 %v4951, %v4991
        %v4993 = vpop.f32.mrb[0].mxu0
        %v4994 = vpop.f32.mrb[0].mxu0
        %4995 = vdwg.mxu0
        %4996 = vmatprep.subr.bf16.mxu0 %v3762
        %4997 = vmatpush1.bf16.msra.mxu0 %v3761
        %4998 = vmatprep.subr.bf16.mxu0 %v3766
        %4999 = vmatpush1.bf16.msra.mxu0 %v3765
        %5000 = vmatprep.subr.bf16.mxu0 %v3770
        %5001 = vmatpush1.bf16.msra.mxu0 %v3769
        %5002 = vmatprep.subr.bf16.mxu0 %v3774
        %5003 = vmatpush1.bf16.msra.mxu0 %v3773
        %5004 = vmatprep.subr.bf16.mxu0 %v3778
        %5005 = vmatpush1.bf16.msra.mxu0 %v3777
        %5006 = vmatprep.subr.bf16.mxu0 %v3782
        %5007 = vmatpush1.bf16.msra.mxu0 %v3781
        %5008 = vmatprep.subr.bf16.mxu0 %v3786
        %5009 = vmatpush1.bf16.msra.mxu0 %v3785
        %5010 = vmatprep.subr.bf16.mxu0 %v3790
        %5011 = vmatpush1.bf16.msra.mxu0 %v3789
        %5012 = vmatprep.subr.bf16.mxu0 %v3794
        %5013 = vmatpush1.bf16.msra.mxu0 %v3793
        %5014 = vmatprep.subr.bf16.mxu0 %v3798
        %5015 = vmatpush1.bf16.msra.mxu0 %v3797
        %5016 = vmatprep.subr.bf16.mxu0 %v3802
        %5017 = vmatpush1.bf16.msra.mxu0 %v3801
        %5018 = vmatprep.subr.bf16.mxu0 %v3806
        %5019 = vmatpush1.bf16.msra.mxu0 %v3805
        %5020 = vmatprep.subr.bf16.mxu0 %v3810
        %5021 = vmatpush1.bf16.msra.mxu0 %v3809
        %5022 = vmatprep.subr.bf16.mxu0 %v3814
        %5023 = vmatpush1.bf16.msra.mxu0 %v3813
        %5024 = vmatprep.subr.bf16.mxu0 %v3818
        %5025 = vmatpush1.bf16.msra.mxu0 %v3817
        %5026 = vmatprep.subr.bf16.mxu0 %v3822
        %5027 = vmatpush1.bf16.msra.mxu0 %v3821
        %5028 = vmatprep.mubr.bf16.mxu0 %v1869
        %5029 = vmatmul.mubr.bf16.gmra.mrb[0].mxu0 %v1867
        %v5030 = vpop.f32.mrb[0].mxu0
        %v5031 = vadd.f32 %v4990, %v5030
        %v5032 = vpop.f32.mrb[0].mxu0
        %v5033 = vadd.f32 %v4992, %v5032
        %v5034 = vpop.f32.mrb[0].mxu0
        %v5035 = vpop.f32.mrb[0].mxu0
        %5036 = vdwg.mxu0
        %5037 = vmatprep.subr.bf16.mxu0 %v3826
        %5038 = vmatpush1.bf16.msra.mxu0 %v3825
        %5039 = vmatprep.subr.bf16.mxu0 %v3830
        %5040 = vmatpush1.bf16.msra.mxu0 %v3829
        %5041 = vmatprep.subr.bf16.mxu0 %v3834
        %5042 = vmatpush1.bf16.msra.mxu0 %v3833
        %5043 = vmatprep.subr.bf16.mxu0 %v3838
        %5044 = vmatpush1.bf16.msra.mxu0 %v3837
        %5045 = vmatprep.subr.bf16.mxu0 %v3842
        %5046 = vmatpush1.bf16.msra.mxu0 %v3841
        %5047 = vmatprep.subr.bf16.mxu0 %v3846
        %5048 = vmatpush1.bf16.msra.mxu0 %v3845
        %5049 = vmatprep.subr.bf16.mxu0 %v3850
        %5050 = vmatpush1.bf16.msra.mxu0 %v3849
        %5051 = vmatprep.subr.bf16.mxu0 %v3854
        %5052 = vmatpush1.bf16.msra.mxu0 %v3853
        %5053 = vmatprep.subr.bf16.mxu0 %v3858
        %5054 = vmatpush1.bf16.msra.mxu0 %v3857
        %5055 = vmatprep.subr.bf16.mxu0 %v3862
        %5056 = vmatpush1.bf16.msra.mxu0 %v3861
        %5057 = vmatprep.subr.bf16.mxu0 %v3866
        %5058 = vmatpush1.bf16.msra.mxu0 %v3865
        %5059 = vmatprep.subr.bf16.mxu0 %v3870
        %5060 = vmatpush1.bf16.msra.mxu0 %v3869
        %5061 = vmatprep.subr.bf16.mxu0 %v3874
        %5062 = vmatpush1.bf16.msra.mxu0 %v3873
        %5063 = vmatprep.subr.bf16.mxu0 %v3878
        %5064 = vmatpush1.bf16.msra.mxu0 %v3877
        %5065 = vmatprep.subr.bf16.mxu0 %v3882
        %5066 = vmatpush1.bf16.msra.mxu0 %v3881
        %5067 = vmatprep.subr.bf16.mxu0 %v3886
        %5068 = vmatpush1.bf16.msra.mxu0 %v3885
        %5069 = vmatprep.mubr.bf16.mxu0 %v1885
        %5070 = vmatmul.mubr.bf16.gmra.mrb[0].mxu0 %v1877
        %v5071 = vpop.f32.mrb[0].mxu0
        %v5072 = vadd.f32 %v5031, %v5071
        %v5073 = vpop.f32.mrb[0].mxu0
        %v5074 = vadd.f32 %v5033, %v5073
        %v5075 = vpop.f32.mrb[0].mxu0
        %v5076 = vpop.f32.mrb[0].mxu0
        %5077 = vdwg.mxu0
        %5078 = vmatprep.subr.bf16.mxu0 %v3890
        %5079 = vmatpush1.bf16.msra.mxu0 %v3889
        %5080 = vmatprep.subr.bf16.mxu0 %v3894
        %5081 = vmatpush1.bf16.msra.mxu0 %v3893
        %5082 = vmatprep.subr.bf16.mxu0 %v3898
        %5083 = vmatpush1.bf16.msra.mxu0 %v3897
        %5084 = vmatprep.subr.bf16.mxu0 %v3902
        %5085 = vmatpush1.bf16.msra.mxu0 %v3901
        %5086 = vmatprep.subr.bf16.mxu0 %v3906
        %5087 = vmatpush1.bf16.msra.mxu0 %v3905
        %5088 = vmatprep.subr.bf16.mxu0 %v3910
        %5089 = vmatpush1.bf16.msra.mxu0 %v3909
        %5090 = vmatprep.subr.bf16.mxu0 %v3914
        %5091 = vmatpush1.bf16.msra.mxu0 %v3913
        %5092 = vmatprep.subr.bf16.mxu0 %v3918
        %5093 = vmatpush1.bf16.msra.mxu0 %v3917
        %5094 = vmatprep.subr.bf16.mxu0 %v3922
        %5095 = vmatpush1.bf16.msra.mxu0 %v3921
        %5096 = vmatprep.subr.bf16.mxu0 %v3926
        %5097 = vmatpush1.bf16.msra.mxu0 %v3925
        %5098 = vmatprep.subr.bf16.mxu0 %v3930
        %5099 = vmatpush1.bf16.msra.mxu0 %v3929
        %5100 = vmatprep.subr.bf16.mxu0 %v3934
        %5101 = vmatpush1.bf16.msra.mxu0 %v3933
        %5102 = vmatprep.subr.bf16.mxu0 %v3938
        %5103 = vmatpush1.bf16.msra.mxu0 %v3937
        %5104 = vmatprep.subr.bf16.mxu0 %v3942
        %5105 = vmatpush1.bf16.msra.mxu0 %v3941
        %5106 = vmatprep.subr.bf16.mxu0 %v3946
        %5107 = vmatpush1.bf16.msra.mxu0 %v3945
        %5108 = vmatprep.subr.bf16.mxu0 %v3950
        %5109 = vmatpush1.bf16.msra.mxu0 %v3949
        %5110 = vmatprep.mubr.bf16.mxu0 %v1886
        %5111 = vmatmul.mubr.bf16.gmra.mrb[0].mxu0 %v1884
        %v5112 = vpop.f32.mrb[0].mxu0
        %v5113 = vadd.f32 %v5072, %v5112
        %v5114 = vpop.f32.mrb[0].mxu0
        %v5115 = vadd.f32 %v5074, %v5114
        %v5116 = vpop.f32.mrb[0].mxu0
        %v5117 = vpop.f32.mrb[0].mxu0
        %5118 = vdwg.mxu0
        %v5119 = vmax.f32 %v4785, 0.0
        %v5120 = vmax.f32 %v4787, 0.0
        %v5121 = vmax.f32 %v5113, 0.0
        %v5122 = vmax.f32 %v5115, 0.0
        %v5123 = vld [vmem:[#allocation3] sm:$0xf]
        %v5124 = vpack.c.bf16 %v5119, %v5119
        %v5125 = vpack.c.bf16 %v5120, %v5120
        %v5126 = vpack.c.bf16 %v5121, %v5121
        %v5127 = vpack.c.bf16 %v5122, %v5122
        %v5128 = vld [vmem:[%s344] sm:$0xf]
        %v5129 = vld [vmem:[%s344 + $0x4] sm:$0xf]
        %v5130 = vld [vmem:[%s344 + $0x8] sm:$0xf]
        %v5131 = vld [vmem:[%s344 + $0xc] sm:$0xf]
        %v5132 = vld [vmem:[%s344 + $0x10] sm:$0xf]
        %v5133 = vld [vmem:[%s344 + $0x14] sm:$0xf]
        %v5134 = vld [vmem:[%s344 + $0x18] sm:$0xf]
        %v5135 = vld [vmem:[%s344 + $0x1c] sm:$0xf]
        %v5136 = vld [vmem:[%s344 + $0x20] sm:$0xf]
        %v5137 = vld [vmem:[%s344 + $0x24] sm:$0xf]
        %v5138 = vld [vmem:[%s344 + $0x28] sm:$0xf]
        %v5139 = vld [vmem:[%s344 + $0x2c] sm:$0xf]
        %v5140 = vld [vmem:[%s344 + $0x30] sm:$0xf]
        %v5141 = vld [vmem:[%s344 + $0x34] sm:$0xf]
        %v5142 = vld [vmem:[%s344 + $0x38] sm:$0xf]
        %v5143 = vld [vmem:[%s344 + $0x3c] sm:$0xf]
        %v5144 = vld [vmem:[%s344 + $0x40] sm:$0xf]
        %v5145 = vld [vmem:[%s344 + $0x44] sm:$0xf]
        %v5146 = vld [vmem:[%s344 + $0x48] sm:$0xf]
        %v5147 = vld [vmem:[%s344 + $0x4c] sm:$0xf]
        %v5148 = vld [vmem:[%s344 + $0x50] sm:$0xf]
        %v5149 = vld [vmem:[%s344 + $0x54] sm:$0xf]
        %v5150 = vld [vmem:[%s344 + $0x58] sm:$0xf]
        %v5151 = vld [vmem:[%s344 + $0x5c] sm:$0xf]
        %v5152 = vld [vmem:[%s344 + $0x60] sm:$0xf]
        %v5153 = vld [vmem:[%s344 + $0x64] sm:$0xf]
        %v5154 = vld [vmem:[%s344 + $0x68] sm:$0xf]
        %v5155 = vld [vmem:[%s344 + $0x6c] sm:$0xf]
        %v5156 = vld [vmem:[%s344 + $0x70] sm:$0xf]
        %v5157 = vld [vmem:[%s344 + $0x74] sm:$0xf]
        %v5158 = vld [vmem:[%s344 + $0x78] sm:$0xf]
        %v5159 = vld [vmem:[%s344 + $0x7c] sm:$0xf]
        %v5160 = vld [vmem:[%s344 + $0x80] sm:$0xf]
        %v5161 = vld [vmem:[%s344 + $0x84] sm:$0xf]
        %v5162 = vld [vmem:[%s344 + $0x88] sm:$0xf]
        %v5163 = vld [vmem:[%s344 + $0x8c] sm:$0xf]
        %v5164 = vld [vmem:[%s344 + $0x90] sm:$0xf]
        %v5165 = vld [vmem:[%s344 + $0x94] sm:$0xf]
        %v5166 = vld [vmem:[%s344 + $0x98] sm:$0xf]
        %v5167 = vld [vmem:[%s344 + $0x9c] sm:$0xf]
        %v5168 = vld [vmem:[%s344 + $0xa0] sm:$0xf]
        %v5169 = vld [vmem:[%s344 + $0xa4] sm:$0xf]
        %v5170 = vld [vmem:[%s344 + $0xa8] sm:$0xf]
        %v5171 = vld [vmem:[%s344 + $0xac] sm:$0xf]
        %v5172 = vld [vmem:[%s344 + $0xb0] sm:$0xf]
        %v5173 = vld [vmem:[%s344 + $0xb4] sm:$0xf]
        %v5174 = vld [vmem:[%s344 + $0xb8] sm:$0xf]
        %v5175 = vld [vmem:[%s344 + $0xbc] sm:$0xf]
        %v5176 = vld [vmem:[%s344 + $0xc0] sm:$0xf]
        %v5177 = vld [vmem:[%s344 + $0xc4] sm:$0xf]
        %v5178 = vld [vmem:[%s344 + $0xc8] sm:$0xf]
        %v5179 = vld [vmem:[%s344 + $0xcc] sm:$0xf]
        %v5180 = vld [vmem:[%s344 + $0xd0] sm:$0xf]
        %v5181 = vld [vmem:[%s344 + $0xd4] sm:$0xf]
        %v5182 = vld [vmem:[%s344 + $0xd8] sm:$0xf]
        %v5183 = vld [vmem:[%s344 + $0xdc] sm:$0xf]
        %v5184 = vld [vmem:[%s344 + $0xe0] sm:$0xf]
        %v5185 = vld [vmem:[%s344 + $0xe4] sm:$0xf]
        %v5186 = vld [vmem:[%s344 + $0xe8] sm:$0xf]
        %v5187 = vld [vmem:[%s344 + $0xec] sm:$0xf]
        %v5188 = vld [vmem:[%s344 + $0xf0] sm:$0xf]
        %v5189 = vld [vmem:[%s344 + $0xf4] sm:$0xf]
        %v5190 = vld [vmem:[%s344 + $0xf8] sm:$0xf]
        %v5191 = vld [vmem:[%s344 + $0xfc] sm:$0xf]
        %v5256 = vunpack.c.l.b16 %v5128
        %v5257 = vunpack.c.l.b16 %v5129
        %v5258 = vunpack.c.l.b16 %v5130
        %v5259 = vunpack.c.l.b16 %v5131
        %v5260 = vunpack.c.l.b16 %v5132
        %v5261 = vunpack.c.l.b16 %v5133
        %v5262 = vunpack.c.l.b16 %v5134
        %v5263 = vunpack.c.l.b16 %v5135
        %v5264 = vunpack.c.l.b16 %v5136
        %v5265 = vunpack.c.l.b16 %v5137
        %v5266 = vunpack.c.l.b16 %v5138
        %v5267 = vunpack.c.l.b16 %v5139
        %v5268 = vunpack.c.l.b16 %v5140
        %v5269 = vunpack.c.l.b16 %v5141
        %v5270 = vunpack.c.l.b16 %v5142
        %v5271 = vunpack.c.l.b16 %v5143
        %v5272 = vunpack.c.l.b16 %v5144
        %v5273 = vunpack.c.l.b16 %v5145
        %v5274 = vunpack.c.l.b16 %v5146
        %v5275 = vunpack.c.l.b16 %v5147
        %v5276 = vunpack.c.l.b16 %v5148
        %v5277 = vunpack.c.l.b16 %v5149
        %v5278 = vunpack.c.l.b16 %v5150
        %v5279 = vunpack.c.l.b16 %v5151
        %v5280 = vunpack.c.l.b16 %v5152
        %v5281 = vunpack.c.l.b16 %v5153
        %v5282 = vunpack.c.l.b16 %v5154
        %v5283 = vunpack.c.l.b16 %v5155
        %v5284 = vunpack.c.l.b16 %v5156
        %v5285 = vunpack.c.l.b16 %v5157
        %v5286 = vunpack.c.l.b16 %v5158
        %v5287 = vunpack.c.l.b16 %v5159
        %v5288 = vunpack.c.l.b16 %v5160
        %v5289 = vunpack.c.l.b16 %v5161
        %v5290 = vunpack.c.l.b16 %v5162
        %v5291 = vunpack.c.l.b16 %v5163
        %v5292 = vunpack.c.l.b16 %v5164
        %v5293 = vunpack.c.l.b16 %v5165
        %v5294 = vunpack.c.l.b16 %v5166
        %v5295 = vunpack.c.l.b16 %v5167
        %v5296 = vunpack.c.l.b16 %v5168
        %v5297 = vunpack.c.l.b16 %v5169
        %v5298 = vunpack.c.l.b16 %v5170
        %v5299 = vunpack.c.l.b16 %v5171
        %v5300 = vunpack.c.l.b16 %v5172
        %v5301 = vunpack.c.l.b16 %v5173
        %v5302 = vunpack.c.l.b16 %v5174
        %v5303 = vunpack.c.l.b16 %v5175
        %v5304 = vunpack.c.l.b16 %v5176
        %v5305 = vunpack.c.l.b16 %v5177
        %v5306 = vunpack.c.l.b16 %v5178
        %v5307 = vunpack.c.l.b16 %v5179
        %v5308 = vunpack.c.l.b16 %v5180
        %v5309 = vunpack.c.l.b16 %v5181
        %v5310 = vunpack.c.l.b16 %v5182
        %v5311 = vunpack.c.l.b16 %v5183
        %v5312 = vunpack.c.l.b16 %v5184
        %v5313 = vunpack.c.l.b16 %v5185
        %v5314 = vunpack.c.l.b16 %v5186
        %v5315 = vunpack.c.l.b16 %v5187
        %v5316 = vunpack.c.l.b16 %v5188
        %v5317 = vunpack.c.l.b16 %v5189
        %v5318 = vunpack.c.l.b16 %v5190
        %v5319 = vunpack.c.l.b16 %v5191
        %v5320 = vpack.c.b16 %v5257, %v5256
        %v5321 = vpack.c.b16 %v5259, %v5258
        %v5322 = vpack.c.b16 %v5261, %v5260
        %v5323 = vpack.c.b16 %v5263, %v5262
        %v5324 = vpack.c.b16 %v5265, %v5264
        %v5325 = vpack.c.b16 %v5267, %v5266
        %v5326 = vpack.c.b16 %v5269, %v5268
        %v5327 = vpack.c.b16 %v5271, %v5270
        %v5328 = vpack.c.b16 %v5273, %v5272
        %v5329 = vpack.c.b16 %v5275, %v5274
        %v5330 = vpack.c.b16 %v5277, %v5276
        %v5331 = vpack.c.b16 %v5279, %v5278
        %v5332 = vpack.c.b16 %v5281, %v5280
        %v5333 = vpack.c.b16 %v5283, %v5282
        %v5334 = vpack.c.b16 %v5285, %v5284
        %v5335 = vpack.c.b16 %v5287, %v5286
        %v5336 = vpack.c.b16 %v5289, %v5288
        %v5337 = vpack.c.b16 %v5291, %v5290
        %v5338 = vpack.c.b16 %v5293, %v5292
        %v5339 = vpack.c.b16 %v5295, %v5294
        %v5340 = vpack.c.b16 %v5297, %v5296
        %v5341 = vpack.c.b16 %v5299, %v5298
        %v5342 = vpack.c.b16 %v5301, %v5300
        %v5343 = vpack.c.b16 %v5303, %v5302
        %v5344 = vpack.c.b16 %v5305, %v5304
        %v5345 = vpack.c.b16 %v5307, %v5306
        %v5346 = vpack.c.b16 %v5309, %v5308
        %v5347 = vpack.c.b16 %v5311, %v5310
        %v5348 = vpack.c.b16 %v5313, %v5312
        %v5349 = vpack.c.b16 %v5315, %v5314
        %v5350 = vpack.c.b16 %v5317, %v5316
        %v5351 = vpack.c.b16 %v5319, %v5318
        %5384 = vmatprep.subr.bf16.mxu0 0
        %5385 = vmatpush1.bf16.msra.mxu0 %v5320
        %5386 = vmatprep.subr.bf16.mxu0 0
        %5387 = vmatpush1.bf16.msra.mxu0 %v5321
        %5388 = vmatprep.subr.bf16.mxu0 0
        %5389 = vmatpush1.bf16.msra.mxu0 %v5322
        %5390 = vmatprep.subr.bf16.mxu0 0
        %5391 = vmatpush1.bf16.msra.mxu0 %v5323
        %5392 = vmatprep.subr.bf16.mxu0 0
        %5393 = vmatpush1.bf16.msra.mxu0 %v5324
        %5394 = vmatprep.subr.bf16.mxu0 0
        %5395 = vmatpush1.bf16.msra.mxu0 %v5325
        %5396 = vmatprep.subr.bf16.mxu0 0
        %5397 = vmatpush1.bf16.msra.mxu0 %v5326
        %5398 = vmatprep.subr.bf16.mxu0 0
        %5399 = vmatpush1.bf16.msra.mxu0 %v5327
        %5400 = vmatprep.subr.bf16.mxu0 0
        %5401 = vmatpush1.bf16.msra.mxu0 %v5328
        %5402 = vmatprep.subr.bf16.mxu0 0
        %5403 = vmatpush1.bf16.msra.mxu0 %v5329
        %5404 = vmatprep.subr.bf16.mxu0 0
        %5405 = vmatpush1.bf16.msra.mxu0 %v5330
        %5406 = vmatprep.subr.bf16.mxu0 0
        %5407 = vmatpush1.bf16.msra.mxu0 %v5331
        %5408 = vmatprep.subr.bf16.mxu0 0
        %5409 = vmatpush1.bf16.msra.mxu0 %v5332
        %5410 = vmatprep.subr.bf16.mxu0 0
        %5411 = vmatpush1.bf16.msra.mxu0 %v5333
        %5412 = vmatprep.subr.bf16.mxu0 0
        %5413 = vmatpush1.bf16.msra.mxu0 %v5334
        %5414 = vmatprep.subr.bf16.mxu0 0
        %5415 = vmatpush1.bf16.msra.mxu0 %v5335
        %5416 = vmatprep.mubr.bf16.mxu0 %v5125
        %5417 = vmatmul.mubr.bf16.gmra.mrb[0].mxu0 %v5124
        %v5418 = vpop.f32.mrb[0].mxu0
        %v5419 = vadd.f32 0.0, %v5418
        %v5420 = vpop.f32.mrb[0].mxu0
        %v5421 = vpop.f32.mrb[0].mxu0
        %v5422 = vpop.f32.mrb[0].mxu0
        %5423 = vdwg.mxu0
        %5424 = vmatprep.subr.bf16.mxu0 0
        %5425 = vmatpush1.bf16.msra.mxu0 %v5336
        %5426 = vmatprep.subr.bf16.mxu0 0
        %5427 = vmatpush1.bf16.msra.mxu0 %v5337
        %5428 = vmatprep.subr.bf16.mxu0 0
        %5429 = vmatpush1.bf16.msra.mxu0 %v5338
        %5430 = vmatprep.subr.bf16.mxu0 0
        %5431 = vmatpush1.bf16.msra.mxu0 %v5339
        %5432 = vmatprep.subr.bf16.mxu0 0
        %5433 = vmatpush1.bf16.msra.mxu0 %v5340
        %5434 = vmatprep.subr.bf16.mxu0 0
        %5435 = vmatpush1.bf16.msra.mxu0 %v5341
        %5436 = vmatprep.subr.bf16.mxu0 0
        %5437 = vmatpush1.bf16.msra.mxu0 %v5342
        %5438 = vmatprep.subr.bf16.mxu0 0
        %5439 = vmatpush1.bf16.msra.mxu0 %v5343
        %5440 = vmatprep.subr.bf16.mxu0 0
        %5441 = vmatpush1.bf16.msra.mxu0 %v5344
        %5442 = vmatprep.subr.bf16.mxu0 0
        %5443 = vmatpush1.bf16.msra.mxu0 %v5345
        %5444 = vmatprep.subr.bf16.mxu0 0
        %5445 = vmatpush1.bf16.msra.mxu0 %v5346
        %5446 = vmatprep.subr.bf16.mxu0 0
        %5447 = vmatpush1.bf16.msra.mxu0 %v5347
        %5448 = vmatprep.subr.bf16.mxu0 0
        %5449 = vmatpush1.bf16.msra.mxu0 %v5348
        %5450 = vmatprep.subr.bf16.mxu0 0
        %5451 = vmatpush1.bf16.msra.mxu0 %v5349
        %5452 = vmatprep.subr.bf16.mxu0 0
        %5453 = vmatpush1.bf16.msra.mxu0 %v5350
        %5454 = vmatprep.subr.bf16.mxu0 0
        %5455 = vmatpush1.bf16.msra.mxu0 %v5351
        %5456 = vmatprep.mubr.bf16.mxu0 %v5127
        %5457 = vmatmul.mubr.bf16.gmra.mrb[0].mxu0 %v5126
        %v5458 = vpop.f32.mrb[0].mxu0
        %v5459 = vadd.f32 %v5419, %v5458
        %v5460 = vpop.f32.mrb[0].mxu0
        %v5461 = vpop.f32.mrb[0].mxu0
        %v5462 = vpop.f32.mrb[0].mxu0
        %5463 = vdwg.mxu0
        %v5464 = vadd.f32 %v5123, %v5459
        %5465 = vst [vmem:[#allocation3] sm:$0xf] %v5464
        %p5466 = scmp.eq.s32.totalorder %s25, 3
        // Predicated region
        $region73: #{simclr_forward.1} parent=47 // pred_check
          %p5467 = pneg %p5466
        $region74: #{simclr_forward.1} parent=47 // pred_check_branch
          %5469 = sbr.rel (%p5467) target = $region76
        $region75: #{simclr_forward.1} parent=47 // pred_region
          %v5470 = vld [vmem:[#allocation3] sm:$0xf]
          %v5471 = vld [vmem:[#allocation11] sm:$0x1]
          %v5473 = vlaneseq
          %v5474 = vshrl.u32 %v5473, 7
          %v5475 = vsub.s32 0, %v5474
          %v5476 = vrot.slane %v5471, %v5475
          %v5478 = vadd.f32 %v5470, %v5476
          %5479 = vst [vmem:[%s7] sm:$0xf] %v5478
        $region76: #{simclr_forward.1} parent=47 // pred_fallthru
          _
        // Predicated region
        $region77: #{simclr_forward.1} parent=47 // pred_check
          %p5480 = pneg %p200
        $region78: #{simclr_forward.1} parent=47 // pred_check_branch
          %5482 = sbr.rel (%p5480) target = $region80
        $region79: #{simclr_forward.1} parent=47 // pred_region
          _
        $region80: #{simclr_forward.1} parent=47 // pred_fallthru
          _
        // Predicated region
        $region81: #{simclr_forward.1} parent=47 // pred_check
          %p5483 = pneg %p200
        $region82: #{simclr_forward.1} parent=47 // pred_check_branch
          %5485 = sbr.rel (%p5483) target = $region84
        $region83: #{simclr_forward.1} parent=47 // pred_region
          _
        $region84: #{simclr_forward.1} parent=47 // pred_fallthru
          _
      $region48: #{simclr_forward.1} parent=5 // pred_fallthru
        _
      %p5486 = scmp.le.s32.totalorder 2, %s20
      // Predicated region
      $region85: #{simclr_forward.1} parent=5 // pred_check
        %p5487 = pneg %p5486
      $region86: #{simclr_forward.1} parent=5 // pred_check_branch
        %5489 = sbr.rel (%p5487) target = $region88
      $region87: #{simclr_forward.1} parent=5 // pred_region
        %s5490 = ssub.s32 %s20, 2
      $region88: #{simclr_forward.1} parent=5 // pred_fallthru
        _
    $region6: #{simclr_forward.1} parent=1 // loop_footer
      %s24 = sadd.s32 1, %s20
    $region7: #{simclr_forward.1} parent=1 // loop_footer_branch
      %19 = sbr.rel target = $region3
    $region8: #{simclr_forward.1} parent=1 // loop_exit
      _
    %5491 = vsyncpa [#allocation5], 1
    %s5492 = scalar_lea.sflag [#allocation5], 1
    %5493 = vsyncpa %s5492, 1
    %5494 = vsyncpa [#allocation7], 1
    %s5495 = scalar_lea.sflag [#allocation7], 1
    %5496 = vsyncpa %s5495, 1
    %5497 = vsyncpa [#allocation10], 1
    %s5498 = scalar_lea.sflag [#allocation10], 1
    %5499 = vsyncpa %s5498, 1

</llo_original>
